<compile_context>
chip_gen: v5e
topology: v5e:2x2
jax: 0.10.0
libtpu: 0.0.40
codegen_flags: <defaults>
</compile_context>

<pallas_src>
import math
import functools

import numpy as np
import jax
import jax.numpy as jnp
from jax import lax
from jax.experimental import pallas as pl
from jax.experimental.pallas import tpu as pltpu


# ----------------------------- in-kernel helpers -----------------------------

def _erf(v):
    # Abramowitz & Stegun 7.1.26 polynomial (~1.5e-7 abs error) -> matches torch's
    # exact (erf-based) GELU to fp32 working precision.
    a1, a2, a3, a4, a5 = 0.254829592, -0.284496736, 1.421413741, -1.453152027, 1.061405429
    p = 0.3275911
    sgn = jnp.where(v >= 0.0, 1.0, -1.0)
    av = jnp.abs(v)
    t = 1.0 / (1.0 + p * av)
    poly = ((((a5 * t + a4) * t + a3) * t + a2) * t + a1) * t
    return sgn * (1.0 - poly * jnp.exp(-av * av))


def _gelu(v):
    return 0.5 * v * (1.0 + _erf(v * 0.7071067811865476))


def _softplus(v):
    # matches torch.nn.functional.softplus (threshold=20)
    return jnp.where(v > 20.0, v, jnp.log(1.0 + jnp.exp(jnp.minimum(v, 20.0))))


def _layer_norm(v, g, b, eps=1e-5):
    # channels on sublanes -> normalize over axis 0; g, b are (hidden, 1)
    mu = jnp.mean(v, axis=0, keepdims=True)
    var = jnp.mean((v - mu) ** 2, axis=0, keepdims=True)
    return (v - mu) * lax.rsqrt(var + eps) * g + b


# --------------------------------- kernel ------------------------------------

def _conv_flow_kernel(x_ref, mask_ref,
                      w_pre_ref, b_pre_ref, dw_w_ref, dw_b_ref,
                      ln1_g_ref, ln1_b_ref, pw_w_ref, pw_b_ref,
                      ln2_g_ref, ln2_b_ref, w_proj_ref, b_proj_ref,
                      sum_ref, bc_ref, knot_ref, knotb_ref, diff_ref,
                      dlo_ref, dlob_ref, dhi_ref, dhib_ref,
                      xbm_ref, bump_ref, oh_ref, sello_ref, gath_ref,
                      out_ref, logdet_ref,
                      *, half, hidden, lp, num_bins, num_layers, kernel_size,
                      tail_bound, min_bin_width, min_bin_height, min_derivative):
    f32 = jnp.float32
    x = x_ref[0]              # (c_total, LP)  channels on sublanes, length on lanes
    mask = mask_ref[0]        # (1, LP)
    first = x[:half, :]       # (half, LP)
    xs = x[half:, :]          # (half, LP)

    # ---- conv_pre : 1x1 conv with K = half (tiny) -> VPU scaled-adds ----
    w_pre = w_pre_ref[...]    # (hidden, half)
    h = jnp.zeros((hidden, lp), f32)
    for c in range(half):
        h = h + w_pre[:, c:c + 1] * first[c:c + 1, :]
    h = h + b_pre_ref[...]

    # ---- VitsDilatedDepthSeparableConv ----
    # TODO(synk): global_conditioning (optional additive input) not wired in.
    lane = lax.broadcasted_iota(jnp.int32, (1, lp), 1)
    half_k = (kernel_size - 1) // 2
    cur = h
    for i in range(num_layers):
        dil = kernel_size ** i
        xin = cur * mask
        dww = dw_w_ref[i]                                 # (hidden, k)
        acc = jnp.zeros((hidden, lp), f32)
        for j in range(kernel_size):                      # dilated depthwise conv via rolls
            off = (j - half_k) * dil
            wj = dww[:, j:j + 1]                          # (hidden, 1)
            if off == 0:
                tap = xin
            elif off < 0:                                 # read x[t - |off|]
                s = -off
                tap = pltpu.roll(xin, s, axis=1)
                tap = jnp.where(lane >= s, tap, 0.0)
            else:                                         # read x[t + off]
                tap = pltpu.roll(xin, (lp - off) % lp, axis=1)
                tap = jnp.where(lane < lp - off, tap, 0.0)
            acc = acc + wj * tap
        hs = acc + dw_b_ref[i]
        hs = _layer_norm(hs, ln1_g_ref[i], ln1_b_ref[i])
        hs = _gelu(hs)
        hs = jnp.dot(pw_w_ref[i], hs, preferred_element_type=f32) + pw_b_ref[i]
        hs = _layer_norm(hs, ln2_g_ref[i], ln2_b_ref[i])
        hs = _gelu(hs)
        cur = cur + hs                                    # dropout_rate = 0.0
    hm = cur * mask

    # ---- conv_proj (rows pre-permuted to [all widths | all heights | all derivs]) ----
    proj = (jnp.dot(w_proj_ref[...], hm, preferred_element_type=f32)
            + b_proj_ref[...]) * mask                     # (P, LP)

    # ---- unconstrained rational-quadratic spline, all channels vectorized ----
    nb = num_bins
    g = half
    nw = g * nb
    nwh = 2 * nw
    nkw = g * (nb + 1)
    tb = tail_bound
    inv_sqrt = 1.0 / math.sqrt(hidden)

    uwh = proj[:nwh, :] * inv_sqrt                        # widths | heights   (2G*nb, LP)
    ud = proj[nwh:, :]                                    # interior derivs    (G*(nb-1), LP)

    # per-block (channel x kind) softmax; block maxes broadcast back via matmul
    mxb = jnp.concatenate(
        [jnp.max(uwh[k * nb:(k + 1) * nb, :], axis=0, keepdims=True)
         for k in range(2 * g)], axis=0)                  # (2G, LP)
    e = jnp.exp(uwh - jnp.dot(bc_ref[...], mxb, preferred_element_type=f32))
    ssum = jnp.dot(sum_ref[...], e, preferred_element_type=f32)          # (2G, LP)
    sm = e * jnp.dot(bc_ref[...], 1.0 / ssum, preferred_element_type=f32)
    riota = lax.broadcasted_iota(jnp.int32, (nwh, 1), 0)
    minv = jnp.where(riota < nw, min_bin_width, min_bin_height)
    scal = jnp.where(riota < nw, 1.0 - min_bin_width * nb, 1.0 - min_bin_height * nb)
    wh = minv + scal * sm                                                # bin fractions

    # knots (cumsum + bound overwrite folded into one matmul) and bin sizes
    knots = jnp.dot(knot_ref[...], wh, preferred_element_type=f32) + knotb_ref[...]
    bins = jnp.dot(diff_ref[...], knots, preferred_element_type=f32)     # (2G*nb, LP)
    knots_w = knots[:nkw, :]
    knots_h = knots[nkw:, :]
    bins_w = bins[:nw, :]
    bins_h = bins[nw:, :]
    delta = bins_h / bins_w

    # derivatives at bin edge b and b+1 (selection folded before softplus)
    d_lo = min_derivative + _softplus(
        jnp.dot(dlo_ref[...], ud, preferred_element_type=f32) + dlob_ref[...])
    d_hi = min_derivative + _softplus(
        jnp.dot(dhi_ref[...], ud, preferred_element_type=f32) + dhib_ref[...])

    inside = (xs >= -tb) & (xs <= tb)
    xc = jnp.clip(xs, -tb, tb)

    # one-hot bin membership from knot comparisons (per channel, bins on sublanes)
    xb = jnp.dot(xbm_ref[...], xc, preferred_element_type=f32)           # (G*(nb+1), LP)
    ge = (xb >= (knots_w + bump_ref[...])).astype(f32)
    onehot = jnp.dot(oh_ref[...], ge, preferred_element_type=f32)        # (G*nb, LP)

    cw_lo = jnp.dot(sello_ref[...], knots_w, preferred_element_type=f32)
    ch_lo = jnp.dot(sello_ref[...], knots_h, preferred_element_type=f32)

    gath = gath_ref[...]

    def gsel(v):  # gather-at-bin via one-hot masked block-sum matmul -> (G, LP)
        return jnp.dot(gath, v * onehot, preferred_element_type=f32)

    in_cw = gsel(cw_lo)
    in_bw = gsel(bins_w)
    in_ch = gsel(ch_lo)
    in_h = gsel(bins_h)
    in_delta = gsel(delta)
    in_d = gsel(d_lo)
    in_dp1 = gsel(d_hi)

    theta = (xc - in_cw) / in_bw
    t1mt = theta * (1.0 - theta)
    inter1 = in_d + in_dp1 - 2.0 * in_delta
    numer = in_h * (in_delta * theta * theta + in_d * t1mt)
    denom = in_delta + inter1 * t1mt
    out_sp = in_ch + numer / denom
    dnum = in_delta * in_delta * (in_dp1 * theta * theta
                                  + 2.0 * in_delta * t1mt
                                  + in_d * (1.0 - theta) * (1.0 - theta))
    lad_sp = jnp.log(dnum) - 2.0 * jnp.log(denom)

    second_out = jnp.where(inside, out_sp, xs)
    lad = jnp.where(inside, lad_sp, 0.0)

    out_ref[0] = jnp.concatenate([first, second_out], axis=0) * mask
    ld = jnp.sum(lad * mask, axis=1, keepdims=True)       # (G, 1)
    ld = jnp.sum(ld, axis=0, keepdims=True)               # (1, 1)
    logdet_ref[...] = ld.reshape(1, 1, 1)


# -------------------------- spline constant matrices --------------------------

def _spline_constants(half, num_bins, tail_bound, min_derivative):
    g, nb = half, num_bins
    nbp1 = nb + 1
    nw, nwh = g * nb, 2 * g * nb
    nk, nkw, nd = 2 * g * nbp1, g * nbp1, g * (nb - 1)
    tb = tail_bound
    const = math.log(math.exp(1.0 - min_derivative) - 1.0)

    SUM = np.kron(np.eye(2 * g), np.ones((1, nb))).astype(np.float32)   # block sums
    BC = SUM.T.copy()                                                   # block broadcast

    KNOT = np.zeros((nk, nwh), np.float32)
    KNOTB = np.zeros((nk, 1), np.float32)
    for k in range(2 * g):
        for i in range(nbp1):
            r = k * nbp1 + i
            if 1 <= i <= nb - 1:
                KNOT[r, k * nb:k * nb + i] = 2.0 * tb
            KNOTB[r, 0] = tb if i == nb else -tb

    DIFF = np.zeros((nwh, nk), np.float32)
    for k in range(2 * g):
        for b in range(nb):
            DIFF[k * nb + b, k * nbp1 + b] = -1.0
            DIFF[k * nb + b, k * nbp1 + b + 1] = 1.0

    DLO = np.zeros((nw, nd), np.float32)
    DLOB = np.zeros((nw, 1), np.float32)
    DHI = np.zeros((nw, nd), np.float32)
    DHIB = np.zeros((nw, 1), np.float32)
    for c in range(g):
        for b in range(nb):
            if b == 0:
                DLOB[c * nb + b, 0] = const
            else:
                DLO[c * nb + b, c * (nb - 1) + b - 1] = 1.0
            if b == nb - 1:
                DHIB[c * nb + b, 0] = const
            else:
                DHI[c * nb + b, c * (nb - 1) + b] = 1.0

    XB = np.kron(np.eye(g), np.ones((nbp1, 1))).astype(np.float32)      # x -> knot rows

    BUMP = np.zeros((nkw, 1), np.float32)
    for c in range(g):
        BUMP[c * nbp1 + nb, 0] = 1e-6

    OH = np.zeros((nw, nkw), np.float32)
    SELLO = np.zeros((nw, nkw), np.float32)
    for c in range(g):
        for b in range(nb):
            OH[c * nb + b, c * nbp1 + b] = 1.0
            OH[c * nb + b, c * nbp1 + b + 1] = -1.0
            SELLO[c * nb + b, c * nbp1 + b] = 1.0

    GATH = np.kron(np.eye(g), np.ones((1, nb))).astype(np.float32)

    return [SUM, BC, KNOT, KNOTB, DIFF, DLO, DLOB, DHI, DHIB, XB, BUMP, OH, SELLO, GATH]


# -------------------------------- wrapper -------------------------------------

def vits_conv_flow_forward(inputs, padding_mask, params, *, num_bins, tail_bound,
                           kernel_size, num_layers,
                           min_bin_width=1e-3, min_bin_height=1e-3, min_derivative=1e-3):
    """inputs: (B, depth_separable_channels, L) NCL; padding_mask: (B, 1, L).
    Returns (outputs (B, C, L), log_determinant (B,)).  Implements reverse=False."""
    # TODO(synk): reverse=True (inverse spline) branch not implemented; forward only.
    B, c_total, L = inputs.shape
    half = c_total // 2
    hidden = params["w_pre"].shape[0]
    nb = num_bins

    lp = ((L + 127) // 128) * 128                       # pad length to lane multiple
    pad = lp - L
    x_p = jnp.pad(inputs.astype(jnp.float32), ((0, 0), (0, 0), (0, pad)))
    m_p = jnp.pad(padding_mask.astype(jnp.float32), ((0, 0), (0, 0), (0, pad)))

    # permute conv_proj rows from torch ordering (channel-major [w|h|d] blocks)
    # to grouped ordering [all widths | all heights | all derivs].
    stride = 3 * nb - 1
    perm = np.asarray(
        [c * stride + b for c in range(half) for b in range(nb)]
        + [c * stride + nb + b for c in range(half) for b in range(nb)]
        + [c * stride + 2 * nb + j for c in range(half) for j in range(nb - 1)],
        dtype=np.int32)
    w_proj_p = jnp.asarray(params["w_proj"])[perm, :]
    b_proj_p = jnp.asarray(params["b_proj"])[perm, :]

    weight_args = [params["w_pre"], params["b_pre"], params["dw_w"], params["dw_b"],
                   params["ln1_g"], params["ln1_b"], params["pw_w"], params["pw_b"],
                   params["ln2_g"], params["ln2_b"], w_proj_p, b_proj_p]
    const_args = [jnp.asarray(c) for c in
                  _spline_constants(half, nb, tail_bound, min_derivative)]

    kernel = functools.partial(
        _conv_flow_kernel, half=half, hidden=hidden, lp=lp, num_bins=nb,
        num_layers=num_layers, kernel_size=kernel_size, tail_bound=tail_bound,
        min_bin_width=min_bin_width, min_bin_height=min_bin_height,
        min_derivative=min_derivative)

    def full_spec(shape):
        n = len(shape)
        return pl.BlockSpec(shape, lambda b, _n=n: (0,) * _n)

    in_specs = ([pl.BlockSpec((1, c_total, lp), lambda b: (b, 0, 0)),
                 pl.BlockSpec((1, 1, lp), lambda b: (b, 0, 0))]
                + [full_spec(w.shape) for w in weight_args]
                + [full_spec(c.shape) for c in const_args])

    out_shape = (jax.ShapeDtypeStruct((B, c_total, lp), jnp.float32),
                 jax.ShapeDtypeStruct((B, 1, 1), jnp.float32))
    out_specs = (pl.BlockSpec((1, c_total, lp), lambda b: (b, 0, 0)),
                 pl.BlockSpec((1, 1, 1), lambda b: (b, 0, 0)))

    out_p, logdet = pl.pallas_call(
        kernel,
        grid=(B,),
        in_specs=in_specs,
        out_specs=out_specs,
        out_shape=out_shape,
        compiler_params=pltpu.CompilerParams(dimension_semantics=("parallel",)),
    )(x_p, m_p, *weight_args, *const_args)

    # TODO(synk): for very long sequences add an L-tiling grid axis with a dilation halo
    # and set vmem_limit_bytes explicitly (working set here is << VMEM at these sizes).
    outputs = out_p[:, :, :L]                          # already NCL, no transpose
    return outputs, logdet[:, 0, 0]


# --------------------------------- main ---------------------------------------

if __name__ == "__main__":
    # small synthetic "VitsConfig"
    B, L = 2, 16
    hidden = 32                # config.hidden_size (filter_channels)
    c_total = 4                # config.depth_separable_channels
    half = c_total // 2
    num_bins = 10              # config.duration_predictor_flow_bins
    tail_bound = 5.0           # config.duration_predictor_tail_bound
    kernel_size = 3            # config.duration_predictor_kernel_size
    num_layers = 3             # config.depth_separable_num_layers
    P = half * (3 * num_bins - 1)

    key = jax.random.PRNGKey(0)
    ks = jax.random.split(key, 3)

    inputs = jax.random.normal(ks[0], (B, c_total, L), jnp.float32)
    time_idx = jnp.arange(L)[None, None, :]
    valid_len = jnp.array([L, 12])[:, None, None]
    padding_mask = (time_idx < valid_len).astype(jnp.float32)      # (B, 1, L)

    def w(k, shape, scale=0.1):
        return scale * jax.random.normal(k, shape, jnp.float32)

    wk = jax.random.split(ks[1], 6)
    params = {
        # 1x1 convs stored (out, in) for length-on-lanes matmuls
        "w_pre":  w(wk[0], (hidden, half)),
        "b_pre":  w(wk[1], (hidden, 1)),
        # depthwise conv weights [layer, channel, tap]  (torch layout is (C, 1, k))
        "dw_w":   w(wk[2], (num_layers, hidden, kernel_size)),
        "dw_b":   w(wk[3], (num_layers, hidden, 1)),
        "ln1_g":  jnp.ones((num_layers, hidden, 1), jnp.float32),
        "ln1_b":  jnp.zeros((num_layers, hidden, 1), jnp.float32),
        # pointwise conv weights [layer, out, in]
        "pw_w":   w(wk[4], (num_layers, hidden, hidden)),
        "pw_b":   jnp.zeros((num_layers, hidden, 1), jnp.float32),
        "ln2_g":  jnp.ones((num_layers, hidden, 1), jnp.float32),
        "ln2_b":  jnp.zeros((num_layers, hidden, 1), jnp.float32),
        # projection conv [out, in] in torch output-channel ordering
        "w_proj": w(wk[5], (P, hidden)),
        "b_proj": jnp.zeros((P, 1), jnp.float32),
    }

    outputs, log_det = vits_conv_flow_forward(
        inputs, padding_mask, params,
        num_bins=num_bins, tail_bound=tail_bound,
        kernel_size=kernel_size, num_layers=num_layers)

    jax.block_until_ready((outputs, log_det))
    print("KERNEL_OK")
</pallas_src>

<mosaic_0001>
module attributes {stable_mosaic.version = 11 : i64} {
  func.func @_conv_flow_kernel(%arg0: i32, %arg1: memref<1x4x128xf32, #tpu.memory_space<vmem>>, %arg2: memref<1x1x128xf32, #tpu.memory_space<vmem>>, %arg3: memref<32x2xf32, #tpu.memory_space<vmem>>, %arg4: memref<32x1xf32, #tpu.memory_space<vmem>>, %arg5: memref<3x32x3xf32, #tpu.memory_space<vmem>>, %arg6: memref<3x32x1xf32, #tpu.memory_space<vmem>>, %arg7: memref<3x32x1xf32, #tpu.memory_space<vmem>>, %arg8: memref<3x32x1xf32, #tpu.memory_space<vmem>>, %arg9: memref<3x32x32xf32, #tpu.memory_space<vmem>>, %arg10: memref<3x32x1xf32, #tpu.memory_space<vmem>>, %arg11: memref<3x32x1xf32, #tpu.memory_space<vmem>>, %arg12: memref<3x32x1xf32, #tpu.memory_space<vmem>>, %arg13: memref<58x32xf32, #tpu.memory_space<vmem>>, %arg14: memref<58x1xf32, #tpu.memory_space<vmem>>, %arg15: memref<4x40xf32, #tpu.memory_space<vmem>>, %arg16: memref<40x4xf32, #tpu.memory_space<vmem>>, %arg17: memref<44x40xf32, #tpu.memory_space<vmem>>, %arg18: memref<44x1xf32, #tpu.memory_space<vmem>>, %arg19: memref<40x44xf32, #tpu.memory_space<vmem>>, %arg20: memref<20x18xf32, #tpu.memory_space<vmem>>, %arg21: memref<20x1xf32, #tpu.memory_space<vmem>>, %arg22: memref<20x18xf32, #tpu.memory_space<vmem>>, %arg23: memref<20x1xf32, #tpu.memory_space<vmem>>, %arg24: memref<22x2xf32, #tpu.memory_space<vmem>>, %arg25: memref<22x1xf32, #tpu.memory_space<vmem>>, %arg26: memref<20x22xf32, #tpu.memory_space<vmem>>, %arg27: memref<20x22xf32, #tpu.memory_space<vmem>>, %arg28: memref<2x20xf32, #tpu.memory_space<vmem>>, %arg29: memref<1x4x128xf32, #tpu.memory_space<vmem>>, %arg30: memref<1x1x1xf32, #tpu.memory_space<vmem>>) attributes {dimension_semantics = [#tpu.dimension_semantics<parallel>], iteration_bounds = array<i64: 2>, scalar_prefetch = 0 : i64, scratch_operands = 0 : i64, tpu.core_type = #tpu.core_type<tc>, window_params = [{transform_indices = @transform_0, window_bounds = array<i64: 1, 4, 128>}, {transform_indices = @transform_1, window_bounds = array<i64: 1, 1, 128>}, {pipeline_mode = #tpu.pipeline_mode<synchronous>, transform_indices = @transform_2, window_bounds = array<i64: 32, 2>}, {pipeline_mode = #tpu.pipeline_mode<synchronous>, transform_indices = @transform_3, window_bounds = array<i64: 32, 1>}, {pipeline_mode = #tpu.pipeline_mode<synchronous>, transform_indices = @transform_4, window_bounds = array<i64: 3, 32, 3>}, {pipeline_mode = #tpu.pipeline_mode<synchronous>, transform_indices = @transform_5, window_bounds = array<i64: 3, 32, 1>}, {pipeline_mode = #tpu.pipeline_mode<synchronous>, transform_indices = @transform_6, window_bounds = array<i64: 3, 32, 1>}, {pipeline_mode = #tpu.pipeline_mode<synchronous>, transform_indices = @transform_7, window_bounds = array<i64: 3, 32, 1>}, {pipeline_mode = #tpu.pipeline_mode<synchronous>, transform_indices = @transform_8, window_bounds = array<i64: 3, 32, 32>}, {pipeline_mode = #tpu.pipeline_mode<synchronous>, transform_indices = @transform_9, window_bounds = array<i64: 3, 32, 1>}, {pipeline_mode = #tpu.pipeline_mode<synchronous>, transform_indices = @transform_10, window_bounds = array<i64: 3, 32, 1>}, {pipeline_mode = #tpu.pipeline_mode<synchronous>, transform_indices = @transform_11, window_bounds = array<i64: 3, 32, 1>}, {pipeline_mode = #tpu.pipeline_mode<synchronous>, transform_indices = @transform_12, window_bounds = array<i64: 58, 32>}, {pipeline_mode = #tpu.pipeline_mode<synchronous>, transform_indices = @transform_13, window_bounds = array<i64: 58, 1>}, {pipeline_mode = #tpu.pipeline_mode<synchronous>, transform_indices = @transform_14, window_bounds = array<i64: 4, 40>}, {pipeline_mode = #tpu.pipeline_mode<synchronous>, transform_indices = @transform_15, window_bounds = array<i64: 40, 4>}, {pipeline_mode = #tpu.pipeline_mode<synchronous>, transform_indices = @transform_16, window_bounds = array<i64: 44, 40>}, {pipeline_mode = #tpu.pipeline_mode<synchronous>, transform_indices = @transform_17, window_bounds = array<i64: 44, 1>}, {pipeline_mode = #tpu.pipeline_mode<synchronous>, transform_indices = @transform_18, window_bounds = array<i64: 40, 44>}, {pipeline_mode = #tpu.pipeline_mode<synchronous>, transform_indices = @transform_19, window_bounds = array<i64: 20, 18>}, {pipeline_mode = #tpu.pipeline_mode<synchronous>, transform_indices = @transform_20, window_bounds = array<i64: 20, 1>}, {pipeline_mode = #tpu.pipeline_mode<synchronous>, transform_indices = @transform_21, window_bounds = array<i64: 20, 18>}, {pipeline_mode = #tpu.pipeline_mode<synchronous>, transform_indices = @transform_22, window_bounds = array<i64: 20, 1>}, {pipeline_mode = #tpu.pipeline_mode<synchronous>, transform_indices = @transform_23, window_bounds = array<i64: 22, 2>}, {pipeline_mode = #tpu.pipeline_mode<synchronous>, transform_indices = @transform_24, window_bounds = array<i64: 22, 1>}, {pipeline_mode = #tpu.pipeline_mode<synchronous>, transform_indices = @transform_25, window_bounds = array<i64: 20, 22>}, {pipeline_mode = #tpu.pipeline_mode<synchronous>, transform_indices = @transform_26, window_bounds = array<i64: 20, 22>}, {pipeline_mode = #tpu.pipeline_mode<synchronous>, transform_indices = @transform_27, window_bounds = array<i64: 2, 20>}, {transform_indices = @transform_28, window_bounds = array<i64: 1, 4, 128>}, {transform_indices = @transform_29, window_bounds = array<i64: 1, 1, 1>}]} {
    %c0 = arith.constant 0 : index
    %c0_0 = arith.constant 0 : index
    %c0_1 = arith.constant 0 : index
    %0 = vector.load %arg1[%c0, %c0_0, %c0_1] : memref<1x4x128xf32, #tpu.memory_space<vmem>>, vector<1x4x128xf32>
    %1 = vector.shape_cast %0 : vector<1x4x128xf32> to vector<4x128xf32>
    %c0_2 = arith.constant 0 : index
    %c0_3 = arith.constant 0 : index
    %c0_4 = arith.constant 0 : index
    %2 = vector.load %arg2[%c0_2, %c0_3, %c0_4] : memref<1x1x128xf32, #tpu.memory_space<vmem>>, vector<1x1x128xf32>
    %3 = vector.shape_cast %2 : vector<1x1x128xf32> to vector<1x128xf32>
    %4 = vector.extract_strided_slice %1 {offsets = [0, 0], sizes = [2, 128], strides = [1, 1]} : vector<4x128xf32> to vector<2x128xf32>
    %5 = vector.extract_strided_slice %1 {offsets = [2, 0], sizes = [2, 128], strides = [1, 1]} : vector<4x128xf32> to vector<2x128xf32>
    %c0_5 = arith.constant 0 : index
    %c0_6 = arith.constant 0 : index
    %6 = vector.load %arg3[%c0_5, %c0_6] : memref<32x2xf32, #tpu.memory_space<vmem>>, vector<32x2xf32>
    %cst = arith.constant 0.000000e+00 : f32
    %7 = vector.broadcast %cst : f32 to vector<32x128xf32>
    %8 = vector.extract_strided_slice %6 {offsets = [0, 0], sizes = [32, 1], strides = [1, 1]} : vector<32x2xf32> to vector<32x1xf32>
    %9 = vector.extract_strided_slice %4 {offsets = [0, 0], sizes = [1, 128], strides = [1, 1]} : vector<2x128xf32> to vector<1x128xf32>
    %10 = vector.broadcast %8 : vector<32x1xf32> to vector<32x128xf32>
    %11 = vector.broadcast %9 : vector<1x128xf32> to vector<32x128xf32>
    %12 = arith.mulf %10, %11 : vector<32x128xf32>
    %13 = arith.addf %7, %12 : vector<32x128xf32>
    %14 = vector.extract_strided_slice %6 {offsets = [0, 1], sizes = [32, 1], strides = [1, 1]} : vector<32x2xf32> to vector<32x1xf32>
    %15 = vector.extract_strided_slice %4 {offsets = [1, 0], sizes = [1, 128], strides = [1, 1]} : vector<2x128xf32> to vector<1x128xf32>
    %16 = vector.broadcast %14 : vector<32x1xf32> to vector<32x128xf32>
    %17 = vector.broadcast %15 : vector<1x128xf32> to vector<32x128xf32>
    %18 = arith.mulf %16, %17 : vector<32x128xf32>
    %19 = arith.addf %13, %18 : vector<32x128xf32>
    %c0_7 = arith.constant 0 : index
    %c0_8 = arith.constant 0 : index
    %20 = vector.load %arg4[%c0_7, %c0_8] : memref<32x1xf32, #tpu.memory_space<vmem>>, vector<32x1xf32>
    %21 = vector.broadcast %20 : vector<32x1xf32> to vector<32x128xf32>
    %22 = arith.addf %19, %21 : vector<32x128xf32>
    %23 = tpu.iota {dimensions = array<i32: 1>} : vector<1x128xi32>
    %24 = vector.broadcast %3 : vector<1x128xf32> to vector<32x128xf32>
    %25 = arith.mulf %22, %24 : vector<32x128xf32>
    %c0_9 = arith.constant 0 : index
    %c0_10 = arith.constant 0 : index
    %c0_11 = arith.constant 0 : index
    %26 = vector.load %arg5[%c0_9, %c0_10, %c0_11] : memref<3x32x3xf32, #tpu.memory_space<vmem>>, vector<1x32x3xf32>
    %27 = vector.shape_cast %26 : vector<1x32x3xf32> to vector<32x3xf32>
    %cst_12 = arith.constant 0.000000e+00 : f32
    %28 = vector.broadcast %cst_12 : f32 to vector<32x128xf32>
    %29 = vector.extract_strided_slice %27 {offsets = [0, 0], sizes = [32, 1], strides = [1, 1]} : vector<32x3xf32> to vector<32x1xf32>
    %c1_i32 = arith.constant 1 : i32
    %30 = tpu.dynamic_rotate %25 by %c1_i32 dim 1 : vector<32x128xf32>, i32 -> vector<32x128xf32>
    %c1_i32_13 = arith.constant 1 : i32
    %31 = vector.broadcast %c1_i32_13 : i32 to vector<1x128xi32>
    %32 = arith.cmpi sge, %23, %31 : vector<1x128xi32>
    %cst_14 = arith.constant 0.000000e+00 : f32
    %33 = vector.shape_cast %32 : vector<1x128xi1> to vector<1x128xi1>
    %34 = vector.broadcast %33 : vector<1x128xi1> to vector<32x128xi1>
    %35 = vector.broadcast %cst_14 : f32 to vector<32x128xf32>
    %36 = arith.select %34, %30, %35 : vector<32x128xi1>, vector<32x128xf32>
    %37 = vector.broadcast %29 : vector<32x1xf32> to vector<32x128xf32>
    %38 = arith.mulf %37, %36 : vector<32x128xf32>
    %39 = arith.addf %28, %38 : vector<32x128xf32>
    %40 = vector.extract_strided_slice %27 {offsets = [0, 1], sizes = [32, 1], strides = [1, 1]} : vector<32x3xf32> to vector<32x1xf32>
    %41 = vector.broadcast %40 : vector<32x1xf32> to vector<32x128xf32>
    %42 = arith.mulf %41, %25 : vector<32x128xf32>
    %43 = arith.addf %39, %42 : vector<32x128xf32>
    %44 = vector.extract_strided_slice %27 {offsets = [0, 2], sizes = [32, 1], strides = [1, 1]} : vector<32x3xf32> to vector<32x1xf32>
    %c127_i32 = arith.constant 127 : i32
    %45 = tpu.dynamic_rotate %25 by %c127_i32 dim 1 : vector<32x128xf32>, i32 -> vector<32x128xf32>
    %c127_i32_15 = arith.constant 127 : i32
    %46 = vector.broadcast %c127_i32_15 : i32 to vector<1x128xi32>
    %47 = arith.cmpi slt, %23, %46 : vector<1x128xi32>
    %cst_16 = arith.constant 0.000000e+00 : f32
    %48 = vector.shape_cast %47 : vector<1x128xi1> to vector<1x128xi1>
    %49 = vector.broadcast %48 : vector<1x128xi1> to vector<32x128xi1>
    %50 = vector.broadcast %cst_16 : f32 to vector<32x128xf32>
    %51 = arith.select %49, %45, %50 : vector<32x128xi1>, vector<32x128xf32>
    %52 = vector.broadcast %44 : vector<32x1xf32> to vector<32x128xf32>
    %53 = arith.mulf %52, %51 : vector<32x128xf32>
    %54 = arith.addf %43, %53 : vector<32x128xf32>
    %c0_17 = arith.constant 0 : index
    %c0_18 = arith.constant 0 : index
    %c0_19 = arith.constant 0 : index
    %55 = vector.load %arg6[%c0_17, %c0_18, %c0_19] : memref<3x32x1xf32, #tpu.memory_space<vmem>>, vector<1x32x1xf32>
    %56 = vector.shape_cast %55 : vector<1x32x1xf32> to vector<32x1xf32>
    %57 = vector.broadcast %56 : vector<32x1xf32> to vector<32x128xf32>
    %58 = arith.addf %54, %57 : vector<32x128xf32>
    %c0_20 = arith.constant 0 : index
    %c0_21 = arith.constant 0 : index
    %c0_22 = arith.constant 0 : index
    %59 = vector.load %arg7[%c0_20, %c0_21, %c0_22] : memref<3x32x1xf32, #tpu.memory_space<vmem>>, vector<1x32x1xf32>
    %60 = vector.shape_cast %59 : vector<1x32x1xf32> to vector<32x1xf32>
    %c0_23 = arith.constant 0 : index
    %c0_24 = arith.constant 0 : index
    %c0_25 = arith.constant 0 : index
    %61 = vector.load %arg8[%c0_23, %c0_24, %c0_25] : memref<3x32x1xf32, #tpu.memory_space<vmem>>, vector<1x32x1xf32>
    %62 = vector.shape_cast %61 : vector<1x32x1xf32> to vector<32x1xf32>
    %cst_26 = arith.constant dense<0.000000e+00> : vector<128xf32>
    %63 = vector.multi_reduction <add>, %58, %cst_26 [0] : vector<32x128xf32> to vector<128xf32>
    %64 = vector.shape_cast %63 : vector<128xf32> to vector<1x128xf32>
    %cst_27 = arith.constant 3.200000e+01 : f32
    %65 = vector.broadcast %cst_27 : f32 to vector<1x128xf32>
    %66 = arith.divf %64, %65 : vector<1x128xf32>
    %67 = vector.broadcast %66 : vector<1x128xf32> to vector<32x128xf32>
    %68 = arith.subf %58, %67 : vector<32x128xf32>
    %69 = arith.mulf %68, %68 : vector<32x128xf32>
    %cst_28 = arith.constant dense<0.000000e+00> : vector<128xf32>
    %70 = vector.multi_reduction <add>, %69, %cst_28 [0] : vector<32x128xf32> to vector<128xf32>
    %71 = vector.shape_cast %70 : vector<128xf32> to vector<1x128xf32>
    %cst_29 = arith.constant 3.200000e+01 : f32
    %72 = vector.broadcast %cst_29 : f32 to vector<1x128xf32>
    %73 = arith.divf %71, %72 : vector<1x128xf32>
    %74 = vector.broadcast %66 : vector<1x128xf32> to vector<32x128xf32>
    %75 = arith.subf %58, %74 : vector<32x128xf32>
    %cst_30 = arith.constant 9.99999974E-6 : f32
    %76 = vector.broadcast %cst_30 : f32 to vector<1x128xf32>
    %77 = arith.addf %73, %76 : vector<1x128xf32>
    %78 = math.rsqrt %77 : vector<1x128xf32>
    %79 = vector.broadcast %78 : vector<1x128xf32> to vector<32x128xf32>
    %80 = arith.mulf %75, %79 : vector<32x128xf32>
    %81 = vector.broadcast %60 : vector<32x1xf32> to vector<32x128xf32>
    %82 = arith.mulf %80, %81 : vector<32x128xf32>
    %83 = vector.broadcast %62 : vector<32x1xf32> to vector<32x128xf32>
    %84 = arith.addf %82, %83 : vector<32x128xf32>
    %cst_31 = arith.constant 5.000000e-01 : f32
    %85 = vector.broadcast %cst_31 : f32 to vector<32x128xf32>
    %86 = arith.mulf %85, %84 : vector<32x128xf32>
    %cst_32 = arith.constant 0.707106769 : f32
    %87 = vector.broadcast %cst_32 : f32 to vector<32x128xf32>
    %88 = arith.mulf %84, %87 : vector<32x128xf32>
    %cst_33 = arith.constant 0.000000e+00 : f32
    %89 = vector.broadcast %cst_33 : f32 to vector<32x128xf32>
    %90 = arith.cmpf oge, %88, %89 : vector<32x128xf32>
    %cst_34 = arith.constant 1.000000e+00 : f32
    %cst_35 = arith.constant -1.000000e+00 : f32
    %91 = vector.broadcast %cst_34 : f32 to vector<32x128xf32>
    %92 = vector.broadcast %cst_35 : f32 to vector<32x128xf32>
    %93 = arith.select %90, %91, %92 : vector<32x128xi1>, vector<32x128xf32>
    %94 = math.absf %88 : vector<32x128xf32>
    %cst_36 = arith.constant 0.327591091 : f32
    %95 = vector.broadcast %cst_36 : f32 to vector<32x128xf32>
    %96 = arith.mulf %95, %94 : vector<32x128xf32>
    %cst_37 = arith.constant 1.000000e+00 : f32
    %97 = vector.broadcast %cst_37 : f32 to vector<32x128xf32>
    %98 = arith.addf %97, %96 : vector<32x128xf32>
    %cst_38 = arith.constant 1.000000e+00 : f32
    %99 = vector.broadcast %cst_38 : f32 to vector<32x128xf32>
    %100 = arith.divf %99, %98 : vector<32x128xf32>
    %cst_39 = arith.constant 1.06140542 : f32
    %101 = vector.broadcast %cst_39 : f32 to vector<32x128xf32>
    %102 = arith.mulf %101, %100 : vector<32x128xf32>
    %cst_40 = arith.constant -1.45315206 : f32
    %103 = vector.broadcast %cst_40 : f32 to vector<32x128xf32>
    %104 = arith.addf %102, %103 : vector<32x128xf32>
    %105 = arith.mulf %104, %100 : vector<32x128xf32>
    %cst_41 = arith.constant 1.42141378 : f32
    %106 = vector.broadcast %cst_41 : f32 to vector<32x128xf32>
    %107 = arith.addf %105, %106 : vector<32x128xf32>
    %108 = arith.mulf %107, %100 : vector<32x128xf32>
    %cst_42 = arith.constant -0.284496725 : f32
    %109 = vector.broadcast %cst_42 : f32 to vector<32x128xf32>
    %110 = arith.addf %108, %109 : vector<32x128xf32>
    %111 = arith.mulf %110, %100 : vector<32x128xf32>
    %cst_43 = arith.constant 0.254829586 : f32
    %112 = vector.broadcast %cst_43 : f32 to vector<32x128xf32>
    %113 = arith.addf %111, %112 : vector<32x128xf32>
    %114 = arith.mulf %113, %100 : vector<32x128xf32>
    %cst_44 = arith.constant 0.000000e+00 : f32
    %115 = vector.broadcast %cst_44 : f32 to vector<32x128xf32>
    %116 = arith.subf %115, %94 : vector<32x128xf32>
    %117 = arith.mulf %116, %94 : vector<32x128xf32>
    %118 = math.exp %117 : vector<32x128xf32>
    %119 = arith.mulf %114, %118 : vector<32x128xf32>
    %cst_45 = arith.constant 1.000000e+00 : f32
    %120 = vector.broadcast %cst_45 : f32 to vector<32x128xf32>
    %121 = arith.subf %120, %119 : vector<32x128xf32>
    %122 = arith.mulf %93, %121 : vector<32x128xf32>
    %cst_46 = arith.constant 1.000000e+00 : f32
    %123 = vector.broadcast %cst_46 : f32 to vector<32x128xf32>
    %124 = arith.addf %123, %122 : vector<32x128xf32>
    %125 = arith.mulf %86, %124 : vector<32x128xf32>
    %c0_47 = arith.constant 0 : index
    %c0_48 = arith.constant 0 : index
    %c0_49 = arith.constant 0 : index
    %126 = vector.load %arg9[%c0_47, %c0_48, %c0_49] : memref<3x32x32xf32, #tpu.memory_space<vmem>>, vector<1x32x32xf32>
    %127 = vector.shape_cast %126 : vector<1x32x32xf32> to vector<32x32xf32>
    %cst_50 = arith.constant dense<0.000000e+00> : vector<32x128xf32>
    %128 = tpu.matmul %127, %125, %cst_50 {dimension_numbers = #tpu.dot_dimension_numbers<[1], [0], [0], [1], [0, 0, 1, 1], [], []>} : vector<32x32xf32>, vector<32x128xf32>, vector<32x128xf32> -> vector<32x128xf32>
    %c0_51 = arith.constant 0 : index
    %c0_52 = arith.constant 0 : index
    %c0_53 = arith.constant 0 : index
    %129 = vector.load %arg10[%c0_51, %c0_52, %c0_53] : memref<3x32x1xf32, #tpu.memory_space<vmem>>, vector<1x32x1xf32>
    %130 = vector.shape_cast %129 : vector<1x32x1xf32> to vector<32x1xf32>
    %131 = vector.broadcast %130 : vector<32x1xf32> to vector<32x128xf32>
    %132 = arith.addf %128, %131 : vector<32x128xf32>
    %c0_54 = arith.constant 0 : index
    %c0_55 = arith.constant 0 : index
    %c0_56 = arith.constant 0 : index
    %133 = vector.load %arg11[%c0_54, %c0_55, %c0_56] : memref<3x32x1xf32, #tpu.memory_space<vmem>>, vector<1x32x1xf32>
    %134 = vector.shape_cast %133 : vector<1x32x1xf32> to vector<32x1xf32>
    %c0_57 = arith.constant 0 : index
    %c0_58 = arith.constant 0 : index
    %c0_59 = arith.constant 0 : index
    %135 = vector.load %arg12[%c0_57, %c0_58, %c0_59] : memref<3x32x1xf32, #tpu.memory_space<vmem>>, vector<1x32x1xf32>
    %136 = vector.shape_cast %135 : vector<1x32x1xf32> to vector<32x1xf32>
    %cst_60 = arith.constant dense<0.000000e+00> : vector<128xf32>
    %137 = vector.multi_reduction <add>, %132, %cst_60 [0] : vector<32x128xf32> to vector<128xf32>
    %138 = vector.shape_cast %137 : vector<128xf32> to vector<1x128xf32>
    %cst_61 = arith.constant 3.200000e+01 : f32
    %139 = vector.broadcast %cst_61 : f32 to vector<1x128xf32>
    %140 = arith.divf %138, %139 : vector<1x128xf32>
    %141 = vector.broadcast %140 : vector<1x128xf32> to vector<32x128xf32>
    %142 = arith.subf %132, %141 : vector<32x128xf32>
    %143 = arith.mulf %142, %142 : vector<32x128xf32>
    %cst_62 = arith.constant dense<0.000000e+00> : vector<128xf32>
    %144 = vector.multi_reduction <add>, %143, %cst_62 [0] : vector<32x128xf32> to vector<128xf32>
    %145 = vector.shape_cast %144 : vector<128xf32> to vector<1x128xf32>
    %cst_63 = arith.constant 3.200000e+01 : f32
    %146 = vector.broadcast %cst_63 : f32 to vector<1x128xf32>
    %147 = arith.divf %145, %146 : vector<1x128xf32>
    %148 = vector.broadcast %140 : vector<1x128xf32> to vector<32x128xf32>
    %149 = arith.subf %132, %148 : vector<32x128xf32>
    %cst_64 = arith.constant 9.99999974E-6 : f32
    %150 = vector.broadcast %cst_64 : f32 to vector<1x128xf32>
    %151 = arith.addf %147, %150 : vector<1x128xf32>
    %152 = math.rsqrt %151 : vector<1x128xf32>
    %153 = vector.broadcast %152 : vector<1x128xf32> to vector<32x128xf32>
    %154 = arith.mulf %149, %153 : vector<32x128xf32>
    %155 = vector.broadcast %134 : vector<32x1xf32> to vector<32x128xf32>
    %156 = arith.mulf %154, %155 : vector<32x128xf32>
    %157 = vector.broadcast %136 : vector<32x1xf32> to vector<32x128xf32>
    %158 = arith.addf %156, %157 : vector<32x128xf32>
    %cst_65 = arith.constant 5.000000e-01 : f32
    %159 = vector.broadcast %cst_65 : f32 to vector<32x128xf32>
    %160 = arith.mulf %159, %158 : vector<32x128xf32>
    %cst_66 = arith.constant 0.707106769 : f32
    %161 = vector.broadcast %cst_66 : f32 to vector<32x128xf32>
    %162 = arith.mulf %158, %161 : vector<32x128xf32>
    %cst_67 = arith.constant 0.000000e+00 : f32
    %163 = vector.broadcast %cst_67 : f32 to vector<32x128xf32>
    %164 = arith.cmpf oge, %162, %163 : vector<32x128xf32>
    %cst_68 = arith.constant 1.000000e+00 : f32
    %cst_69 = arith.constant -1.000000e+00 : f32
    %165 = vector.broadcast %cst_68 : f32 to vector<32x128xf32>
    %166 = vector.broadcast %cst_69 : f32 to vector<32x128xf32>
    %167 = arith.select %164, %165, %166 : vector<32x128xi1>, vector<32x128xf32>
    %168 = math.absf %162 : vector<32x128xf32>
    %cst_70 = arith.constant 0.327591091 : f32
    %169 = vector.broadcast %cst_70 : f32 to vector<32x128xf32>
    %170 = arith.mulf %169, %168 : vector<32x128xf32>
    %cst_71 = arith.constant 1.000000e+00 : f32
    %171 = vector.broadcast %cst_71 : f32 to vector<32x128xf32>
    %172 = arith.addf %171, %170 : vector<32x128xf32>
    %cst_72 = arith.constant 1.000000e+00 : f32
    %173 = vector.broadcast %cst_72 : f32 to vector<32x128xf32>
    %174 = arith.divf %173, %172 : vector<32x128xf32>
    %cst_73 = arith.constant 1.06140542 : f32
    %175 = vector.broadcast %cst_73 : f32 to vector<32x128xf32>
    %176 = arith.mulf %175, %174 : vector<32x128xf32>
    %cst_74 = arith.constant -1.45315206 : f32
    %177 = vector.broadcast %cst_74 : f32 to vector<32x128xf32>
    %178 = arith.addf %176, %177 : vector<32x128xf32>
    %179 = arith.mulf %178, %174 : vector<32x128xf32>
    %cst_75 = arith.constant 1.42141378 : f32
    %180 = vector.broadcast %cst_75 : f32 to vector<32x128xf32>
    %181 = arith.addf %179, %180 : vector<32x128xf32>
    %182 = arith.mulf %181, %174 : vector<32x128xf32>
    %cst_76 = arith.constant -0.284496725 : f32
    %183 = vector.broadcast %cst_76 : f32 to vector<32x128xf32>
    %184 = arith.addf %182, %183 : vector<32x128xf32>
    %185 = arith.mulf %184, %174 : vector<32x128xf32>
    %cst_77 = arith.constant 0.254829586 : f32
    %186 = vector.broadcast %cst_77 : f32 to vector<32x128xf32>
    %187 = arith.addf %185, %186 : vector<32x128xf32>
    %188 = arith.mulf %187, %174 : vector<32x128xf32>
    %cst_78 = arith.constant 0.000000e+00 : f32
    %189 = vector.broadcast %cst_78 : f32 to vector<32x128xf32>
    %190 = arith.subf %189, %168 : vector<32x128xf32>
    %191 = arith.mulf %190, %168 : vector<32x128xf32>
    %192 = math.exp %191 : vector<32x128xf32>
    %193 = arith.mulf %188, %192 : vector<32x128xf32>
    %cst_79 = arith.constant 1.000000e+00 : f32
    %194 = vector.broadcast %cst_79 : f32 to vector<32x128xf32>
    %195 = arith.subf %194, %193 : vector<32x128xf32>
    %196 = arith.mulf %167, %195 : vector<32x128xf32>
    %cst_80 = arith.constant 1.000000e+00 : f32
    %197 = vector.broadcast %cst_80 : f32 to vector<32x128xf32>
    %198 = arith.addf %197, %196 : vector<32x128xf32>
    %199 = arith.mulf %160, %198 : vector<32x128xf32>
    %200 = arith.addf %22, %199 : vector<32x128xf32>
    %201 = vector.broadcast %3 : vector<1x128xf32> to vector<32x128xf32>
    %202 = arith.mulf %200, %201 : vector<32x128xf32>
    %c1 = arith.constant 1 : index
    %c0_81 = arith.constant 0 : index
    %c0_82 = arith.constant 0 : index
    %203 = vector.load %arg5[%c1, %c0_81, %c0_82] : memref<3x32x3xf32, #tpu.memory_space<vmem>>, vector<1x32x3xf32>
    %204 = vector.shape_cast %203 : vector<1x32x3xf32> to vector<32x3xf32>
    %cst_83 = arith.constant 0.000000e+00 : f32
    %205 = vector.broadcast %cst_83 : f32 to vector<32x128xf32>
    %206 = vector.extract_strided_slice %204 {offsets = [0, 0], sizes = [32, 1], strides = [1, 1]} : vector<32x3xf32> to vector<32x1xf32>
    %c3_i32 = arith.constant 3 : i32
    %207 = tpu.dynamic_rotate %202 by %c3_i32 dim 1 : vector<32x128xf32>, i32 -> vector<32x128xf32>
    %c3_i32_84 = arith.constant 3 : i32
    %208 = vector.broadcast %c3_i32_84 : i32 to vector<1x128xi32>
    %209 = arith.cmpi sge, %23, %208 : vector<1x128xi32>
    %cst_85 = arith.constant 0.000000e+00 : f32
    %210 = vector.shape_cast %209 : vector<1x128xi1> to vector<1x128xi1>
    %211 = vector.broadcast %210 : vector<1x128xi1> to vector<32x128xi1>
    %212 = vector.broadcast %cst_85 : f32 to vector<32x128xf32>
    %213 = arith.select %211, %207, %212 : vector<32x128xi1>, vector<32x128xf32>
    %214 = vector.broadcast %206 : vector<32x1xf32> to vector<32x128xf32>
    %215 = arith.mulf %214, %213 : vector<32x128xf32>
    %216 = arith.addf %205, %215 : vector<32x128xf32>
    %217 = vector.extract_strided_slice %204 {offsets = [0, 1], sizes = [32, 1], strides = [1, 1]} : vector<32x3xf32> to vector<32x1xf32>
    %218 = vector.broadcast %217 : vector<32x1xf32> to vector<32x128xf32>
    %219 = arith.mulf %218, %202 : vector<32x128xf32>
    %220 = arith.addf %216, %219 : vector<32x128xf32>
    %221 = vector.extract_strided_slice %204 {offsets = [0, 2], sizes = [32, 1], strides = [1, 1]} : vector<32x3xf32> to vector<32x1xf32>
    %c125_i32 = arith.constant 125 : i32
    %222 = tpu.dynamic_rotate %202 by %c125_i32 dim 1 : vector<32x128xf32>, i32 -> vector<32x128xf32>
    %c125_i32_86 = arith.constant 125 : i32
    %223 = vector.broadcast %c125_i32_86 : i32 to vector<1x128xi32>
    %224 = arith.cmpi slt, %23, %223 : vector<1x128xi32>
    %cst_87 = arith.constant 0.000000e+00 : f32
    %225 = vector.shape_cast %224 : vector<1x128xi1> to vector<1x128xi1>
    %226 = vector.broadcast %225 : vector<1x128xi1> to vector<32x128xi1>
    %227 = vector.broadcast %cst_87 : f32 to vector<32x128xf32>
    %228 = arith.select %226, %222, %227 : vector<32x128xi1>, vector<32x128xf32>
    %229 = vector.broadcast %221 : vector<32x1xf32> to vector<32x128xf32>
    %230 = arith.mulf %229, %228 : vector<32x128xf32>
    %231 = arith.addf %220, %230 : vector<32x128xf32>
    %c1_88 = arith.constant 1 : index
    %c0_89 = arith.constant 0 : index
    %c0_90 = arith.constant 0 : index
    %232 = vector.load %arg6[%c1_88, %c0_89, %c0_90] : memref<3x32x1xf32, #tpu.memory_space<vmem>>, vector<1x32x1xf32>
    %233 = vector.shape_cast %232 : vector<1x32x1xf32> to vector<32x1xf32>
    %234 = vector.broadcast %233 : vector<32x1xf32> to vector<32x128xf32>
    %235 = arith.addf %231, %234 : vector<32x128xf32>
    %c1_91 = arith.constant 1 : index
    %c0_92 = arith.constant 0 : index
    %c0_93 = arith.constant 0 : index
    %236 = vector.load %arg7[%c1_91, %c0_92, %c0_93] : memref<3x32x1xf32, #tpu.memory_space<vmem>>, vector<1x32x1xf32>
    %237 = vector.shape_cast %236 : vector<1x32x1xf32> to vector<32x1xf32>
    %c1_94 = arith.constant 1 : index
    %c0_95 = arith.constant 0 : index
    %c0_96 = arith.constant 0 : index
    %238 = vector.load %arg8[%c1_94, %c0_95, %c0_96] : memref<3x32x1xf32, #tpu.memory_space<vmem>>, vector<1x32x1xf32>
    %239 = vector.shape_cast %238 : vector<1x32x1xf32> to vector<32x1xf32>
    %cst_97 = arith.constant dense<0.000000e+00> : vector<128xf32>
    %240 = vector.multi_reduction <add>, %235, %cst_97 [0] : vector<32x128xf32> to vector<128xf32>
    %241 = vector.shape_cast %240 : vector<128xf32> to vector<1x128xf32>
    %cst_98 = arith.constant 3.200000e+01 : f32
    %242 = vector.broadcast %cst_98 : f32 to vector<1x128xf32>
    %243 = arith.divf %241, %242 : vector<1x128xf32>
    %244 = vector.broadcast %243 : vector<1x128xf32> to vector<32x128xf32>
    %245 = arith.subf %235, %244 : vector<32x128xf32>
    %246 = arith.mulf %245, %245 : vector<32x128xf32>
    %cst_99 = arith.constant dense<0.000000e+00> : vector<128xf32>
    %247 = vector.multi_reduction <add>, %246, %cst_99 [0] : vector<32x128xf32> to vector<128xf32>
    %248 = vector.shape_cast %247 : vector<128xf32> to vector<1x128xf32>
    %cst_100 = arith.constant 3.200000e+01 : f32
    %249 = vector.broadcast %cst_100 : f32 to vector<1x128xf32>
    %250 = arith.divf %248, %249 : vector<1x128xf32>
    %251 = vector.broadcast %243 : vector<1x128xf32> to vector<32x128xf32>
    %252 = arith.subf %235, %251 : vector<32x128xf32>
    %cst_101 = arith.constant 9.99999974E-6 : f32
    %253 = vector.broadcast %cst_101 : f32 to vector<1x128xf32>
    %254 = arith.addf %250, %253 : vector<1x128xf32>
    %255 = math.rsqrt %254 : vector<1x128xf32>
    %256 = vector.broadcast %255 : vector<1x128xf32> to vector<32x128xf32>
    %257 = arith.mulf %252, %256 : vector<32x128xf32>
    %258 = vector.broadcast %237 : vector<32x1xf32> to vector<32x128xf32>
    %259 = arith.mulf %257, %258 : vector<32x128xf32>
    %260 = vector.broadcast %239 : vector<32x1xf32> to vector<32x128xf32>
    %261 = arith.addf %259, %260 : vector<32x128xf32>
    %cst_102 = arith.constant 5.000000e-01 : f32
    %262 = vector.broadcast %cst_102 : f32 to vector<32x128xf32>
    %263 = arith.mulf %262, %261 : vector<32x128xf32>
    %cst_103 = arith.constant 0.707106769 : f32
    %264 = vector.broadcast %cst_103 : f32 to vector<32x128xf32>
    %265 = arith.mulf %261, %264 : vector<32x128xf32>
    %cst_104 = arith.constant 0.000000e+00 : f32
    %266 = vector.broadcast %cst_104 : f32 to vector<32x128xf32>
    %267 = arith.cmpf oge, %265, %266 : vector<32x128xf32>
    %cst_105 = arith.constant 1.000000e+00 : f32
    %cst_106 = arith.constant -1.000000e+00 : f32
    %268 = vector.broadcast %cst_105 : f32 to vector<32x128xf32>
    %269 = vector.broadcast %cst_106 : f32 to vector<32x128xf32>
    %270 = arith.select %267, %268, %269 : vector<32x128xi1>, vector<32x128xf32>
    %271 = math.absf %265 : vector<32x128xf32>
    %cst_107 = arith.constant 0.327591091 : f32
    %272 = vector.broadcast %cst_107 : f32 to vector<32x128xf32>
    %273 = arith.mulf %272, %271 : vector<32x128xf32>
    %cst_108 = arith.constant 1.000000e+00 : f32
    %274 = vector.broadcast %cst_108 : f32 to vector<32x128xf32>
    %275 = arith.addf %274, %273 : vector<32x128xf32>
    %cst_109 = arith.constant 1.000000e+00 : f32
    %276 = vector.broadcast %cst_109 : f32 to vector<32x128xf32>
    %277 = arith.divf %276, %275 : vector<32x128xf32>
    %cst_110 = arith.constant 1.06140542 : f32
    %278 = vector.broadcast %cst_110 : f32 to vector<32x128xf32>
    %279 = arith.mulf %278, %277 : vector<32x128xf32>
    %cst_111 = arith.constant -1.45315206 : f32
    %280 = vector.broadcast %cst_111 : f32 to vector<32x128xf32>
    %281 = arith.addf %279, %280 : vector<32x128xf32>
    %282 = arith.mulf %281, %277 : vector<32x128xf32>
    %cst_112 = arith.constant 1.42141378 : f32
    %283 = vector.broadcast %cst_112 : f32 to vector<32x128xf32>
    %284 = arith.addf %282, %283 : vector<32x128xf32>
    %285 = arith.mulf %284, %277 : vector<32x128xf32>
    %cst_113 = arith.constant -0.284496725 : f32
    %286 = vector.broadcast %cst_113 : f32 to vector<32x128xf32>
    %287 = arith.addf %285, %286 : vector<32x128xf32>
    %288 = arith.mulf %287, %277 : vector<32x128xf32>
    %cst_114 = arith.constant 0.254829586 : f32
    %289 = vector.broadcast %cst_114 : f32 to vector<32x128xf32>
    %290 = arith.addf %288, %289 : vector<32x128xf32>
    %291 = arith.mulf %290, %277 : vector<32x128xf32>
    %cst_115 = arith.constant 0.000000e+00 : f32
    %292 = vector.broadcast %cst_115 : f32 to vector<32x128xf32>
    %293 = arith.subf %292, %271 : vector<32x128xf32>
    %294 = arith.mulf %293, %271 : vector<32x128xf32>
    %295 = math.exp %294 : vector<32x128xf32>
    %296 = arith.mulf %291, %295 : vector<32x128xf32>
    %cst_116 = arith.constant 1.000000e+00 : f32
    %297 = vector.broadcast %cst_116 : f32 to vector<32x128xf32>
    %298 = arith.subf %297, %296 : vector<32x128xf32>
    %299 = arith.mulf %270, %298 : vector<32x128xf32>
    %cst_117 = arith.constant 1.000000e+00 : f32
    %300 = vector.broadcast %cst_117 : f32 to vector<32x128xf32>
    %301 = arith.addf %300, %299 : vector<32x128xf32>
    %302 = arith.mulf %263, %301 : vector<32x128xf32>
    %c1_118 = arith.constant 1 : index
    %c0_119 = arith.constant 0 : index
    %c0_120 = arith.constant 0 : index
    %303 = vector.load %arg9[%c1_118, %c0_119, %c0_120] : memref<3x32x32xf32, #tpu.memory_space<vmem>>, vector<1x32x32xf32>
    %304 = vector.shape_cast %303 : vector<1x32x32xf32> to vector<32x32xf32>
    %cst_121 = arith.constant dense<0.000000e+00> : vector<32x128xf32>
    %305 = tpu.matmul %304, %302, %cst_121 {dimension_numbers = #tpu.dot_dimension_numbers<[1], [0], [0], [1], [0, 0, 1, 1], [], []>} : vector<32x32xf32>, vector<32x128xf32>, vector<32x128xf32> -> vector<32x128xf32>
    %c1_122 = arith.constant 1 : index
    %c0_123 = arith.constant 0 : index
    %c0_124 = arith.constant 0 : index
    %306 = vector.load %arg10[%c1_122, %c0_123, %c0_124] : memref<3x32x1xf32, #tpu.memory_space<vmem>>, vector<1x32x1xf32>
    %307 = vector.shape_cast %306 : vector<1x32x1xf32> to vector<32x1xf32>
    %308 = vector.broadcast %307 : vector<32x1xf32> to vector<32x128xf32>
    %309 = arith.addf %305, %308 : vector<32x128xf32>
    %c1_125 = arith.constant 1 : index
    %c0_126 = arith.constant 0 : index
    %c0_127 = arith.constant 0 : index
    %310 = vector.load %arg11[%c1_125, %c0_126, %c0_127] : memref<3x32x1xf32, #tpu.memory_space<vmem>>, vector<1x32x1xf32>
    %311 = vector.shape_cast %310 : vector<1x32x1xf32> to vector<32x1xf32>
    %c1_128 = arith.constant 1 : index
    %c0_129 = arith.constant 0 : index
    %c0_130 = arith.constant 0 : index
    %312 = vector.load %arg12[%c1_128, %c0_129, %c0_130] : memref<3x32x1xf32, #tpu.memory_space<vmem>>, vector<1x32x1xf32>
    %313 = vector.shape_cast %312 : vector<1x32x1xf32> to vector<32x1xf32>
    %cst_131 = arith.constant dense<0.000000e+00> : vector<128xf32>
    %314 = vector.multi_reduction <add>, %309, %cst_131 [0] : vector<32x128xf32> to vector<128xf32>
    %315 = vector.shape_cast %314 : vector<128xf32> to vector<1x128xf32>
    %cst_132 = arith.constant 3.200000e+01 : f32
    %316 = vector.broadcast %cst_132 : f32 to vector<1x128xf32>
    %317 = arith.divf %315, %316 : vector<1x128xf32>
    %318 = vector.broadcast %317 : vector<1x128xf32> to vector<32x128xf32>
    %319 = arith.subf %309, %318 : vector<32x128xf32>
    %320 = arith.mulf %319, %319 : vector<32x128xf32>
    %cst_133 = arith.constant dense<0.000000e+00> : vector<128xf32>
    %321 = vector.multi_reduction <add>, %320, %cst_133 [0] : vector<32x128xf32> to vector<128xf32>
    %322 = vector.shape_cast %321 : vector<128xf32> to vector<1x128xf32>
    %cst_134 = arith.constant 3.200000e+01 : f32
    %323 = vector.broadcast %cst_134 : f32 to vector<1x128xf32>
    %324 = arith.divf %322, %323 : vector<1x128xf32>
    %325 = vector.broadcast %317 : vector<1x128xf32> to vector<32x128xf32>
    %326 = arith.subf %309, %325 : vector<32x128xf32>
    %cst_135 = arith.constant 9.99999974E-6 : f32
    %327 = vector.broadcast %cst_135 : f32 to vector<1x128xf32>
    %328 = arith.addf %324, %327 : vector<1x128xf32>
    %329 = math.rsqrt %328 : vector<1x128xf32>
    %330 = vector.broadcast %329 : vector<1x128xf32> to vector<32x128xf32>
    %331 = arith.mulf %326, %330 : vector<32x128xf32>
    %332 = vector.broadcast %311 : vector<32x1xf32> to vector<32x128xf32>
    %333 = arith.mulf %331, %332 : vector<32x128xf32>
    %334 = vector.broadcast %313 : vector<32x1xf32> to vector<32x128xf32>
    %335 = arith.addf %333, %334 : vector<32x128xf32>
    %cst_136 = arith.constant 5.000000e-01 : f32
    %336 = vector.broadcast %cst_136 : f32 to vector<32x128xf32>
    %337 = arith.mulf %336, %335 : vector<32x128xf32>
    %cst_137 = arith.constant 0.707106769 : f32
    %338 = vector.broadcast %cst_137 : f32 to vector<32x128xf32>
    %339 = arith.mulf %335, %338 : vector<32x128xf32>
    %cst_138 = arith.constant 0.000000e+00 : f32
    %340 = vector.broadcast %cst_138 : f32 to vector<32x128xf32>
    %341 = arith.cmpf oge, %339, %340 : vector<32x128xf32>
    %cst_139 = arith.constant 1.000000e+00 : f32
    %cst_140 = arith.constant -1.000000e+00 : f32
    %342 = vector.broadcast %cst_139 : f32 to vector<32x128xf32>
    %343 = vector.broadcast %cst_140 : f32 to vector<32x128xf32>
    %344 = arith.select %341, %342, %343 : vector<32x128xi1>, vector<32x128xf32>
    %345 = math.absf %339 : vector<32x128xf32>
    %cst_141 = arith.constant 0.327591091 : f32
    %346 = vector.broadcast %cst_141 : f32 to vector<32x128xf32>
    %347 = arith.mulf %346, %345 : vector<32x128xf32>
    %cst_142 = arith.constant 1.000000e+00 : f32
    %348 = vector.broadcast %cst_142 : f32 to vector<32x128xf32>
    %349 = arith.addf %348, %347 : vector<32x128xf32>
    %cst_143 = arith.constant 1.000000e+00 : f32
    %350 = vector.broadcast %cst_143 : f32 to vector<32x128xf32>
    %351 = arith.divf %350, %349 : vector<32x128xf32>
    %cst_144 = arith.constant 1.06140542 : f32
    %352 = vector.broadcast %cst_144 : f32 to vector<32x128xf32>
    %353 = arith.mulf %352, %351 : vector<32x128xf32>
    %cst_145 = arith.constant -1.45315206 : f32
    %354 = vector.broadcast %cst_145 : f32 to vector<32x128xf32>
    %355 = arith.addf %353, %354 : vector<32x128xf32>
    %356 = arith.mulf %355, %351 : vector<32x128xf32>
    %cst_146 = arith.constant 1.42141378 : f32
    %357 = vector.broadcast %cst_146 : f32 to vector<32x128xf32>
    %358 = arith.addf %356, %357 : vector<32x128xf32>
    %359 = arith.mulf %358, %351 : vector<32x128xf32>
    %cst_147 = arith.constant -0.284496725 : f32
    %360 = vector.broadcast %cst_147 : f32 to vector<32x128xf32>
    %361 = arith.addf %359, %360 : vector<32x128xf32>
    %362 = arith.mulf %361, %351 : vector<32x128xf32>
    %cst_148 = arith.constant 0.254829586 : f32
    %363 = vector.broadcast %cst_148 : f32 to vector<32x128xf32>
    %364 = arith.addf %362, %363 : vector<32x128xf32>
    %365 = arith.mulf %364, %351 : vector<32x128xf32>
    %cst_149 = arith.constant 0.000000e+00 : f32
    %366 = vector.broadcast %cst_149 : f32 to vector<32x128xf32>
    %367 = arith.subf %366, %345 : vector<32x128xf32>
    %368 = arith.mulf %367, %345 : vector<32x128xf32>
    %369 = math.exp %368 : vector<32x128xf32>
    %370 = arith.mulf %365, %369 : vector<32x128xf32>
    %cst_150 = arith.constant 1.000000e+00 : f32
    %371 = vector.broadcast %cst_150 : f32 to vector<32x128xf32>
    %372 = arith.subf %371, %370 : vector<32x128xf32>
    %373 = arith.mulf %344, %372 : vector<32x128xf32>
    %cst_151 = arith.constant 1.000000e+00 : f32
    %374 = vector.broadcast %cst_151 : f32 to vector<32x128xf32>
    %375 = arith.addf %374, %373 : vector<32x128xf32>
    %376 = arith.mulf %337, %375 : vector<32x128xf32>
    %377 = arith.addf %200, %376 : vector<32x128xf32>
    %378 = vector.broadcast %3 : vector<1x128xf32> to vector<32x128xf32>
    %379 = arith.mulf %377, %378 : vector<32x128xf32>
    %c2 = arith.constant 2 : index
    %c0_152 = arith.constant 0 : index
    %c0_153 = arith.constant 0 : index
    %380 = vector.load %arg5[%c2, %c0_152, %c0_153] : memref<3x32x3xf32, #tpu.memory_space<vmem>>, vector<1x32x3xf32>
    %381 = vector.shape_cast %380 : vector<1x32x3xf32> to vector<32x3xf32>
    %cst_154 = arith.constant 0.000000e+00 : f32
    %382 = vector.broadcast %cst_154 : f32 to vector<32x128xf32>
    %383 = vector.extract_strided_slice %381 {offsets = [0, 0], sizes = [32, 1], strides = [1, 1]} : vector<32x3xf32> to vector<32x1xf32>
    %c9_i32 = arith.constant 9 : i32
    %384 = tpu.dynamic_rotate %379 by %c9_i32 dim 1 : vector<32x128xf32>, i32 -> vector<32x128xf32>
    %c9_i32_155 = arith.constant 9 : i32
    %385 = vector.broadcast %c9_i32_155 : i32 to vector<1x128xi32>
    %386 = arith.cmpi sge, %23, %385 : vector<1x128xi32>
    %cst_156 = arith.constant 0.000000e+00 : f32
    %387 = vector.shape_cast %386 : vector<1x128xi1> to vector<1x128xi1>
    %388 = vector.broadcast %387 : vector<1x128xi1> to vector<32x128xi1>
    %389 = vector.broadcast %cst_156 : f32 to vector<32x128xf32>
    %390 = arith.select %388, %384, %389 : vector<32x128xi1>, vector<32x128xf32>
    %391 = vector.broadcast %383 : vector<32x1xf32> to vector<32x128xf32>
    %392 = arith.mulf %391, %390 : vector<32x128xf32>
    %393 = arith.addf %382, %392 : vector<32x128xf32>
    %394 = vector.extract_strided_slice %381 {offsets = [0, 1], sizes = [32, 1], strides = [1, 1]} : vector<32x3xf32> to vector<32x1xf32>
    %395 = vector.broadcast %394 : vector<32x1xf32> to vector<32x128xf32>
    %396 = arith.mulf %395, %379 : vector<32x128xf32>
    %397 = arith.addf %393, %396 : vector<32x128xf32>
    %398 = vector.extract_strided_slice %381 {offsets = [0, 2], sizes = [32, 1], strides = [1, 1]} : vector<32x3xf32> to vector<32x1xf32>
    %c119_i32 = arith.constant 119 : i32
    %399 = tpu.dynamic_rotate %379 by %c119_i32 dim 1 : vector<32x128xf32>, i32 -> vector<32x128xf32>
    %c119_i32_157 = arith.constant 119 : i32
    %400 = vector.broadcast %c119_i32_157 : i32 to vector<1x128xi32>
    %401 = arith.cmpi slt, %23, %400 : vector<1x128xi32>
    %cst_158 = arith.constant 0.000000e+00 : f32
    %402 = vector.shape_cast %401 : vector<1x128xi1> to vector<1x128xi1>
    %403 = vector.broadcast %402 : vector<1x128xi1> to vector<32x128xi1>
    %404 = vector.broadcast %cst_158 : f32 to vector<32x128xf32>
    %405 = arith.select %403, %399, %404 : vector<32x128xi1>, vector<32x128xf32>
    %406 = vector.broadcast %398 : vector<32x1xf32> to vector<32x128xf32>
    %407 = arith.mulf %406, %405 : vector<32x128xf32>
    %408 = arith.addf %397, %407 : vector<32x128xf32>
    %c2_159 = arith.constant 2 : index
    %c0_160 = arith.constant 0 : index
    %c0_161 = arith.constant 0 : index
    %409 = vector.load %arg6[%c2_159, %c0_160, %c0_161] : memref<3x32x1xf32, #tpu.memory_space<vmem>>, vector<1x32x1xf32>
    %410 = vector.shape_cast %409 : vector<1x32x1xf32> to vector<32x1xf32>
    %411 = vector.broadcast %410 : vector<32x1xf32> to vector<32x128xf32>
    %412 = arith.addf %408, %411 : vector<32x128xf32>
    %c2_162 = arith.constant 2 : index
    %c0_163 = arith.constant 0 : index
    %c0_164 = arith.constant 0 : index
    %413 = vector.load %arg7[%c2_162, %c0_163, %c0_164] : memref<3x32x1xf32, #tpu.memory_space<vmem>>, vector<1x32x1xf32>
    %414 = vector.shape_cast %413 : vector<1x32x1xf32> to vector<32x1xf32>
    %c2_165 = arith.constant 2 : index
    %c0_166 = arith.constant 0 : index
    %c0_167 = arith.constant 0 : index
    %415 = vector.load %arg8[%c2_165, %c0_166, %c0_167] : memref<3x32x1xf32, #tpu.memory_space<vmem>>, vector<1x32x1xf32>
    %416 = vector.shape_cast %415 : vector<1x32x1xf32> to vector<32x1xf32>
    %cst_168 = arith.constant dense<0.000000e+00> : vector<128xf32>
    %417 = vector.multi_reduction <add>, %412, %cst_168 [0] : vector<32x128xf32> to vector<128xf32>
    %418 = vector.shape_cast %417 : vector<128xf32> to vector<1x128xf32>
    %cst_169 = arith.constant 3.200000e+01 : f32
    %419 = vector.broadcast %cst_169 : f32 to vector<1x128xf32>
    %420 = arith.divf %418, %419 : vector<1x128xf32>
    %421 = vector.broadcast %420 : vector<1x128xf32> to vector<32x128xf32>
    %422 = arith.subf %412, %421 : vector<32x128xf32>
    %423 = arith.mulf %422, %422 : vector<32x128xf32>
    %cst_170 = arith.constant dense<0.000000e+00> : vector<128xf32>
    %424 = vector.multi_reduction <add>, %423, %cst_170 [0] : vector<32x128xf32> to vector<128xf32>
    %425 = vector.shape_cast %424 : vector<128xf32> to vector<1x128xf32>
    %cst_171 = arith.constant 3.200000e+01 : f32
    %426 = vector.broadcast %cst_171 : f32 to vector<1x128xf32>
    %427 = arith.divf %425, %426 : vector<1x128xf32>
    %428 = vector.broadcast %420 : vector<1x128xf32> to vector<32x128xf32>
    %429 = arith.subf %412, %428 : vector<32x128xf32>
    %cst_172 = arith.constant 9.99999974E-6 : f32
    %430 = vector.broadcast %cst_172 : f32 to vector<1x128xf32>
    %431 = arith.addf %427, %430 : vector<1x128xf32>
    %432 = math.rsqrt %431 : vector<1x128xf32>
    %433 = vector.broadcast %432 : vector<1x128xf32> to vector<32x128xf32>
    %434 = arith.mulf %429, %433 : vector<32x128xf32>
    %435 = vector.broadcast %414 : vector<32x1xf32> to vector<32x128xf32>
    %436 = arith.mulf %434, %435 : vector<32x128xf32>
    %437 = vector.broadcast %416 : vector<32x1xf32> to vector<32x128xf32>
    %438 = arith.addf %436, %437 : vector<32x128xf32>
    %cst_173 = arith.constant 5.000000e-01 : f32
    %439 = vector.broadcast %cst_173 : f32 to vector<32x128xf32>
    %440 = arith.mulf %439, %438 : vector<32x128xf32>
    %cst_174 = arith.constant 0.707106769 : f32
    %441 = vector.broadcast %cst_174 : f32 to vector<32x128xf32>
    %442 = arith.mulf %438, %441 : vector<32x128xf32>
    %cst_175 = arith.constant 0.000000e+00 : f32
    %443 = vector.broadcast %cst_175 : f32 to vector<32x128xf32>
    %444 = arith.cmpf oge, %442, %443 : vector<32x128xf32>
    %cst_176 = arith.constant 1.000000e+00 : f32
    %cst_177 = arith.constant -1.000000e+00 : f32
    %445 = vector.broadcast %cst_176 : f32 to vector<32x128xf32>
    %446 = vector.broadcast %cst_177 : f32 to vector<32x128xf32>
    %447 = arith.select %444, %445, %446 : vector<32x128xi1>, vector<32x128xf32>
    %448 = math.absf %442 : vector<32x128xf32>
    %cst_178 = arith.constant 0.327591091 : f32
    %449 = vector.broadcast %cst_178 : f32 to vector<32x128xf32>
    %450 = arith.mulf %449, %448 : vector<32x128xf32>
    %cst_179 = arith.constant 1.000000e+00 : f32
    %451 = vector.broadcast %cst_179 : f32 to vector<32x128xf32>
    %452 = arith.addf %451, %450 : vector<32x128xf32>
    %cst_180 = arith.constant 1.000000e+00 : f32
    %453 = vector.broadcast %cst_180 : f32 to vector<32x128xf32>
    %454 = arith.divf %453, %452 : vector<32x128xf32>
    %cst_181 = arith.constant 1.06140542 : f32
    %455 = vector.broadcast %cst_181 : f32 to vector<32x128xf32>
    %456 = arith.mulf %455, %454 : vector<32x128xf32>
    %cst_182 = arith.constant -1.45315206 : f32
    %457 = vector.broadcast %cst_182 : f32 to vector<32x128xf32>
    %458 = arith.addf %456, %457 : vector<32x128xf32>
    %459 = arith.mulf %458, %454 : vector<32x128xf32>
    %cst_183 = arith.constant 1.42141378 : f32
    %460 = vector.broadcast %cst_183 : f32 to vector<32x128xf32>
    %461 = arith.addf %459, %460 : vector<32x128xf32>
    %462 = arith.mulf %461, %454 : vector<32x128xf32>
    %cst_184 = arith.constant -0.284496725 : f32
    %463 = vector.broadcast %cst_184 : f32 to vector<32x128xf32>
    %464 = arith.addf %462, %463 : vector<32x128xf32>
    %465 = arith.mulf %464, %454 : vector<32x128xf32>
    %cst_185 = arith.constant 0.254829586 : f32
    %466 = vector.broadcast %cst_185 : f32 to vector<32x128xf32>
    %467 = arith.addf %465, %466 : vector<32x128xf32>
    %468 = arith.mulf %467, %454 : vector<32x128xf32>
    %cst_186 = arith.constant 0.000000e+00 : f32
    %469 = vector.broadcast %cst_186 : f32 to vector<32x128xf32>
    %470 = arith.subf %469, %448 : vector<32x128xf32>
    %471 = arith.mulf %470, %448 : vector<32x128xf32>
    %472 = math.exp %471 : vector<32x128xf32>
    %473 = arith.mulf %468, %472 : vector<32x128xf32>
    %cst_187 = arith.constant 1.000000e+00 : f32
    %474 = vector.broadcast %cst_187 : f32 to vector<32x128xf32>
    %475 = arith.subf %474, %473 : vector<32x128xf32>
    %476 = arith.mulf %447, %475 : vector<32x128xf32>
    %cst_188 = arith.constant 1.000000e+00 : f32
    %477 = vector.broadcast %cst_188 : f32 to vector<32x128xf32>
    %478 = arith.addf %477, %476 : vector<32x128xf32>
    %479 = arith.mulf %440, %478 : vector<32x128xf32>
    %c2_189 = arith.constant 2 : index
    %c0_190 = arith.constant 0 : index
    %c0_191 = arith.constant 0 : index
    %480 = vector.load %arg9[%c2_189, %c0_190, %c0_191] : memref<3x32x32xf32, #tpu.memory_space<vmem>>, vector<1x32x32xf32>
    %481 = vector.shape_cast %480 : vector<1x32x32xf32> to vector<32x32xf32>
    %cst_192 = arith.constant dense<0.000000e+00> : vector<32x128xf32>
    %482 = tpu.matmul %481, %479, %cst_192 {dimension_numbers = #tpu.dot_dimension_numbers<[1], [0], [0], [1], [0, 0, 1, 1], [], []>} : vector<32x32xf32>, vector<32x128xf32>, vector<32x128xf32> -> vector<32x128xf32>
    %c2_193 = arith.constant 2 : index
    %c0_194 = arith.constant 0 : index
    %c0_195 = arith.constant 0 : index
    %483 = vector.load %arg10[%c2_193, %c0_194, %c0_195] : memref<3x32x1xf32, #tpu.memory_space<vmem>>, vector<1x32x1xf32>
    %484 = vector.shape_cast %483 : vector<1x32x1xf32> to vector<32x1xf32>
    %485 = vector.broadcast %484 : vector<32x1xf32> to vector<32x128xf32>
    %486 = arith.addf %482, %485 : vector<32x128xf32>
    %c2_196 = arith.constant 2 : index
    %c0_197 = arith.constant 0 : index
    %c0_198 = arith.constant 0 : index
    %487 = vector.load %arg11[%c2_196, %c0_197, %c0_198] : memref<3x32x1xf32, #tpu.memory_space<vmem>>, vector<1x32x1xf32>
    %488 = vector.shape_cast %487 : vector<1x32x1xf32> to vector<32x1xf32>
    %c2_199 = arith.constant 2 : index
    %c0_200 = arith.constant 0 : index
    %c0_201 = arith.constant 0 : index
    %489 = vector.load %arg12[%c2_199, %c0_200, %c0_201] : memref<3x32x1xf32, #tpu.memory_space<vmem>>, vector<1x32x1xf32>
    %490 = vector.shape_cast %489 : vector<1x32x1xf32> to vector<32x1xf32>
    %cst_202 = arith.constant dense<0.000000e+00> : vector<128xf32>
    %491 = vector.multi_reduction <add>, %486, %cst_202 [0] : vector<32x128xf32> to vector<128xf32>
    %492 = vector.shape_cast %491 : vector<128xf32> to vector<1x128xf32>
    %cst_203 = arith.constant 3.200000e+01 : f32
    %493 = vector.broadcast %cst_203 : f32 to vector<1x128xf32>
    %494 = arith.divf %492, %493 : vector<1x128xf32>
    %495 = vector.broadcast %494 : vector<1x128xf32> to vector<32x128xf32>
    %496 = arith.subf %486, %495 : vector<32x128xf32>
    %497 = arith.mulf %496, %496 : vector<32x128xf32>
    %cst_204 = arith.constant dense<0.000000e+00> : vector<128xf32>
    %498 = vector.multi_reduction <add>, %497, %cst_204 [0] : vector<32x128xf32> to vector<128xf32>
    %499 = vector.shape_cast %498 : vector<128xf32> to vector<1x128xf32>
    %cst_205 = arith.constant 3.200000e+01 : f32
    %500 = vector.broadcast %cst_205 : f32 to vector<1x128xf32>
    %501 = arith.divf %499, %500 : vector<1x128xf32>
    %502 = vector.broadcast %494 : vector<1x128xf32> to vector<32x128xf32>
    %503 = arith.subf %486, %502 : vector<32x128xf32>
    %cst_206 = arith.constant 9.99999974E-6 : f32
    %504 = vector.broadcast %cst_206 : f32 to vector<1x128xf32>
    %505 = arith.addf %501, %504 : vector<1x128xf32>
    %506 = math.rsqrt %505 : vector<1x128xf32>
    %507 = vector.broadcast %506 : vector<1x128xf32> to vector<32x128xf32>
    %508 = arith.mulf %503, %507 : vector<32x128xf32>
    %509 = vector.broadcast %488 : vector<32x1xf32> to vector<32x128xf32>
    %510 = arith.mulf %508, %509 : vector<32x128xf32>
    %511 = vector.broadcast %490 : vector<32x1xf32> to vector<32x128xf32>
    %512 = arith.addf %510, %511 : vector<32x128xf32>
    %cst_207 = arith.constant 5.000000e-01 : f32
    %513 = vector.broadcast %cst_207 : f32 to vector<32x128xf32>
    %514 = arith.mulf %513, %512 : vector<32x128xf32>
    %cst_208 = arith.constant 0.707106769 : f32
    %515 = vector.broadcast %cst_208 : f32 to vector<32x128xf32>
    %516 = arith.mulf %512, %515 : vector<32x128xf32>
    %cst_209 = arith.constant 0.000000e+00 : f32
    %517 = vector.broadcast %cst_209 : f32 to vector<32x128xf32>
    %518 = arith.cmpf oge, %516, %517 : vector<32x128xf32>
    %cst_210 = arith.constant 1.000000e+00 : f32
    %cst_211 = arith.constant -1.000000e+00 : f32
    %519 = vector.broadcast %cst_210 : f32 to vector<32x128xf32>
    %520 = vector.broadcast %cst_211 : f32 to vector<32x128xf32>
    %521 = arith.select %518, %519, %520 : vector<32x128xi1>, vector<32x128xf32>
    %522 = math.absf %516 : vector<32x128xf32>
    %cst_212 = arith.constant 0.327591091 : f32
    %523 = vector.broadcast %cst_212 : f32 to vector<32x128xf32>
    %524 = arith.mulf %523, %522 : vector<32x128xf32>
    %cst_213 = arith.constant 1.000000e+00 : f32
    %525 = vector.broadcast %cst_213 : f32 to vector<32x128xf32>
    %526 = arith.addf %525, %524 : vector<32x128xf32>
    %cst_214 = arith.constant 1.000000e+00 : f32
    %527 = vector.broadcast %cst_214 : f32 to vector<32x128xf32>
    %528 = arith.divf %527, %526 : vector<32x128xf32>
    %cst_215 = arith.constant 1.06140542 : f32
    %529 = vector.broadcast %cst_215 : f32 to vector<32x128xf32>
    %530 = arith.mulf %529, %528 : vector<32x128xf32>
    %cst_216 = arith.constant -1.45315206 : f32
    %531 = vector.broadcast %cst_216 : f32 to vector<32x128xf32>
    %532 = arith.addf %530, %531 : vector<32x128xf32>
    %533 = arith.mulf %532, %528 : vector<32x128xf32>
    %cst_217 = arith.constant 1.42141378 : f32
    %534 = vector.broadcast %cst_217 : f32 to vector<32x128xf32>
    %535 = arith.addf %533, %534 : vector<32x128xf32>
    %536 = arith.mulf %535, %528 : vector<32x128xf32>
    %cst_218 = arith.constant -0.284496725 : f32
    %537 = vector.broadcast %cst_218 : f32 to vector<32x128xf32>
    %538 = arith.addf %536, %537 : vector<32x128xf32>
    %539 = arith.mulf %538, %528 : vector<32x128xf32>
    %cst_219 = arith.constant 0.254829586 : f32
    %540 = vector.broadcast %cst_219 : f32 to vector<32x128xf32>
    %541 = arith.addf %539, %540 : vector<32x128xf32>
    %542 = arith.mulf %541, %528 : vector<32x128xf32>
    %cst_220 = arith.constant 0.000000e+00 : f32
    %543 = vector.broadcast %cst_220 : f32 to vector<32x128xf32>
    %544 = arith.subf %543, %522 : vector<32x128xf32>
    %545 = arith.mulf %544, %522 : vector<32x128xf32>
    %546 = math.exp %545 : vector<32x128xf32>
    %547 = arith.mulf %542, %546 : vector<32x128xf32>
    %cst_221 = arith.constant 1.000000e+00 : f32
    %548 = vector.broadcast %cst_221 : f32 to vector<32x128xf32>
    %549 = arith.subf %548, %547 : vector<32x128xf32>
    %550 = arith.mulf %521, %549 : vector<32x128xf32>
    %cst_222 = arith.constant 1.000000e+00 : f32
    %551 = vector.broadcast %cst_222 : f32 to vector<32x128xf32>
    %552 = arith.addf %551, %550 : vector<32x128xf32>
    %553 = arith.mulf %514, %552 : vector<32x128xf32>
    %554 = arith.addf %377, %553 : vector<32x128xf32>
    %555 = vector.broadcast %3 : vector<1x128xf32> to vector<32x128xf32>
    %556 = arith.mulf %554, %555 : vector<32x128xf32>
    %c0_223 = arith.constant 0 : index
    %c0_224 = arith.constant 0 : index
    %557 = vector.load %arg13[%c0_223, %c0_224] : memref<58x32xf32, #tpu.memory_space<vmem>>, vector<58x32xf32>
    %cst_225 = arith.constant dense<0.000000e+00> : vector<58x128xf32>
    %558 = tpu.matmul %557, %556, %cst_225 {dimension_numbers = #tpu.dot_dimension_numbers<[1], [0], [0], [1], [0, 0, 1, 1], [], []>} : vector<58x32xf32>, vector<32x128xf32>, vector<58x128xf32> -> vector<58x128xf32>
    %c0_226 = arith.constant 0 : index
    %c0_227 = arith.constant 0 : index
    %559 = vector.load %arg14[%c0_226, %c0_227] : memref<58x1xf32, #tpu.memory_space<vmem>>, vector<58x1xf32>
    %560 = vector.broadcast %559 : vector<58x1xf32> to vector<58x128xf32>
    %561 = arith.addf %558, %560 : vector<58x128xf32>
    %562 = vector.broadcast %3 : vector<1x128xf32> to vector<58x128xf32>
    %563 = arith.mulf %561, %562 : vector<58x128xf32>
    %564 = vector.extract_strided_slice %563 {offsets = [0, 0], sizes = [40, 128], strides = [1, 1]} : vector<58x128xf32> to vector<40x128xf32>
    %cst_228 = arith.constant 0.176776692 : f32
    %565 = vector.broadcast %cst_228 : f32 to vector<40x128xf32>
    %566 = arith.mulf %564, %565 : vector<40x128xf32>
    %567 = vector.extract_strided_slice %563 {offsets = [40, 0], sizes = [18, 128], strides = [1, 1]} : vector<58x128xf32> to vector<18x128xf32>
    %568 = vector.extract_strided_slice %566 {offsets = [0, 0], sizes = [10, 128], strides = [1, 1]} : vector<40x128xf32> to vector<10x128xf32>
    %cst_229 = arith.constant dense<0xFF800000> : vector<128xf32>
    %569 = vector.multi_reduction <maximumf>, %568, %cst_229 [0] : vector<10x128xf32> to vector<128xf32>
    %570 = vector.shape_cast %569 : vector<128xf32> to vector<1x128xf32>
    %571 = vector.extract_strided_slice %566 {offsets = [10, 0], sizes = [10, 128], strides = [1, 1]} : vector<40x128xf32> to vector<10x128xf32>
    %cst_230 = arith.constant dense<0xFF800000> : vector<128xf32>
    %572 = vector.multi_reduction <maximumf>, %571, %cst_230 [0] : vector<10x128xf32> to vector<128xf32>
    %573 = vector.shape_cast %572 : vector<128xf32> to vector<1x128xf32>
    %574 = vector.extract_strided_slice %566 {offsets = [20, 0], sizes = [10, 128], strides = [1, 1]} : vector<40x128xf32> to vector<10x128xf32>
    %cst_231 = arith.constant dense<0xFF800000> : vector<128xf32>
    %575 = vector.multi_reduction <maximumf>, %574, %cst_231 [0] : vector<10x128xf32> to vector<128xf32>
    %576 = vector.shape_cast %575 : vector<128xf32> to vector<1x128xf32>
    %577 = vector.extract_strided_slice %566 {offsets = [30, 0], sizes = [10, 128], strides = [1, 1]} : vector<40x128xf32> to vector<10x128xf32>
    %cst_232 = arith.constant dense<0xFF800000> : vector<128xf32>
    %578 = vector.multi_reduction <maximumf>, %577, %cst_232 [0] : vector<10x128xf32> to vector<128xf32>
    %579 = vector.shape_cast %578 : vector<128xf32> to vector<1x128xf32>
    %580 = tpu.concatenate %570, %573, %576, %579 in 0 : vector<1x128xf32>, vector<1x128xf32>, vector<1x128xf32>, vector<1x128xf32> -> vector<4x128xf32>
    %c0_233 = arith.constant 0 : index
    %c0_234 = arith.constant 0 : index
    %581 = vector.load %arg16[%c0_233, %c0_234] : memref<40x4xf32, #tpu.memory_space<vmem>>, vector<40x4xf32>
    %cst_235 = arith.constant dense<0.000000e+00> : vector<40x128xf32>
    %582 = tpu.matmul %581, %580, %cst_235 {dimension_numbers = #tpu.dot_dimension_numbers<[1], [0], [0], [1], [0, 0, 1, 1], [], []>} : vector<40x4xf32>, vector<4x128xf32>, vector<40x128xf32> -> vector<40x128xf32>
    %583 = arith.subf %566, %582 : vector<40x128xf32>
    %584 = math.exp %583 : vector<40x128xf32>
    %c0_236 = arith.constant 0 : index
    %c0_237 = arith.constant 0 : index
    %585 = vector.load %arg15[%c0_236, %c0_237] : memref<4x40xf32, #tpu.memory_space<vmem>>, vector<4x40xf32>
    %cst_238 = arith.constant dense<0.000000e+00> : vector<4x128xf32>
    %586 = tpu.matmul %585, %584, %cst_238 {dimension_numbers = #tpu.dot_dimension_numbers<[1], [0], [0], [1], [0, 0, 1, 1], [], []>} : vector<4x40xf32>, vector<40x128xf32>, vector<4x128xf32> -> vector<4x128xf32>
    %c0_239 = arith.constant 0 : index
    %c0_240 = arith.constant 0 : index
    %587 = vector.load %arg16[%c0_239, %c0_240] : memref<40x4xf32, #tpu.memory_space<vmem>>, vector<40x4xf32>
    %cst_241 = arith.constant 1.000000e+00 : f32
    %588 = vector.broadcast %cst_241 : f32 to vector<4x128xf32>
    %589 = arith.divf %588, %586 : vector<4x128xf32>
    %cst_242 = arith.constant dense<0.000000e+00> : vector<40x128xf32>
    %590 = tpu.matmul %587, %589, %cst_242 {dimension_numbers = #tpu.dot_dimension_numbers<[1], [0], [0], [1], [0, 0, 1, 1], [], []>} : vector<40x4xf32>, vector<4x128xf32>, vector<40x128xf32> -> vector<40x128xf32>
    %591 = arith.mulf %584, %590 : vector<40x128xf32>
    %592 = tpu.iota {dimensions = array<i32: 0>} : vector<40x1xi32>
    %c20_i32 = arith.constant 20 : i32
    %593 = vector.broadcast %c20_i32 : i32 to vector<40x1xi32>
    %594 = arith.cmpi slt, %592, %593 : vector<40x1xi32>
    %cst_243 = arith.constant 1.000000e-03 : f32
    %cst_244 = arith.constant 1.000000e-03 : f32
    %595 = vector.broadcast %cst_243 : f32 to vector<40x1xf32>
    %596 = vector.broadcast %cst_244 : f32 to vector<40x1xf32>
    %597 = arith.select %594, %595, %596 : vector<40x1xi1>, vector<40x1xf32>
    %c20_i32_245 = arith.constant 20 : i32
    %598 = vector.broadcast %c20_i32_245 : i32 to vector<40x1xi32>
    %599 = arith.cmpi slt, %592, %598 : vector<40x1xi32>
    %cst_246 = arith.constant 9.900000e-01 : f32
    %cst_247 = arith.constant 9.900000e-01 : f32
    %600 = vector.broadcast %cst_246 : f32 to vector<40x1xf32>
    %601 = vector.broadcast %cst_247 : f32 to vector<40x1xf32>
    %602 = arith.select %599, %600, %601 : vector<40x1xi1>, vector<40x1xf32>
    %603 = vector.broadcast %602 : vector<40x1xf32> to vector<40x128xf32>
    %604 = arith.mulf %603, %591 : vector<40x128xf32>
    %605 = vector.broadcast %597 : vector<40x1xf32> to vector<40x128xf32>
    %606 = arith.addf %605, %604 : vector<40x128xf32>
    %c0_248 = arith.constant 0 : index
    %c0_249 = arith.constant 0 : index
    %607 = vector.load %arg17[%c0_248, %c0_249] : memref<44x40xf32, #tpu.memory_space<vmem>>, vector<44x40xf32>
    %cst_250 = arith.constant dense<0.000000e+00> : vector<44x128xf32>
    %608 = tpu.matmul %607, %606, %cst_250 {dimension_numbers = #tpu.dot_dimension_numbers<[1], [0], [0], [1], [0, 0, 1, 1], [], []>} : vector<44x40xf32>, vector<40x128xf32>, vector<44x128xf32> -> vector<44x128xf32>
    %c0_251 = arith.constant 0 : index
    %c0_252 = arith.constant 0 : index
    %609 = vector.load %arg18[%c0_251, %c0_252] : memref<44x1xf32, #tpu.memory_space<vmem>>, vector<44x1xf32>
    %610 = vector.broadcast %609 : vector<44x1xf32> to vector<44x128xf32>
    %611 = arith.addf %608, %610 : vector<44x128xf32>
    %c0_253 = arith.constant 0 : index
    %c0_254 = arith.constant 0 : index
    %612 = vector.load %arg19[%c0_253, %c0_254] : memref<40x44xf32, #tpu.memory_space<vmem>>, vector<40x44xf32>
    %cst_255 = arith.constant dense<0.000000e+00> : vector<40x128xf32>
    %613 = tpu.matmul %612, %611, %cst_255 {dimension_numbers = #tpu.dot_dimension_numbers<[1], [0], [0], [1], [0, 0, 1, 1], [], []>} : vector<40x44xf32>, vector<44x128xf32>, vector<40x128xf32> -> vector<40x128xf32>
    %614 = vector.extract_strided_slice %611 {offsets = [0, 0], sizes = [22, 128], strides = [1, 1]} : vector<44x128xf32> to vector<22x128xf32>
    %615 = vector.extract_strided_slice %611 {offsets = [22, 0], sizes = [22, 128], strides = [1, 1]} : vector<44x128xf32> to vector<22x128xf32>
    %616 = vector.extract_strided_slice %613 {offsets = [0, 0], sizes = [20, 128], strides = [1, 1]} : vector<40x128xf32> to vector<20x128xf32>
    %617 = vector.extract_strided_slice %613 {offsets = [20, 0], sizes = [20, 128], strides = [1, 1]} : vector<40x128xf32> to vector<20x128xf32>
    %618 = arith.divf %617, %616 : vector<20x128xf32>
    %c0_256 = arith.constant 0 : index
    %c0_257 = arith.constant 0 : index
    %619 = vector.load %arg20[%c0_256, %c0_257] : memref<20x18xf32, #tpu.memory_space<vmem>>, vector<20x18xf32>
    %cst_258 = arith.constant dense<0.000000e+00> : vector<20x128xf32>
    %620 = tpu.matmul %619, %567, %cst_258 {dimension_numbers = #tpu.dot_dimension_numbers<[1], [0], [0], [1], [0, 0, 1, 1], [], []>} : vector<20x18xf32>, vector<18x128xf32>, vector<20x128xf32> -> vector<20x128xf32>
    %c0_259 = arith.constant 0 : index
    %c0_260 = arith.constant 0 : index
    %621 = vector.load %arg21[%c0_259, %c0_260] : memref<20x1xf32, #tpu.memory_space<vmem>>, vector<20x1xf32>
    %622 = vector.broadcast %621 : vector<20x1xf32> to vector<20x128xf32>
    %623 = arith.addf %620, %622 : vector<20x128xf32>
    %cst_261 = arith.constant 2.000000e+01 : f32
    %624 = vector.broadcast %cst_261 : f32 to vector<20x128xf32>
    %625 = arith.cmpf ogt, %623, %624 : vector<20x128xf32>
    %cst_262 = arith.constant 2.000000e+01 : f32
    %626 = vector.broadcast %cst_262 : f32 to vector<20x128xf32>
    %627 = arith.minimumf %623, %626 : vector<20x128xf32>
    %628 = math.exp %627 : vector<20x128xf32>
    %cst_263 = arith.constant 1.000000e+00 : f32
    %629 = vector.broadcast %cst_263 : f32 to vector<20x128xf32>
    %630 = arith.addf %629, %628 : vector<20x128xf32>
    %631 = math.log %630 : vector<20x128xf32>
    %632 = arith.select %625, %623, %631 : vector<20x128xi1>, vector<20x128xf32>
    %cst_264 = arith.constant 1.000000e-03 : f32
    %633 = vector.broadcast %cst_264 : f32 to vector<20x128xf32>
    %634 = arith.addf %633, %632 : vector<20x128xf32>
    %c0_265 = arith.constant 0 : index
    %c0_266 = arith.constant 0 : index
    %635 = vector.load %arg22[%c0_265, %c0_266] : memref<20x18xf32, #tpu.memory_space<vmem>>, vector<20x18xf32>
    %cst_267 = arith.constant dense<0.000000e+00> : vector<20x128xf32>
    %636 = tpu.matmul %635, %567, %cst_267 {dimension_numbers = #tpu.dot_dimension_numbers<[1], [0], [0], [1], [0, 0, 1, 1], [], []>} : vector<20x18xf32>, vector<18x128xf32>, vector<20x128xf32> -> vector<20x128xf32>
    %c0_268 = arith.constant 0 : index
    %c0_269 = arith.constant 0 : index
    %637 = vector.load %arg23[%c0_268, %c0_269] : memref<20x1xf32, #tpu.memory_space<vmem>>, vector<20x1xf32>
    %638 = vector.broadcast %637 : vector<20x1xf32> to vector<20x128xf32>
    %639 = arith.addf %636, %638 : vector<20x128xf32>
    %cst_270 = arith.constant 2.000000e+01 : f32
    %640 = vector.broadcast %cst_270 : f32 to vector<20x128xf32>
    %641 = arith.cmpf ogt, %639, %640 : vector<20x128xf32>
    %cst_271 = arith.constant 2.000000e+01 : f32
    %642 = vector.broadcast %cst_271 : f32 to vector<20x128xf32>
    %643 = arith.minimumf %639, %642 : vector<20x128xf32>
    %644 = math.exp %643 : vector<20x128xf32>
    %cst_272 = arith.constant 1.000000e+00 : f32
    %645 = vector.broadcast %cst_272 : f32 to vector<20x128xf32>
    %646 = arith.addf %645, %644 : vector<20x128xf32>
    %647 = math.log %646 : vector<20x128xf32>
    %648 = arith.select %641, %639, %647 : vector<20x128xi1>, vector<20x128xf32>
    %cst_273 = arith.constant 1.000000e-03 : f32
    %649 = vector.broadcast %cst_273 : f32 to vector<20x128xf32>
    %650 = arith.addf %649, %648 : vector<20x128xf32>
    %cst_274 = arith.constant -5.000000e+00 : f32
    %651 = vector.broadcast %cst_274 : f32 to vector<2x128xf32>
    %652 = arith.cmpf oge, %5, %651 : vector<2x128xf32>
    %cst_275 = arith.constant 5.000000e+00 : f32
    %653 = vector.broadcast %cst_275 : f32 to vector<2x128xf32>
    %654 = arith.cmpf ole, %5, %653 : vector<2x128xf32>
    %655 = arith.andi %652, %654 : vector<2x128xi1>
    %cst_276 = arith.constant -5.000000e+00 : f32
    %cst_277 = arith.constant 5.000000e+00 : f32
    %656 = vector.broadcast %cst_276 : f32 to vector<2x128xf32>
    %657 = arith.maximumf %656, %5 : vector<2x128xf32>
    %658 = vector.broadcast %cst_277 : f32 to vector<2x128xf32>
    %659 = arith.minimumf %658, %657 : vector<2x128xf32>
    %c0_278 = arith.constant 0 : index
    %c0_279 = arith.constant 0 : index
    %660 = vector.load %arg24[%c0_278, %c0_279] : memref<22x2xf32, #tpu.memory_space<vmem>>, vector<22x2xf32>
    %cst_280 = arith.constant dense<0.000000e+00> : vector<22x128xf32>
    %661 = tpu.matmul %660, %659, %cst_280 {dimension_numbers = #tpu.dot_dimension_numbers<[1], [0], [0], [1], [0, 0, 1, 1], [], []>} : vector<22x2xf32>, vector<2x128xf32>, vector<22x128xf32> -> vector<22x128xf32>
    %c0_281 = arith.constant 0 : index
    %c0_282 = arith.constant 0 : index
    %662 = vector.load %arg25[%c0_281, %c0_282] : memref<22x1xf32, #tpu.memory_space<vmem>>, vector<22x1xf32>
    %663 = vector.broadcast %662 : vector<22x1xf32> to vector<22x128xf32>
    %664 = arith.addf %614, %663 : vector<22x128xf32>
    %665 = arith.cmpf oge, %661, %664 : vector<22x128xf32>
    %666 = arith.extui %665 : vector<22x128xi1> to vector<22x128xi32>
    %667 = arith.sitofp %666 : vector<22x128xi32> to vector<22x128xf32>
    %c0_283 = arith.constant 0 : index
    %c0_284 = arith.constant 0 : index
    %668 = vector.load %arg26[%c0_283, %c0_284] : memref<20x22xf32, #tpu.memory_space<vmem>>, vector<20x22xf32>
    %cst_285 = arith.constant dense<0.000000e+00> : vector<20x128xf32>
    %669 = tpu.matmul %668, %667, %cst_285 {dimension_numbers = #tpu.dot_dimension_numbers<[1], [0], [0], [1], [0, 0, 1, 1], [], []>} : vector<20x22xf32>, vector<22x128xf32>, vector<20x128xf32> -> vector<20x128xf32>
    %c0_286 = arith.constant 0 : index
    %c0_287 = arith.constant 0 : index
    %670 = vector.load %arg27[%c0_286, %c0_287] : memref<20x22xf32, #tpu.memory_space<vmem>>, vector<20x22xf32>
    %cst_288 = arith.constant dense<0.000000e+00> : vector<20x128xf32>
    %671 = tpu.matmul %670, %614, %cst_288 {dimension_numbers = #tpu.dot_dimension_numbers<[1], [0], [0], [1], [0, 0, 1, 1], [], []>} : vector<20x22xf32>, vector<22x128xf32>, vector<20x128xf32> -> vector<20x128xf32>
    %c0_289 = arith.constant 0 : index
    %c0_290 = arith.constant 0 : index
    %672 = vector.load %arg27[%c0_289, %c0_290] : memref<20x22xf32, #tpu.memory_space<vmem>>, vector<20x22xf32>
    %cst_291 = arith.constant dense<0.000000e+00> : vector<20x128xf32>
    %673 = tpu.matmul %672, %615, %cst_291 {dimension_numbers = #tpu.dot_dimension_numbers<[1], [0], [0], [1], [0, 0, 1, 1], [], []>} : vector<20x22xf32>, vector<22x128xf32>, vector<20x128xf32> -> vector<20x128xf32>
    %c0_292 = arith.constant 0 : index
    %c0_293 = arith.constant 0 : index
    %674 = vector.load %arg28[%c0_292, %c0_293] : memref<2x20xf32, #tpu.memory_space<vmem>>, vector<2x20xf32>
    %675 = arith.mulf %671, %669 : vector<20x128xf32>
    %cst_294 = arith.constant dense<0.000000e+00> : vector<2x128xf32>
    %676 = tpu.matmul %674, %675, %cst_294 {dimension_numbers = #tpu.dot_dimension_numbers<[1], [0], [0], [1], [0, 0, 1, 1], [], []>} : vector<2x20xf32>, vector<20x128xf32>, vector<2x128xf32> -> vector<2x128xf32>
    %677 = arith.mulf %616, %669 : vector<20x128xf32>
    %cst_295 = arith.constant dense<0.000000e+00> : vector<2x128xf32>
    %678 = tpu.matmul %674, %677, %cst_295 {dimension_numbers = #tpu.dot_dimension_numbers<[1], [0], [0], [1], [0, 0, 1, 1], [], []>} : vector<2x20xf32>, vector<20x128xf32>, vector<2x128xf32> -> vector<2x128xf32>
    %679 = arith.mulf %673, %669 : vector<20x128xf32>
    %cst_296 = arith.constant dense<0.000000e+00> : vector<2x128xf32>
    %680 = tpu.matmul %674, %679, %cst_296 {dimension_numbers = #tpu.dot_dimension_numbers<[1], [0], [0], [1], [0, 0, 1, 1], [], []>} : vector<2x20xf32>, vector<20x128xf32>, vector<2x128xf32> -> vector<2x128xf32>
    %681 = arith.mulf %617, %669 : vector<20x128xf32>
    %cst_297 = arith.constant dense<0.000000e+00> : vector<2x128xf32>
    %682 = tpu.matmul %674, %681, %cst_297 {dimension_numbers = #tpu.dot_dimension_numbers<[1], [0], [0], [1], [0, 0, 1, 1], [], []>} : vector<2x20xf32>, vector<20x128xf32>, vector<2x128xf32> -> vector<2x128xf32>
    %683 = arith.mulf %618, %669 : vector<20x128xf32>
    %cst_298 = arith.constant dense<0.000000e+00> : vector<2x128xf32>
    %684 = tpu.matmul %674, %683, %cst_298 {dimension_numbers = #tpu.dot_dimension_numbers<[1], [0], [0], [1], [0, 0, 1, 1], [], []>} : vector<2x20xf32>, vector<20x128xf32>, vector<2x128xf32> -> vector<2x128xf32>
    %685 = arith.mulf %634, %669 : vector<20x128xf32>
    %cst_299 = arith.constant dense<0.000000e+00> : vector<2x128xf32>
    %686 = tpu.matmul %674, %685, %cst_299 {dimension_numbers = #tpu.dot_dimension_numbers<[1], [0], [0], [1], [0, 0, 1, 1], [], []>} : vector<2x20xf32>, vector<20x128xf32>, vector<2x128xf32> -> vector<2x128xf32>
    %687 = arith.mulf %650, %669 : vector<20x128xf32>
    %cst_300 = arith.constant dense<0.000000e+00> : vector<2x128xf32>
    %688 = tpu.matmul %674, %687, %cst_300 {dimension_numbers = #tpu.dot_dimension_numbers<[1], [0], [0], [1], [0, 0, 1, 1], [], []>} : vector<2x20xf32>, vector<20x128xf32>, vector<2x128xf32> -> vector<2x128xf32>
    %689 = arith.subf %659, %676 : vector<2x128xf32>
    %690 = arith.divf %689, %678 : vector<2x128xf32>
    %cst_301 = arith.constant 1.000000e+00 : f32
    %691 = vector.broadcast %cst_301 : f32 to vector<2x128xf32>
    %692 = arith.subf %691, %690 : vector<2x128xf32>
    %693 = arith.mulf %690, %692 : vector<2x128xf32>
    %694 = arith.addf %686, %688 : vector<2x128xf32>
    %cst_302 = arith.constant 2.000000e+00 : f32
    %695 = vector.broadcast %cst_302 : f32 to vector<2x128xf32>
    %696 = arith.mulf %695, %684 : vector<2x128xf32>
    %697 = arith.subf %694, %696 : vector<2x128xf32>
    %698 = arith.mulf %684, %690 : vector<2x128xf32>
    %699 = arith.mulf %698, %690 : vector<2x128xf32>
    %700 = arith.mulf %686, %693 : vector<2x128xf32>
    %701 = arith.addf %699, %700 : vector<2x128xf32>
    %702 = arith.mulf %682, %701 : vector<2x128xf32>
    %703 = arith.mulf %697, %693 : vector<2x128xf32>
    %704 = arith.addf %684, %703 : vector<2x128xf32>
    %705 = arith.divf %702, %704 : vector<2x128xf32>
    %706 = arith.addf %680, %705 : vector<2x128xf32>
    %707 = arith.mulf %684, %684 : vector<2x128xf32>
    %708 = arith.mulf %688, %690 : vector<2x128xf32>
    %709 = arith.mulf %708, %690 : vector<2x128xf32>
    %cst_303 = arith.constant 2.000000e+00 : f32
    %710 = vector.broadcast %cst_303 : f32 to vector<2x128xf32>
    %711 = arith.mulf %710, %684 : vector<2x128xf32>
    %712 = arith.mulf %711, %693 : vector<2x128xf32>
    %713 = arith.addf %709, %712 : vector<2x128xf32>
    %cst_304 = arith.constant 1.000000e+00 : f32
    %714 = vector.broadcast %cst_304 : f32 to vector<2x128xf32>
    %715 = arith.subf %714, %690 : vector<2x128xf32>
    %716 = arith.mulf %686, %715 : vector<2x128xf32>
    %cst_305 = arith.constant 1.000000e+00 : f32
    %717 = vector.broadcast %cst_305 : f32 to vector<2x128xf32>
    %718 = arith.subf %717, %690 : vector<2x128xf32>
    %719 = arith.mulf %716, %718 : vector<2x128xf32>
    %720 = arith.addf %713, %719 : vector<2x128xf32>
    %721 = arith.mulf %707, %720 : vector<2x128xf32>
    %722 = math.log %721 : vector<2x128xf32>
    %723 = math.log %704 : vector<2x128xf32>
    %cst_306 = arith.constant 2.000000e+00 : f32
    %724 = vector.broadcast %cst_306 : f32 to vector<2x128xf32>
    %725 = arith.mulf %724, %723 : vector<2x128xf32>
    %726 = arith.subf %722, %725 : vector<2x128xf32>
    %727 = arith.select %655, %706, %5 : vector<2x128xi1>, vector<2x128xf32>
    %cst_307 = arith.constant 0.000000e+00 : f32
    %728 = vector.broadcast %cst_307 : f32 to vector<2x128xf32>
    %729 = arith.select %655, %726, %728 : vector<2x128xi1>, vector<2x128xf32>
    %730 = tpu.concatenate %4, %727 in 0 : vector<2x128xf32>, vector<2x128xf32> -> vector<4x128xf32>
    %731 = vector.broadcast %3 : vector<1x128xf32> to vector<4x128xf32>
    %732 = arith.mulf %730, %731 : vector<4x128xf32>
    %c0_308 = arith.constant 0 : index
    %c0_309 = arith.constant 0 : index
    %c0_310 = arith.constant 0 : index
    %733 = vector.load %arg29[%c0_308, %c0_309, %c0_310] : memref<1x4x128xf32, #tpu.memory_space<vmem>>, vector<1x4x128xf32>
    %734 = vector.shape_cast %733 : vector<1x4x128xf32> to vector<4x128xf32>
    %735 = vector.shape_cast %732 : vector<4x128xf32> to vector<1x4x128xf32>
    tpu.vector_store %arg29[%c0_308, %c0_309, %c0_310], %735 {strides = array<i32>} : memref<1x4x128xf32, #tpu.memory_space<vmem>>, vector<1x4x128xf32>,
    %736 = vector.broadcast %3 : vector<1x128xf32> to vector<2x128xf32>
    %737 = arith.mulf %729, %736 : vector<2x128xf32>
    %cst_311 = arith.constant dense<0.000000e+00> : vector<2xf32>
    %738 = vector.multi_reduction <add>, %737, %cst_311 [1] : vector<2x128xf32> to vector<2xf32>
    %739 = vector.shape_cast %738 : vector<2xf32> to vector<2x1xf32>
    %cst_312 = arith.constant dense<0.000000e+00> : vector<1xf32>
    %740 = vector.multi_reduction <add>, %739, %cst_312 [0] : vector<2x1xf32> to vector<1xf32>
    %741 = vector.shape_cast %740 : vector<1xf32> to vector<1x1xf32>
    %742 = vector.shape_cast %741 : vector<1x1xf32> to vector<1x1x1xf32>
    %c0_313 = arith.constant 0 : index
    %c0_314 = arith.constant 0 : index
    %c0_315 = arith.constant 0 : index
    %743 = vector.load %arg30[%c0_313, %c0_314, %c0_315] : memref<1x1x1xf32, #tpu.memory_space<vmem>>, vector<1x1x1xf32>
    tpu.vector_store %arg30[%c0_313, %c0_314, %c0_315], %742 {strides = array<i32>} : memref<1x1x1xf32, #tpu.memory_space<vmem>>, vector<1x1x1xf32>,
    return
  }
  func.func @transform_0(%arg0: i32) -> (i32, i32, i32) {
    %c0_i32 = arith.constant 0 : i32
    %c0_i32_0 = arith.constant 0 : i32
    %c0_i32_1 = arith.constant 0 : i32
    return %arg0, %c0_i32, %c0_i32_0 : i32, i32, i32
  }
  func.func @transform_1(%arg0: i32) -> (i32, i32, i32) {
    %c0_i32 = arith.constant 0 : i32
    %c0_i32_0 = arith.constant 0 : i32
    %c0_i32_1 = arith.constant 0 : i32
    return %arg0, %c0_i32, %c0_i32_0 : i32, i32, i32
  }
  func.func @transform_2(%arg0: i32) -> (i32, i32) {
    %c0_i32 = arith.constant 0 : i32
    %c0_i32_0 = arith.constant 0 : i32
    %c0_i32_1 = arith.constant 0 : i32
    return %c0_i32, %c0_i32_0 : i32, i32
  }
  func.func @transform_3(%arg0: i32) -> (i32, i32) {
    %c0_i32 = arith.constant 0 : i32
    %c0_i32_0 = arith.constant 0 : i32
    %c0_i32_1 = arith.constant 0 : i32
    return %c0_i32, %c0_i32_0 : i32, i32
  }
  func.func @transform_4(%arg0: i32) -> (i32, i32, i32) {
    %c0_i32 = arith.constant 0 : i32
    %c0_i32_0 = arith.constant 0 : i32
    %c0_i32_1 = arith.constant 0 : i32
    %c0_i32_2 = arith.constant 0 : i32
    return %c0_i32, %c0_i32_0, %c0_i32_1 : i32, i32, i32
  }
  func.func @transform_5(%arg0: i32) -> (i32, i32, i32) {
    %c0_i32 = arith.constant 0 : i32
    %c0_i32_0 = arith.constant 0 : i32
    %c0_i32_1 = arith.constant 0 : i32
    %c0_i32_2 = arith.constant 0 : i32
    return %c0_i32, %c0_i32_0, %c0_i32_1 : i32, i32, i32
  }
  func.func @transform_6(%arg0: i32) -> (i32, i32, i32) {
    %c0_i32 = arith.constant 0 : i32
    %c0_i32_0 = arith.constant 0 : i32
    %c0_i32_1 = arith.constant 0 : i32
    %c0_i32_2 = arith.constant 0 : i32
    return %c0_i32, %c0_i32_0, %c0_i32_1 : i32, i32, i32
  }
  func.func @transform_7(%arg0: i32) -> (i32, i32, i32) {
    %c0_i32 = arith.constant 0 : i32
    %c0_i32_0 = arith.constant 0 : i32
    %c0_i32_1 = arith.constant 0 : i32
    %c0_i32_2 = arith.constant 0 : i32
    return %c0_i32, %c0_i32_0, %c0_i32_1 : i32, i32, i32
  }
  func.func @transform_8(%arg0: i32) -> (i32, i32, i32) {
    %c0_i32 = arith.constant 0 : i32
    %c0_i32_0 = arith.constant 0 : i32
    %c0_i32_1 = arith.constant 0 : i32
    %c0_i32_2 = arith.constant 0 : i32
    return %c0_i32, %c0_i32_0, %c0_i32_1 : i32, i32, i32
  }
  func.func @transform_9(%arg0: i32) -> (i32, i32, i32) {
    %c0_i32 = arith.constant 0 : i32
    %c0_i32_0 = arith.constant 0 : i32
    %c0_i32_1 = arith.constant 0 : i32
    %c0_i32_2 = arith.constant 0 : i32
    return %c0_i32, %c0_i32_0, %c0_i32_1 : i32, i32, i32
  }
  func.func @transform_10(%arg0: i32) -> (i32, i32, i32) {
    %c0_i32 = arith.constant 0 : i32
    %c0_i32_0 = arith.constant 0 : i32
    %c0_i32_1 = arith.constant 0 : i32
    %c0_i32_2 = arith.constant 0 : i32
    return %c0_i32, %c0_i32_0, %c0_i32_1 : i32, i32, i32
  }
  func.func @transform_11(%arg0: i32) -> (i32, i32, i32) {
    %c0_i32 = arith.constant 0 : i32
    %c0_i32_0 = arith.constant 0 : i32
    %c0_i32_1 = arith.constant 0 : i32
    %c0_i32_2 = arith.constant 0 : i32
    return %c0_i32, %c0_i32_0, %c0_i32_1 : i32, i32, i32
  }
  func.func @transform_12(%arg0: i32) -> (i32, i32) {
    %c0_i32 = arith.constant 0 : i32
    %c0_i32_0 = arith.constant 0 : i32
    %c0_i32_1 = arith.constant 0 : i32
    return %c0_i32, %c0_i32_0 : i32, i32
  }
  func.func @transform_13(%arg0: i32) -> (i32, i32) {
    %c0_i32 = arith.constant 0 : i32
    %c0_i32_0 = arith.constant 0 : i32
    %c0_i32_1 = arith.constant 0 : i32
    return %c0_i32, %c0_i32_0 : i32, i32
  }
  func.func @transform_14(%arg0: i32) -> (i32, i32) {
    %c0_i32 = arith.constant 0 : i32
    %c0_i32_0 = arith.constant 0 : i32
    %c0_i32_1 = arith.constant 0 : i32
    return %c0_i32, %c0_i32_0 : i32, i32
  }
  func.func @transform_15(%arg0: i32) -> (i32, i32) {
    %c0_i32 = arith.constant 0 : i32
    %c0_i32_0 = arith.constant 0 : i32
    %c0_i32_1 = arith.constant 0 : i32
    return %c0_i32, %c0_i32_0 : i32, i32
  }
  func.func @transform_16(%arg0: i32) -> (i32, i32) {
    %c0_i32 = arith.constant 0 : i32
    %c0_i32_0 = arith.constant 0 : i32
    %c0_i32_1 = arith.constant 0 : i32
    return %c0_i32, %c0_i32_0 : i32, i32
  }
  func.func @transform_17(%arg0: i32) -> (i32, i32) {
    %c0_i32 = arith.constant 0 : i32
    %c0_i32_0 = arith.constant 0 : i32
    %c0_i32_1 = arith.constant 0 : i32
    return %c0_i32, %c0_i32_0 : i32, i32
  }
  func.func @transform_18(%arg0: i32) -> (i32, i32) {
    %c0_i32 = arith.constant 0 : i32
    %c0_i32_0 = arith.constant 0 : i32
    %c0_i32_1 = arith.constant 0 : i32
    return %c0_i32, %c0_i32_0 : i32, i32
  }
  func.func @transform_19(%arg0: i32) -> (i32, i32) {
    %c0_i32 = arith.constant 0 : i32
    %c0_i32_0 = arith.constant 0 : i32
    %c0_i32_1 = arith.constant 0 : i32
    return %c0_i32, %c0_i32_0 : i32, i32
  }
  func.func @transform_20(%arg0: i32) -> (i32, i32) {
    %c0_i32 = arith.constant 0 : i32
    %c0_i32_0 = arith.constant 0 : i32
    %c0_i32_1 = arith.constant 0 : i32
    return %c0_i32, %c0_i32_0 : i32, i32
  }
  func.func @transform_21(%arg0: i32) -> (i32, i32) {
    %c0_i32 = arith.constant 0 : i32
    %c0_i32_0 = arith.constant 0 : i32
    %c0_i32_1 = arith.constant 0 : i32
    return %c0_i32, %c0_i32_0 : i32, i32
  }
  func.func @transform_22(%arg0: i32) -> (i32, i32) {
    %c0_i32 = arith.constant 0 : i32
    %c0_i32_0 = arith.constant 0 : i32
    %c0_i32_1 = arith.constant 0 : i32
    return %c0_i32, %c0_i32_0 : i32, i32
  }
  func.func @transform_23(%arg0: i32) -> (i32, i32) {
    %c0_i32 = arith.constant 0 : i32
    %c0_i32_0 = arith.constant 0 : i32
    %c0_i32_1 = arith.constant 0 : i32
    return %c0_i32, %c0_i32_0 : i32, i32
  }
  func.func @transform_24(%arg0: i32) -> (i32, i32) {
    %c0_i32 = arith.constant 0 : i32
    %c0_i32_0 = arith.constant 0 : i32
    %c0_i32_1 = arith.constant 0 : i32
    return %c0_i32, %c0_i32_0 : i32, i32
  }
  func.func @transform_25(%arg0: i32) -> (i32, i32) {
    %c0_i32 = arith.constant 0 : i32
    %c0_i32_0 = arith.constant 0 : i32
    %c0_i32_1 = arith.constant 0 : i32
    return %c0_i32, %c0_i32_0 : i32, i32
  }
  func.func @transform_26(%arg0: i32) -> (i32, i32) {
    %c0_i32 = arith.constant 0 : i32
    %c0_i32_0 = arith.constant 0 : i32
    %c0_i32_1 = arith.constant 0 : i32
    return %c0_i32, %c0_i32_0 : i32, i32
  }
  func.func @transform_27(%arg0: i32) -> (i32, i32) {
    %c0_i32 = arith.constant 0 : i32
    %c0_i32_0 = arith.constant 0 : i32
    %c0_i32_1 = arith.constant 0 : i32
    return %c0_i32, %c0_i32_0 : i32, i32
  }
  func.func @transform_28(%arg0: i32) -> (i32, i32, i32) {
    %c0_i32 = arith.constant 0 : i32
    %c0_i32_0 = arith.constant 0 : i32
    %c0_i32_1 = arith.constant 0 : i32
    return %arg0, %c0_i32, %c0_i32_0 : i32, i32, i32
  }
  func.func @transform_29(%arg0: i32) -> (i32, i32, i32) {
    %c0_i32 = arith.constant 0 : i32
    %c0_i32_0 = arith.constant 0 : i32
    %c0_i32_1 = arith.constant 0 : i32
    return %arg0, %c0_i32, %c0_i32_0 : i32, i32, i32
  }
}

</mosaic_0001>

<llo_original>
// kernel: tpu_custom_call.1
$region0: #{tpu_custom_call.1}
  #allocation0 [shape = 'u32[]', space=smem, size = 0x4, offset = 0x4, fixed_abs, tag = 'smem constant byte address 0x4 - core index']
  #allocation1 [shape = 'u32[72,128]{1,0:T(1,128)}', space=vmem, size = 0x9000, scoped, tag = 'internal scratch']
  %s0 = inlined_call_operand.smem [shape: u32[30], index: -1, kind: input, shape index: {}]
  %s1 = sld [smem:[%s0]]
  %s2 = scalar_lea.smem %s0, 1
  %s3 = sld [smem:[%s2]]
  %s4 = scalar_lea.smem %s0, 2
  %s5 = sld [smem:[%s4]]
  %s6 = scalar_lea.smem %s0, 3
  %s7 = sld [smem:[%s6]]
  %s8 = scalar_lea.smem %s0, 4
  %s9 = sld [smem:[%s8]]
  %s10 = scalar_lea.smem %s0, 5
  %s11 = sld [smem:[%s10]]
  %s12 = scalar_lea.smem %s0, 6
  %s13 = sld [smem:[%s12]]
  %s14 = scalar_lea.smem %s0, 7
  %s15 = sld [smem:[%s14]]
  %s16 = scalar_lea.smem %s0, 8
  %s17 = sld [smem:[%s16]]
  %s18 = scalar_lea.smem %s0, 9
  %s19 = sld [smem:[%s18]]
  %s20 = scalar_lea.smem %s0, 10
  %s21 = sld [smem:[%s20]]
  %s22 = scalar_lea.smem %s0, 11
  %s23 = sld [smem:[%s22]]
  %s24 = scalar_lea.smem %s0, 12
  %s25 = sld [smem:[%s24]]
  %s26 = scalar_lea.smem %s0, 13
  %s27 = sld [smem:[%s26]]
  %s28 = scalar_lea.smem %s0, 14
  %s29 = sld [smem:[%s28]]
  %s30 = scalar_lea.smem %s0, 15
  %s31 = sld [smem:[%s30]]
  %s32 = scalar_lea.smem %s0, 16
  %s33 = sld [smem:[%s32]]
  %s34 = scalar_lea.smem %s0, 17
  %s35 = sld [smem:[%s34]]
  %s36 = scalar_lea.smem %s0, 18
  %s37 = sld [smem:[%s36]]
  %s38 = scalar_lea.smem %s0, 19
  %s39 = sld [smem:[%s38]]
  %s40 = scalar_lea.smem %s0, 20
  %s41 = sld [smem:[%s40]]
  %s42 = scalar_lea.smem %s0, 21
  %s43 = sld [smem:[%s42]]
  %s44 = scalar_lea.smem %s0, 22
  %s45 = sld [smem:[%s44]]
  %s46 = scalar_lea.smem %s0, 23
  %s47 = sld [smem:[%s46]]
  %s48 = scalar_lea.smem %s0, 24
  %s49 = sld [smem:[%s48]]
  %s50 = scalar_lea.smem %s0, 25
  %s51 = sld [smem:[%s50]]
  %s52 = scalar_lea.smem %s0, 26
  %s53 = sld [smem:[%s52]]
  %s54 = scalar_lea.smem %s0, 27
  %s55 = sld [smem:[%s54]]
  %s56 = scalar_lea.smem %s0, 28
  %s57 = sld [smem:[%s56]]
  %s58 = scalar_lea.smem %s0, 29
  %s59 = sld [smem:[%s58]]
  %60 = xla_tuple %s57, %s59
  %s61 = sld [smem:[#allocation0]]
  $region153: #{tpu_custom_call.1} parent=0
    _
  %s63 = ssub.s32 1, %s61
  %s64 = scalar_select 0, %s63, %s61
  $region1: #{tpu_custom_call.1} parent=0
    #allocation2 [shape = 'u8[4096]{0}', space=vmem, size = 0x1000, scoped, tag = 'output window, operand 0']
    #allocation3 [shape = 's32[2]{0}', space=sflag, size = 0x8, scoped, tag = 'scoped memory for tpu_custom_call.1']
    %65 = vsyncpa [#allocation3], 0
    %s66 = scalar_lea.sflag [#allocation3], 1
    %67 = vsyncpa %s66, 0
    loop: start=0, step=1, limit=4
    $region2: #{tpu_custom_call.1} parent=1 // loop_pre_header
      _
    $region3: #{tpu_custom_call.1} parent=1 // loop_header
      %s69 = sphi 0, %s73
      %p70 = scmp.ge.s32.totalorder %s69, 4
      %s79 = sphi 0, %s81
      %s82 = sphi 0, %s79
      %s83 = sphi 0, %s82
      %s99 = sphi 0, %s83
      %s105 = sphi 0, %s107
      %s108 = sphi 0, %s105
      %s109 = sphi 0, %s108
      %s125 = sphi 0, %s109
      %s129 = sphi 0, %s129
      %s131 = sphi 0, %s129
      %s132 = sphi 0, %s131
      %s146 = sphi 0, %s132
      %s150 = sphi 0, %s150
      %s152 = sphi 0, %s150
      %s153 = sphi 0, %s152
      %s167 = sphi 0, %s153
      %s171 = sphi 0, %s171
      %s173 = sphi 0, %s171
      %s174 = sphi 0, %s173
      %s188 = sphi 0, %s174
      %s192 = sphi 0, %s192
      %s194 = sphi 0, %s192
      %s195 = sphi 0, %s194
      %s209 = sphi 0, %s195
      %s213 = sphi 0, %s213
      %s215 = sphi 0, %s213
      %s216 = sphi 0, %s215
      %s230 = sphi 0, %s216
      %s234 = sphi 0, %s234
      %s236 = sphi 0, %s234
      %s237 = sphi 0, %s236
      %s251 = sphi 0, %s237
      %s255 = sphi 0, %s255
      %s257 = sphi 0, %s255
      %s258 = sphi 0, %s257
      %s272 = sphi 0, %s258
      %s276 = sphi 0, %s276
      %s278 = sphi 0, %s276
      %s279 = sphi 0, %s278
      %s293 = sphi 0, %s279
      %s297 = sphi 0, %s297
      %s299 = sphi 0, %s297
      %s300 = sphi 0, %s299
      %s314 = sphi 0, %s300
      %s318 = sphi 0, %s318
      %s320 = sphi 0, %s318
      %s321 = sphi 0, %s320
      %s335 = sphi 0, %s321
      %s339 = sphi 0, %s339
      %s341 = sphi 0, %s339
      %s342 = sphi 0, %s341
      %s356 = sphi 0, %s342
      %s360 = sphi 0, %s360
      %s362 = sphi 0, %s360
      %s363 = sphi 0, %s362
      %s377 = sphi 0, %s363
      %s381 = sphi 0, %s381
      %s383 = sphi 0, %s381
      %s384 = sphi 0, %s383
      %s398 = sphi 0, %s384
      %s402 = sphi 0, %s402
      %s404 = sphi 0, %s402
      %s405 = sphi 0, %s404
      %s419 = sphi 0, %s405
      %s423 = sphi 0, %s423
      %s425 = sphi 0, %s423
      %s426 = sphi 0, %s425
      %s440 = sphi 0, %s426
      %s444 = sphi 0, %s444
      %s446 = sphi 0, %s444
      %s447 = sphi 0, %s446
      %s461 = sphi 0, %s447
      %s465 = sphi 0, %s465
      %s467 = sphi 0, %s465
      %s468 = sphi 0, %s467
      %s482 = sphi 0, %s468
      %s486 = sphi 0, %s486
      %s488 = sphi 0, %s486
      %s489 = sphi 0, %s488
      %s503 = sphi 0, %s489
      %s507 = sphi 0, %s507
      %s509 = sphi 0, %s507
      %s510 = sphi 0, %s509
      %s524 = sphi 0, %s510
      %s528 = sphi 0, %s528
      %s530 = sphi 0, %s528
      %s531 = sphi 0, %s530
      %s545 = sphi 0, %s531
      %s549 = sphi 0, %s549
      %s551 = sphi 0, %s549
      %s552 = sphi 0, %s551
      %s566 = sphi 0, %s552
      %s570 = sphi 0, %s570
      %s572 = sphi 0, %s570
      %s573 = sphi 0, %s572
      %s587 = sphi 0, %s573
      %s591 = sphi 0, %s591
      %s593 = sphi 0, %s591
      %s594 = sphi 0, %s593
      %s608 = sphi 0, %s594
      %s612 = sphi 0, %s612
      %s614 = sphi 0, %s612
      %s615 = sphi 0, %s614
      %s629 = sphi 0, %s615
      %s633 = sphi 0, %s633
      %s635 = sphi 0, %s633
      %s636 = sphi 0, %s635
      %s650 = sphi 0, %s636
      %s654 = sphi 0, %s654
      %s656 = sphi 0, %s654
      %s657 = sphi 0, %s656
      %s671 = sphi 0, %s657
      %s677 = sphi 0, %s679
      %s680 = sphi 0, %s677
      %s681 = sphi 0, %s680
      %s697 = sphi 0, %s681
      %s703 = sphi 0, %s705
      %s706 = sphi 0, %s703
      %s707 = sphi 0, %s706
      %s723 = sphi 0, %s707
    $region4: #{tpu_custom_call.1} parent=1 // loop_header_branch
      %72 = sbr.rel (%p70) target = $region8
    $region5: #{tpu_custom_call.1} parent=1 // loop_body
      %s74 = ssub.s32 %s69, 1
      %s75 = ssub.s32 %s69, 2
      %s76 = sadd.s32 %s69, 1
      %s77 = ssub.s32 %s69, %s76
      %p78 = scmp.eq.s32.totalorder %s77, 0
      %s80 = sadd.s32 %s79, 1
      %s81 = scalar_select %p78, %s79, %s80
      %p84 = pneg %p78
      %p85 = scmp.eq.s32.totalorder %s69, 1
      %p86 = por %p84, %p85
      %p87 = scmp.ne.s32.totalorder %s79, %s82
      %p88 = scmp.eq.s32.totalorder %s69, 0
      %p89 = por %p87, %p88
      %p90 = scmp.ne.s32.totalorder %s79, %s82
      %p91 = scmp.eq.s32.totalorder %s74, 1
      %p92 = por %p90, %p91
      %p93 = scmp.ne.s32.totalorder %s82, %s83
      %p94 = scmp.eq.s32.totalorder %s74, 0
      %p95 = por %p93, %p94
      %p96 = scmp.ne.s32.totalorder %s82, %s83
      %p97 = scmp.eq.s32.totalorder %s75, 1
      %p98 = por %p96, %p97
      %p100 = scmp.ne.s32.totalorder %s83, %s99
      %p101 = scmp.eq.s32.totalorder %s75, 0
      %p102 = por %p100, %p101
      %s103 = ssub.s32 %s69, %s76
      %p104 = scmp.eq.s32.totalorder %s103, 0
      %s106 = sadd.s32 %s105, 1
      %s107 = scalar_select %p104, %s105, %s106
      %p110 = pneg %p104
      %p111 = scmp.eq.s32.totalorder %s69, 1
      %p112 = por %p110, %p111
      %p113 = scmp.ne.s32.totalorder %s105, %s108
      %p114 = scmp.eq.s32.totalorder %s69, 0
      %p115 = por %p113, %p114
      %p116 = scmp.ne.s32.totalorder %s105, %s108
      %p117 = scmp.eq.s32.totalorder %s74, 1
      %p118 = por %p116, %p117
      %p119 = scmp.ne.s32.totalorder %s108, %s109
      %p120 = scmp.eq.s32.totalorder %s74, 0
      %p121 = por %p119, %p120
      %p122 = scmp.ne.s32.totalorder %s108, %s109
      %p123 = scmp.eq.s32.totalorder %s75, 1
      %p124 = por %p122, %p123
      %p126 = scmp.ne.s32.totalorder %s109, %s125
      %p127 = scmp.eq.s32.totalorder %s75, 0
      %p128 = por %p126, %p127
      %s130 = sadd.s32 %s129, 1
      %p133 = scmp.eq.s32.totalorder %s69, 1
      %p134 = scmp.ne.s32.totalorder %s129, %s131
      %p135 = scmp.eq.s32.totalorder %s69, 0
      %p136 = por %p134, %p135
      %p137 = scmp.ne.s32.totalorder %s129, %s131
      %p138 = scmp.eq.s32.totalorder %s74, 1
      %p139 = por %p137, %p138
      %p140 = scmp.ne.s32.totalorder %s131, %s132
      %p141 = scmp.eq.s32.totalorder %s74, 0
      %p142 = por %p140, %p141
      %p143 = scmp.ne.s32.totalorder %s131, %s132
      %p144 = scmp.eq.s32.totalorder %s75, 1
      %p145 = por %p143, %p144
      %p147 = scmp.ne.s32.totalorder %s132, %s146
      %p148 = scmp.eq.s32.totalorder %s75, 0
      %p149 = por %p147, %p148
      %s151 = sadd.s32 %s150, 1
      %p154 = scmp.eq.s32.totalorder %s69, 1
      %p155 = scmp.ne.s32.totalorder %s150, %s152
      %p156 = scmp.eq.s32.totalorder %s69, 0
      %p157 = por %p155, %p156
      %p158 = scmp.ne.s32.totalorder %s150, %s152
      %p159 = scmp.eq.s32.totalorder %s74, 1
      %p160 = por %p158, %p159
      %p161 = scmp.ne.s32.totalorder %s152, %s153
      %p162 = scmp.eq.s32.totalorder %s74, 0
      %p163 = por %p161, %p162
      %p164 = scmp.ne.s32.totalorder %s152, %s153
      %p165 = scmp.eq.s32.totalorder %s75, 1
      %p166 = por %p164, %p165
      %p168 = scmp.ne.s32.totalorder %s153, %s167
      %p169 = scmp.eq.s32.totalorder %s75, 0
      %p170 = por %p168, %p169
      %s172 = sadd.s32 %s171, 1
      %p175 = scmp.eq.s32.totalorder %s69, 1
      %p176 = scmp.ne.s32.totalorder %s171, %s173
      %p177 = scmp.eq.s32.totalorder %s69, 0
      %p178 = por %p176, %p177
      %p179 = scmp.ne.s32.totalorder %s171, %s173
      %p180 = scmp.eq.s32.totalorder %s74, 1
      %p181 = por %p179, %p180
      %p182 = scmp.ne.s32.totalorder %s173, %s174
      %p183 = scmp.eq.s32.totalorder %s74, 0
      %p184 = por %p182, %p183
      %p185 = scmp.ne.s32.totalorder %s173, %s174
      %p186 = scmp.eq.s32.totalorder %s75, 1
      %p187 = por %p185, %p186
      %p189 = scmp.ne.s32.totalorder %s174, %s188
      %p190 = scmp.eq.s32.totalorder %s75, 0
      %p191 = por %p189, %p190
      %s193 = sadd.s32 %s192, 1
      %p196 = scmp.eq.s32.totalorder %s69, 1
      %p197 = scmp.ne.s32.totalorder %s192, %s194
      %p198 = scmp.eq.s32.totalorder %s69, 0
      %p199 = por %p197, %p198
      %p200 = scmp.ne.s32.totalorder %s192, %s194
      %p201 = scmp.eq.s32.totalorder %s74, 1
      %p202 = por %p200, %p201
      %p203 = scmp.ne.s32.totalorder %s194, %s195
      %p204 = scmp.eq.s32.totalorder %s74, 0
      %p205 = por %p203, %p204
      %p206 = scmp.ne.s32.totalorder %s194, %s195
      %p207 = scmp.eq.s32.totalorder %s75, 1
      %p208 = por %p206, %p207
      %p210 = scmp.ne.s32.totalorder %s195, %s209
      %p211 = scmp.eq.s32.totalorder %s75, 0
      %p212 = por %p210, %p211
      %s214 = sadd.s32 %s213, 1
      %p217 = scmp.eq.s32.totalorder %s69, 1
      %p218 = scmp.ne.s32.totalorder %s213, %s215
      %p219 = scmp.eq.s32.totalorder %s69, 0
      %p220 = por %p218, %p219
      %p221 = scmp.ne.s32.totalorder %s213, %s215
      %p222 = scmp.eq.s32.totalorder %s74, 1
      %p223 = por %p221, %p222
      %p224 = scmp.ne.s32.totalorder %s215, %s216
      %p225 = scmp.eq.s32.totalorder %s74, 0
      %p226 = por %p224, %p225
      %p227 = scmp.ne.s32.totalorder %s215, %s216
      %p228 = scmp.eq.s32.totalorder %s75, 1
      %p229 = por %p227, %p228
      %p231 = scmp.ne.s32.totalorder %s216, %s230
      %p232 = scmp.eq.s32.totalorder %s75, 0
      %p233 = por %p231, %p232
      %s235 = sadd.s32 %s234, 1
      %p238 = scmp.eq.s32.totalorder %s69, 1
      %p239 = scmp.ne.s32.totalorder %s234, %s236
      %p240 = scmp.eq.s32.totalorder %s69, 0
      %p241 = por %p239, %p240
      %p242 = scmp.ne.s32.totalorder %s234, %s236
      %p243 = scmp.eq.s32.totalorder %s74, 1
      %p244 = por %p242, %p243
      %p245 = scmp.ne.s32.totalorder %s236, %s237
      %p246 = scmp.eq.s32.totalorder %s74, 0
      %p247 = por %p245, %p246
      %p248 = scmp.ne.s32.totalorder %s236, %s237
      %p249 = scmp.eq.s32.totalorder %s75, 1
      %p250 = por %p248, %p249
      %p252 = scmp.ne.s32.totalorder %s237, %s251
      %p253 = scmp.eq.s32.totalorder %s75, 0
      %p254 = por %p252, %p253
      %s256 = sadd.s32 %s255, 1
      %p259 = scmp.eq.s32.totalorder %s69, 1
      %p260 = scmp.ne.s32.totalorder %s255, %s257
      %p261 = scmp.eq.s32.totalorder %s69, 0
      %p262 = por %p260, %p261
      %p263 = scmp.ne.s32.totalorder %s255, %s257
      %p264 = scmp.eq.s32.totalorder %s74, 1
      %p265 = por %p263, %p264
      %p266 = scmp.ne.s32.totalorder %s257, %s258
      %p267 = scmp.eq.s32.totalorder %s74, 0
      %p268 = por %p266, %p267
      %p269 = scmp.ne.s32.totalorder %s257, %s258
      %p270 = scmp.eq.s32.totalorder %s75, 1
      %p271 = por %p269, %p270
      %p273 = scmp.ne.s32.totalorder %s258, %s272
      %p274 = scmp.eq.s32.totalorder %s75, 0
      %p275 = por %p273, %p274
      %s277 = sadd.s32 %s276, 1
      %p280 = scmp.eq.s32.totalorder %s69, 1
      %p281 = scmp.ne.s32.totalorder %s276, %s278
      %p282 = scmp.eq.s32.totalorder %s69, 0
      %p283 = por %p281, %p282
      %p284 = scmp.ne.s32.totalorder %s276, %s278
      %p285 = scmp.eq.s32.totalorder %s74, 1
      %p286 = por %p284, %p285
      %p287 = scmp.ne.s32.totalorder %s278, %s279
      %p288 = scmp.eq.s32.totalorder %s74, 0
      %p289 = por %p287, %p288
      %p290 = scmp.ne.s32.totalorder %s278, %s279
      %p291 = scmp.eq.s32.totalorder %s75, 1
      %p292 = por %p290, %p291
      %p294 = scmp.ne.s32.totalorder %s279, %s293
      %p295 = scmp.eq.s32.totalorder %s75, 0
      %p296 = por %p294, %p295
      %s298 = sadd.s32 %s297, 1
      %p301 = scmp.eq.s32.totalorder %s69, 1
      %p302 = scmp.ne.s32.totalorder %s297, %s299
      %p303 = scmp.eq.s32.totalorder %s69, 0
      %p304 = por %p302, %p303
      %p305 = scmp.ne.s32.totalorder %s297, %s299
      %p306 = scmp.eq.s32.totalorder %s74, 1
      %p307 = por %p305, %p306
      %p308 = scmp.ne.s32.totalorder %s299, %s300
      %p309 = scmp.eq.s32.totalorder %s74, 0
      %p310 = por %p308, %p309
      %p311 = scmp.ne.s32.totalorder %s299, %s300
      %p312 = scmp.eq.s32.totalorder %s75, 1
      %p313 = por %p311, %p312
      %p315 = scmp.ne.s32.totalorder %s300, %s314
      %p316 = scmp.eq.s32.totalorder %s75, 0
      %p317 = por %p315, %p316
      %s319 = sadd.s32 %s318, 1
      %p322 = scmp.eq.s32.totalorder %s69, 1
      %p323 = scmp.ne.s32.totalorder %s318, %s320
      %p324 = scmp.eq.s32.totalorder %s69, 0
      %p325 = por %p323, %p324
      %p326 = scmp.ne.s32.totalorder %s318, %s320
      %p327 = scmp.eq.s32.totalorder %s74, 1
      %p328 = por %p326, %p327
      %p329 = scmp.ne.s32.totalorder %s320, %s321
      %p330 = scmp.eq.s32.totalorder %s74, 0
      %p331 = por %p329, %p330
      %p332 = scmp.ne.s32.totalorder %s320, %s321
      %p333 = scmp.eq.s32.totalorder %s75, 1
      %p334 = por %p332, %p333
      %p336 = scmp.ne.s32.totalorder %s321, %s335
      %p337 = scmp.eq.s32.totalorder %s75, 0
      %p338 = por %p336, %p337
      %s340 = sadd.s32 %s339, 1
      %p343 = scmp.eq.s32.totalorder %s69, 1
      %p344 = scmp.ne.s32.totalorder %s339, %s341
      %p345 = scmp.eq.s32.totalorder %s69, 0
      %p346 = por %p344, %p345
      %p347 = scmp.ne.s32.totalorder %s339, %s341
      %p348 = scmp.eq.s32.totalorder %s74, 1
      %p349 = por %p347, %p348
      %p350 = scmp.ne.s32.totalorder %s341, %s342
      %p351 = scmp.eq.s32.totalorder %s74, 0
      %p352 = por %p350, %p351
      %p353 = scmp.ne.s32.totalorder %s341, %s342
      %p354 = scmp.eq.s32.totalorder %s75, 1
      %p355 = por %p353, %p354
      %p357 = scmp.ne.s32.totalorder %s342, %s356
      %p358 = scmp.eq.s32.totalorder %s75, 0
      %p359 = por %p357, %p358
      %s361 = sadd.s32 %s360, 1
      %p364 = scmp.eq.s32.totalorder %s69, 1
      %p365 = scmp.ne.s32.totalorder %s360, %s362
      %p366 = scmp.eq.s32.totalorder %s69, 0
      %p367 = por %p365, %p366
      %p368 = scmp.ne.s32.totalorder %s360, %s362
      %p369 = scmp.eq.s32.totalorder %s74, 1
      %p370 = por %p368, %p369
      %p371 = scmp.ne.s32.totalorder %s362, %s363
      %p372 = scmp.eq.s32.totalorder %s74, 0
      %p373 = por %p371, %p372
      %p374 = scmp.ne.s32.totalorder %s362, %s363
      %p375 = scmp.eq.s32.totalorder %s75, 1
      %p376 = por %p374, %p375
      %p378 = scmp.ne.s32.totalorder %s363, %s377
      %p379 = scmp.eq.s32.totalorder %s75, 0
      %p380 = por %p378, %p379
      %s382 = sadd.s32 %s381, 1
      %p385 = scmp.eq.s32.totalorder %s69, 1
      %p386 = scmp.ne.s32.totalorder %s381, %s383
      %p387 = scmp.eq.s32.totalorder %s69, 0
      %p388 = por %p386, %p387
      %p389 = scmp.ne.s32.totalorder %s381, %s383
      %p390 = scmp.eq.s32.totalorder %s74, 1
      %p391 = por %p389, %p390
      %p392 = scmp.ne.s32.totalorder %s383, %s384
      %p393 = scmp.eq.s32.totalorder %s74, 0
      %p394 = por %p392, %p393
      %p395 = scmp.ne.s32.totalorder %s383, %s384
      %p396 = scmp.eq.s32.totalorder %s75, 1
      %p397 = por %p395, %p396
      %p399 = scmp.ne.s32.totalorder %s384, %s398
      %p400 = scmp.eq.s32.totalorder %s75, 0
      %p401 = por %p399, %p400
      %s403 = sadd.s32 %s402, 1
      %p406 = scmp.eq.s32.totalorder %s69, 1
      %p407 = scmp.ne.s32.totalorder %s402, %s404
      %p408 = scmp.eq.s32.totalorder %s69, 0
      %p409 = por %p407, %p408
      %p410 = scmp.ne.s32.totalorder %s402, %s404
      %p411 = scmp.eq.s32.totalorder %s74, 1
      %p412 = por %p410, %p411
      %p413 = scmp.ne.s32.totalorder %s404, %s405
      %p414 = scmp.eq.s32.totalorder %s74, 0
      %p415 = por %p413, %p414
      %p416 = scmp.ne.s32.totalorder %s404, %s405
      %p417 = scmp.eq.s32.totalorder %s75, 1
      %p418 = por %p416, %p417
      %p420 = scmp.ne.s32.totalorder %s405, %s419
      %p421 = scmp.eq.s32.totalorder %s75, 0
      %p422 = por %p420, %p421
      %s424 = sadd.s32 %s423, 1
      %p427 = scmp.eq.s32.totalorder %s69, 1
      %p428 = scmp.ne.s32.totalorder %s423, %s425
      %p429 = scmp.eq.s32.totalorder %s69, 0
      %p430 = por %p428, %p429
      %p431 = scmp.ne.s32.totalorder %s423, %s425
      %p432 = scmp.eq.s32.totalorder %s74, 1
      %p433 = por %p431, %p432
      %p434 = scmp.ne.s32.totalorder %s425, %s426
      %p435 = scmp.eq.s32.totalorder %s74, 0
      %p436 = por %p434, %p435
      %p437 = scmp.ne.s32.totalorder %s425, %s426
      %p438 = scmp.eq.s32.totalorder %s75, 1
      %p439 = por %p437, %p438
      %p441 = scmp.ne.s32.totalorder %s426, %s440
      %p442 = scmp.eq.s32.totalorder %s75, 0
      %p443 = por %p441, %p442
      %s445 = sadd.s32 %s444, 1
      %p448 = scmp.eq.s32.totalorder %s69, 1
      %p449 = scmp.ne.s32.totalorder %s444, %s446
      %p450 = scmp.eq.s32.totalorder %s69, 0
      %p451 = por %p449, %p450
      %p452 = scmp.ne.s32.totalorder %s444, %s446
      %p453 = scmp.eq.s32.totalorder %s74, 1
      %p454 = por %p452, %p453
      %p455 = scmp.ne.s32.totalorder %s446, %s447
      %p456 = scmp.eq.s32.totalorder %s74, 0
      %p457 = por %p455, %p456
      %p458 = scmp.ne.s32.totalorder %s446, %s447
      %p459 = scmp.eq.s32.totalorder %s75, 1
      %p460 = por %p458, %p459
      %p462 = scmp.ne.s32.totalorder %s447, %s461
      %p463 = scmp.eq.s32.totalorder %s75, 0
      %p464 = por %p462, %p463
      %s466 = sadd.s32 %s465, 1
      %p469 = scmp.eq.s32.totalorder %s69, 1
      %p470 = scmp.ne.s32.totalorder %s465, %s467
      %p471 = scmp.eq.s32.totalorder %s69, 0
      %p472 = por %p470, %p471
      %p473 = scmp.ne.s32.totalorder %s465, %s467
      %p474 = scmp.eq.s32.totalorder %s74, 1
      %p475 = por %p473, %p474
      %p476 = scmp.ne.s32.totalorder %s467, %s468
      %p477 = scmp.eq.s32.totalorder %s74, 0
      %p478 = por %p476, %p477
      %p479 = scmp.ne.s32.totalorder %s467, %s468
      %p480 = scmp.eq.s32.totalorder %s75, 1
      %p481 = por %p479, %p480
      %p483 = scmp.ne.s32.totalorder %s468, %s482
      %p484 = scmp.eq.s32.totalorder %s75, 0
      %p485 = por %p483, %p484
      %s487 = sadd.s32 %s486, 1
      %p490 = scmp.eq.s32.totalorder %s69, 1
      %p491 = scmp.ne.s32.totalorder %s486, %s488
      %p492 = scmp.eq.s32.totalorder %s69, 0
      %p493 = por %p491, %p492
      %p494 = scmp.ne.s32.totalorder %s486, %s488
      %p495 = scmp.eq.s32.totalorder %s74, 1
      %p496 = por %p494, %p495
      %p497 = scmp.ne.s32.totalorder %s488, %s489
      %p498 = scmp.eq.s32.totalorder %s74, 0
      %p499 = por %p497, %p498
      %p500 = scmp.ne.s32.totalorder %s488, %s489
      %p501 = scmp.eq.s32.totalorder %s75, 1
      %p502 = por %p500, %p501
      %p504 = scmp.ne.s32.totalorder %s489, %s503
      %p505 = scmp.eq.s32.totalorder %s75, 0
      %p506 = por %p504, %p505
      %s508 = sadd.s32 %s507, 1
      %p511 = scmp.eq.s32.totalorder %s69, 1
      %p512 = scmp.ne.s32.totalorder %s507, %s509
      %p513 = scmp.eq.s32.totalorder %s69, 0
      %p514 = por %p512, %p513
      %p515 = scmp.ne.s32.totalorder %s507, %s509
      %p516 = scmp.eq.s32.totalorder %s74, 1
      %p517 = por %p515, %p516
      %p518 = scmp.ne.s32.totalorder %s509, %s510
      %p519 = scmp.eq.s32.totalorder %s74, 0
      %p520 = por %p518, %p519
      %p521 = scmp.ne.s32.totalorder %s509, %s510
      %p522 = scmp.eq.s32.totalorder %s75, 1
      %p523 = por %p521, %p522
      %p525 = scmp.ne.s32.totalorder %s510, %s524
      %p526 = scmp.eq.s32.totalorder %s75, 0
      %p527 = por %p525, %p526
      %s529 = sadd.s32 %s528, 1
      %p532 = scmp.eq.s32.totalorder %s69, 1
      %p533 = scmp.ne.s32.totalorder %s528, %s530
      %p534 = scmp.eq.s32.totalorder %s69, 0
      %p535 = por %p533, %p534
      %p536 = scmp.ne.s32.totalorder %s528, %s530
      %p537 = scmp.eq.s32.totalorder %s74, 1
      %p538 = por %p536, %p537
      %p539 = scmp.ne.s32.totalorder %s530, %s531
      %p540 = scmp.eq.s32.totalorder %s74, 0
      %p541 = por %p539, %p540
      %p542 = scmp.ne.s32.totalorder %s530, %s531
      %p543 = scmp.eq.s32.totalorder %s75, 1
      %p544 = por %p542, %p543
      %p546 = scmp.ne.s32.totalorder %s531, %s545
      %p547 = scmp.eq.s32.totalorder %s75, 0
      %p548 = por %p546, %p547
      %s550 = sadd.s32 %s549, 1
      %p553 = scmp.eq.s32.totalorder %s69, 1
      %p554 = scmp.ne.s32.totalorder %s549, %s551
      %p555 = scmp.eq.s32.totalorder %s69, 0
      %p556 = por %p554, %p555
      %p557 = scmp.ne.s32.totalorder %s549, %s551
      %p558 = scmp.eq.s32.totalorder %s74, 1
      %p559 = por %p557, %p558
      %p560 = scmp.ne.s32.totalorder %s551, %s552
      %p561 = scmp.eq.s32.totalorder %s74, 0
      %p562 = por %p560, %p561
      %p563 = scmp.ne.s32.totalorder %s551, %s552
      %p564 = scmp.eq.s32.totalorder %s75, 1
      %p565 = por %p563, %p564
      %p567 = scmp.ne.s32.totalorder %s552, %s566
      %p568 = scmp.eq.s32.totalorder %s75, 0
      %p569 = por %p567, %p568
      %s571 = sadd.s32 %s570, 1
      %p574 = scmp.eq.s32.totalorder %s69, 1
      %p575 = scmp.ne.s32.totalorder %s570, %s572
      %p576 = scmp.eq.s32.totalorder %s69, 0
      %p577 = por %p575, %p576
      %p578 = scmp.ne.s32.totalorder %s570, %s572
      %p579 = scmp.eq.s32.totalorder %s74, 1
      %p580 = por %p578, %p579
      %p581 = scmp.ne.s32.totalorder %s572, %s573
      %p582 = scmp.eq.s32.totalorder %s74, 0
      %p583 = por %p581, %p582
      %p584 = scmp.ne.s32.totalorder %s572, %s573
      %p585 = scmp.eq.s32.totalorder %s75, 1
      %p586 = por %p584, %p585
      %p588 = scmp.ne.s32.totalorder %s573, %s587
      %p589 = scmp.eq.s32.totalorder %s75, 0
      %p590 = por %p588, %p589
      %s592 = sadd.s32 %s591, 1
      %p595 = scmp.eq.s32.totalorder %s69, 1
      %p596 = scmp.ne.s32.totalorder %s591, %s593
      %p597 = scmp.eq.s32.totalorder %s69, 0
      %p598 = por %p596, %p597
      %p599 = scmp.ne.s32.totalorder %s591, %s593
      %p600 = scmp.eq.s32.totalorder %s74, 1
      %p601 = por %p599, %p600
      %p602 = scmp.ne.s32.totalorder %s593, %s594
      %p603 = scmp.eq.s32.totalorder %s74, 0
      %p604 = por %p602, %p603
      %p605 = scmp.ne.s32.totalorder %s593, %s594
      %p606 = scmp.eq.s32.totalorder %s75, 1
      %p607 = por %p605, %p606
      %p609 = scmp.ne.s32.totalorder %s594, %s608
      %p610 = scmp.eq.s32.totalorder %s75, 0
      %p611 = por %p609, %p610
      %s613 = sadd.s32 %s612, 1
      %p616 = scmp.eq.s32.totalorder %s69, 1
      %p617 = scmp.ne.s32.totalorder %s612, %s614
      %p618 = scmp.eq.s32.totalorder %s69, 0
      %p619 = por %p617, %p618
      %p620 = scmp.ne.s32.totalorder %s612, %s614
      %p621 = scmp.eq.s32.totalorder %s74, 1
      %p622 = por %p620, %p621
      %p623 = scmp.ne.s32.totalorder %s614, %s615
      %p624 = scmp.eq.s32.totalorder %s74, 0
      %p625 = por %p623, %p624
      %p626 = scmp.ne.s32.totalorder %s614, %s615
      %p627 = scmp.eq.s32.totalorder %s75, 1
      %p628 = por %p626, %p627
      %p630 = scmp.ne.s32.totalorder %s615, %s629
      %p631 = scmp.eq.s32.totalorder %s75, 0
      %p632 = por %p630, %p631
      %s634 = sadd.s32 %s633, 1
      %p637 = scmp.eq.s32.totalorder %s69, 1
      %p638 = scmp.ne.s32.totalorder %s633, %s635
      %p639 = scmp.eq.s32.totalorder %s69, 0
      %p640 = por %p638, %p639
      %p641 = scmp.ne.s32.totalorder %s633, %s635
      %p642 = scmp.eq.s32.totalorder %s74, 1
      %p643 = por %p641, %p642
      %p644 = scmp.ne.s32.totalorder %s635, %s636
      %p645 = scmp.eq.s32.totalorder %s74, 0
      %p646 = por %p644, %p645
      %p647 = scmp.ne.s32.totalorder %s635, %s636
      %p648 = scmp.eq.s32.totalorder %s75, 1
      %p649 = por %p647, %p648
      %p651 = scmp.ne.s32.totalorder %s636, %s650
      %p652 = scmp.eq.s32.totalorder %s75, 0
      %p653 = por %p651, %p652
      %s655 = sadd.s32 %s654, 1
      %p658 = scmp.eq.s32.totalorder %s69, 1
      %p659 = scmp.ne.s32.totalorder %s654, %s656
      %p660 = scmp.eq.s32.totalorder %s69, 0
      %p661 = por %p659, %p660
      %p662 = scmp.ne.s32.totalorder %s654, %s656
      %p663 = scmp.eq.s32.totalorder %s74, 1
      %p664 = por %p662, %p663
      %p665 = scmp.ne.s32.totalorder %s656, %s657
      %p666 = scmp.eq.s32.totalorder %s74, 0
      %p667 = por %p665, %p666
      %p668 = scmp.ne.s32.totalorder %s656, %s657
      %p669 = scmp.eq.s32.totalorder %s75, 1
      %p670 = por %p668, %p669
      %p672 = scmp.ne.s32.totalorder %s657, %s671
      %p673 = scmp.eq.s32.totalorder %s75, 0
      %p674 = por %p672, %p673
      %s675 = ssub.s32 %s69, %s76
      %p676 = scmp.eq.s32.totalorder %s675, 0
      %s678 = sadd.s32 %s677, 1
      %s679 = scalar_select %p676, %s677, %s678
      %p682 = pneg %p676
      %p683 = scmp.eq.s32.totalorder %s69, 1
      %p684 = por %p682, %p683
      %p685 = scmp.ne.s32.totalorder %s677, %s680
      %p686 = scmp.eq.s32.totalorder %s69, 0
      %p687 = por %p685, %p686
      %p688 = scmp.ne.s32.totalorder %s677, %s680
      %p689 = scmp.eq.s32.totalorder %s74, 1
      %p690 = por %p688, %p689
      %p691 = scmp.ne.s32.totalorder %s680, %s681
      %p692 = scmp.eq.s32.totalorder %s74, 0
      %p693 = por %p691, %p692
      %p694 = scmp.ne.s32.totalorder %s680, %s681
      %p695 = scmp.eq.s32.totalorder %s75, 1
      %p696 = por %p694, %p695
      %p698 = scmp.ne.s32.totalorder %s681, %s697
      %p699 = scmp.eq.s32.totalorder %s75, 0
      %p700 = por %p698, %p699
      %s701 = ssub.s32 %s69, %s76
      %p702 = scmp.eq.s32.totalorder %s701, 0
      %s704 = sadd.s32 %s703, 1
      %s705 = scalar_select %p702, %s703, %s704
      %p708 = pneg %p702
      %p709 = scmp.eq.s32.totalorder %s69, 1
      %p710 = por %p708, %p709
      %p711 = scmp.ne.s32.totalorder %s703, %s706
      %p712 = scmp.eq.s32.totalorder %s69, 0
      %p713 = por %p711, %p712
      %p714 = scmp.ne.s32.totalorder %s703, %s706
      %p715 = scmp.eq.s32.totalorder %s74, 1
      %p716 = por %p714, %p715
      %p717 = scmp.ne.s32.totalorder %s706, %s707
      %p718 = scmp.eq.s32.totalorder %s74, 0
      %p719 = por %p717, %p718
      %p720 = scmp.ne.s32.totalorder %s706, %s707
      %p721 = scmp.eq.s32.totalorder %s75, 1
      %p722 = por %p720, %p721
      %p724 = scmp.ne.s32.totalorder %s707, %s723
      %p725 = scmp.eq.s32.totalorder %s75, 0
      %p726 = por %p724, %p725
      %p727 = scmp.le.s32.totalorder 1, %s69
      %p728 = scmp.lt.s32.totalorder %s69, 3
      %p729 = pnand %p727, %p728
      %p730 = pneg %p729
      // Predicated region
      $region9: #{tpu_custom_call.1} parent=5 // pred_check
        _
      $region10: #{tpu_custom_call.1} parent=5 // pred_check_branch
        %732 = sbr.rel (%p729) target = $region12
      $region11: #{tpu_custom_call.1} parent=5 // pred_region
        %s733 = ssub.s32 %s69, 1
        // Predicated region
        $region13: #{tpu_custom_call.1} parent=11 // pred_check
          %p734 = pneg %p142
        $region14: #{tpu_custom_call.1} parent=11 // pred_check_branch
          %736 = sbr.rel (%p734) target = $region16
        $region15: #{tpu_custom_call.1} parent=11 // pred_region
          _
        $region16: #{tpu_custom_call.1} parent=11 // pred_fallthru
          _
        // Predicated region
        $region17: #{tpu_custom_call.1} parent=11 // pred_check
          %p737 = pneg %p163
        $region18: #{tpu_custom_call.1} parent=11 // pred_check_branch
          %739 = sbr.rel (%p737) target = $region20
        $region19: #{tpu_custom_call.1} parent=11 // pred_region
          _
        $region20: #{tpu_custom_call.1} parent=11 // pred_fallthru
          _
        // Predicated region
        $region21: #{tpu_custom_call.1} parent=11 // pred_check
          %p740 = pneg %p184
        $region22: #{tpu_custom_call.1} parent=11 // pred_check_branch
          %742 = sbr.rel (%p740) target = $region24
        $region23: #{tpu_custom_call.1} parent=11 // pred_region
          _
        $region24: #{tpu_custom_call.1} parent=11 // pred_fallthru
          _
        // Predicated region
        $region25: #{tpu_custom_call.1} parent=11 // pred_check
          %p743 = pneg %p205
        $region26: #{tpu_custom_call.1} parent=11 // pred_check_branch
          %745 = sbr.rel (%p743) target = $region28
        $region27: #{tpu_custom_call.1} parent=11 // pred_region
          _
        $region28: #{tpu_custom_call.1} parent=11 // pred_fallthru
          _
        // Predicated region
        $region29: #{tpu_custom_call.1} parent=11 // pred_check
          %p746 = pneg %p226
        $region30: #{tpu_custom_call.1} parent=11 // pred_check_branch
          %748 = sbr.rel (%p746) target = $region32
        $region31: #{tpu_custom_call.1} parent=11 // pred_region
          _
        $region32: #{tpu_custom_call.1} parent=11 // pred_fallthru
          _
        // Predicated region
        $region33: #{tpu_custom_call.1} parent=11 // pred_check
          %p749 = pneg %p247
        $region34: #{tpu_custom_call.1} parent=11 // pred_check_branch
          %751 = sbr.rel (%p749) target = $region36
        $region35: #{tpu_custom_call.1} parent=11 // pred_region
          _
        $region36: #{tpu_custom_call.1} parent=11 // pred_fallthru
          _
        // Predicated region
        $region37: #{tpu_custom_call.1} parent=11 // pred_check
          %p752 = pneg %p268
        $region38: #{tpu_custom_call.1} parent=11 // pred_check_branch
          %754 = sbr.rel (%p752) target = $region40
        $region39: #{tpu_custom_call.1} parent=11 // pred_region
          _
        $region40: #{tpu_custom_call.1} parent=11 // pred_fallthru
          _
        // Predicated region
        $region41: #{tpu_custom_call.1} parent=11 // pred_check
          %p755 = pneg %p289
        $region42: #{tpu_custom_call.1} parent=11 // pred_check_branch
          %757 = sbr.rel (%p755) target = $region44
        $region43: #{tpu_custom_call.1} parent=11 // pred_region
          _
        $region44: #{tpu_custom_call.1} parent=11 // pred_fallthru
          _
        // Predicated region
        $region45: #{tpu_custom_call.1} parent=11 // pred_check
          %p758 = pneg %p310
        $region46: #{tpu_custom_call.1} parent=11 // pred_check_branch
          %760 = sbr.rel (%p758) target = $region48
        $region47: #{tpu_custom_call.1} parent=11 // pred_region
          _
        $region48: #{tpu_custom_call.1} parent=11 // pred_fallthru
          _
        // Predicated region
        $region49: #{tpu_custom_call.1} parent=11 // pred_check
          %p761 = pneg %p331
        $region50: #{tpu_custom_call.1} parent=11 // pred_check_branch
          %763 = sbr.rel (%p761) target = $region52
        $region51: #{tpu_custom_call.1} parent=11 // pred_region
          _
        $region52: #{tpu_custom_call.1} parent=11 // pred_fallthru
          _
        // Predicated region
        $region53: #{tpu_custom_call.1} parent=11 // pred_check
          %p764 = pneg %p352
        $region54: #{tpu_custom_call.1} parent=11 // pred_check_branch
          %766 = sbr.rel (%p764) target = $region56
        $region55: #{tpu_custom_call.1} parent=11 // pred_region
          _
        $region56: #{tpu_custom_call.1} parent=11 // pred_fallthru
          _
        // Predicated region
        $region57: #{tpu_custom_call.1} parent=11 // pred_check
          %p767 = pneg %p373
        $region58: #{tpu_custom_call.1} parent=11 // pred_check_branch
          %769 = sbr.rel (%p767) target = $region60
        $region59: #{tpu_custom_call.1} parent=11 // pred_region
          _
        $region60: #{tpu_custom_call.1} parent=11 // pred_fallthru
          _
        // Predicated region
        $region61: #{tpu_custom_call.1} parent=11 // pred_check
          %p770 = pneg %p394
        $region62: #{tpu_custom_call.1} parent=11 // pred_check_branch
          %772 = sbr.rel (%p770) target = $region64
        $region63: #{tpu_custom_call.1} parent=11 // pred_region
          _
        $region64: #{tpu_custom_call.1} parent=11 // pred_fallthru
          _
        // Predicated region
        $region65: #{tpu_custom_call.1} parent=11 // pred_check
          %p773 = pneg %p415
        $region66: #{tpu_custom_call.1} parent=11 // pred_check_branch
          %775 = sbr.rel (%p773) target = $region68
        $region67: #{tpu_custom_call.1} parent=11 // pred_region
          _
        $region68: #{tpu_custom_call.1} parent=11 // pred_fallthru
          _
        // Predicated region
        $region69: #{tpu_custom_call.1} parent=11 // pred_check
          %p776 = pneg %p436
        $region70: #{tpu_custom_call.1} parent=11 // pred_check_branch
          %778 = sbr.rel (%p776) target = $region72
        $region71: #{tpu_custom_call.1} parent=11 // pred_region
          _
        $region72: #{tpu_custom_call.1} parent=11 // pred_fallthru
          _
        // Predicated region
        $region73: #{tpu_custom_call.1} parent=11 // pred_check
          %p779 = pneg %p457
        $region74: #{tpu_custom_call.1} parent=11 // pred_check_branch
          %781 = sbr.rel (%p779) target = $region76
        $region75: #{tpu_custom_call.1} parent=11 // pred_region
          _
        $region76: #{tpu_custom_call.1} parent=11 // pred_fallthru
          _
        // Predicated region
        $region77: #{tpu_custom_call.1} parent=11 // pred_check
          %p782 = pneg %p478
        $region78: #{tpu_custom_call.1} parent=11 // pred_check_branch
          %784 = sbr.rel (%p782) target = $region80
        $region79: #{tpu_custom_call.1} parent=11 // pred_region
          _
        $region80: #{tpu_custom_call.1} parent=11 // pred_fallthru
          _
        // Predicated region
        $region81: #{tpu_custom_call.1} parent=11 // pred_check
          %p785 = pneg %p499
        $region82: #{tpu_custom_call.1} parent=11 // pred_check_branch
          %787 = sbr.rel (%p785) target = $region84
        $region83: #{tpu_custom_call.1} parent=11 // pred_region
          _
        $region84: #{tpu_custom_call.1} parent=11 // pred_fallthru
          _
        // Predicated region
        $region85: #{tpu_custom_call.1} parent=11 // pred_check
          %p788 = pneg %p520
        $region86: #{tpu_custom_call.1} parent=11 // pred_check_branch
          %790 = sbr.rel (%p788) target = $region88
        $region87: #{tpu_custom_call.1} parent=11 // pred_region
          _
        $region88: #{tpu_custom_call.1} parent=11 // pred_fallthru
          _
        // Predicated region
        $region89: #{tpu_custom_call.1} parent=11 // pred_check
          %p791 = pneg %p541
        $region90: #{tpu_custom_call.1} parent=11 // pred_check_branch
          %793 = sbr.rel (%p791) target = $region92
        $region91: #{tpu_custom_call.1} parent=11 // pred_region
          _
        $region92: #{tpu_custom_call.1} parent=11 // pred_fallthru
          _
        // Predicated region
        $region93: #{tpu_custom_call.1} parent=11 // pred_check
          %p794 = pneg %p562
        $region94: #{tpu_custom_call.1} parent=11 // pred_check_branch
          %796 = sbr.rel (%p794) target = $region96
        $region95: #{tpu_custom_call.1} parent=11 // pred_region
          _
        $region96: #{tpu_custom_call.1} parent=11 // pred_fallthru
          _
        // Predicated region
        $region97: #{tpu_custom_call.1} parent=11 // pred_check
          %p797 = pneg %p583
        $region98: #{tpu_custom_call.1} parent=11 // pred_check_branch
          %799 = sbr.rel (%p797) target = $region100
        $region99: #{tpu_custom_call.1} parent=11 // pred_region
          _
        $region100: #{tpu_custom_call.1} parent=11 // pred_fallthru
          _
        // Predicated region
        $region101: #{tpu_custom_call.1} parent=11 // pred_check
          %p800 = pneg %p604
        $region102: #{tpu_custom_call.1} parent=11 // pred_check_branch
          %802 = sbr.rel (%p800) target = $region104
        $region103: #{tpu_custom_call.1} parent=11 // pred_region
          _
        $region104: #{tpu_custom_call.1} parent=11 // pred_fallthru
          _
        // Predicated region
        $region105: #{tpu_custom_call.1} parent=11 // pred_check
          %p803 = pneg %p625
        $region106: #{tpu_custom_call.1} parent=11 // pred_check_branch
          %805 = sbr.rel (%p803) target = $region108
        $region107: #{tpu_custom_call.1} parent=11 // pred_region
          _
        $region108: #{tpu_custom_call.1} parent=11 // pred_fallthru
          _
        // Predicated region
        $region109: #{tpu_custom_call.1} parent=11 // pred_check
          %p806 = pneg %p646
        $region110: #{tpu_custom_call.1} parent=11 // pred_check_branch
          %808 = sbr.rel (%p806) target = $region112
        $region111: #{tpu_custom_call.1} parent=11 // pred_region
          _
        $region112: #{tpu_custom_call.1} parent=11 // pred_fallthru
          _
        // Predicated region
        $region113: #{tpu_custom_call.1} parent=11 // pred_check
          %p809 = pneg %p667
        $region114: #{tpu_custom_call.1} parent=11 // pred_check_branch
          %811 = sbr.rel (%p809) target = $region116
        $region115: #{tpu_custom_call.1} parent=11 // pred_region
          _
        $region116: #{tpu_custom_call.1} parent=11 // pred_fallthru
          _
      $region12: #{tpu_custom_call.1} parent=5 // pred_fallthru
        _
      %p812 = scmp.lt.s32.totalorder %s69, 2
      // Predicated region
      $region117: #{tpu_custom_call.1} parent=5 // pred_check
        %p813 = pneg %p812
      $region118: #{tpu_custom_call.1} parent=5 // pred_check_branch
        %815 = sbr.rel (%p813) target = $region120
      $region119: #{tpu_custom_call.1} parent=5 // pred_region
        // Predicated region
        $region121: #{tpu_custom_call.1} parent=119 // pred_check
          %p816 = pneg %p89
        $region122: #{tpu_custom_call.1} parent=119 // pred_check_branch
          %818 = sbr.rel (%p816) target = $region124
        $region123: #{tpu_custom_call.1} parent=119 // pred_region
          %p819 = scmp.lt.s32.totalorder %s69, 1
          %s820 = scalar_select %p819, %s69, 1
          %s821 = smul.addr %s820, 4
          %s822 = scalar_lea.vmem %s1, %s821
        $region124: #{tpu_custom_call.1} parent=119 // pred_fallthru
          _
        // Predicated region
        $region125: #{tpu_custom_call.1} parent=119 // pred_check
          %p823 = pneg %p115
        $region126: #{tpu_custom_call.1} parent=119 // pred_check_branch
          %825 = sbr.rel (%p823) target = $region128
        $region127: #{tpu_custom_call.1} parent=119 // pred_region
          %p826 = scmp.lt.s32.totalorder %s69, 1
          %s827 = scalar_select %p826, %s69, 1
          %s828 = scalar_lea.vmem %s3, %s827
        $region128: #{tpu_custom_call.1} parent=119 // pred_fallthru
          _
      $region120: #{tpu_custom_call.1} parent=5 // pred_fallthru
        _
      %p829 = scmp.le.s32.totalorder 1, %s69
      %p830 = scmp.lt.s32.totalorder %s69, 3
      %p831 = pnand %p829, %p830
      %p832 = pneg %p831
      // Predicated region
      $region129: #{tpu_custom_call.1} parent=5 // pred_check
        _
      $region130: #{tpu_custom_call.1} parent=5 // pred_check_branch
        %834 = sbr.rel (%p831) target = $region132
      $region131: #{tpu_custom_call.1} parent=5 // pred_region
        %s835 = ssub.s32 %s69, 1
        %p836 = scmp.lt.s32.totalorder %s74, 1
        %s837 = scalar_select %p836, %s74, 1
        %s838 = smul.addr %s837, 4
        %s839 = scalar_lea.vmem %s1, %s838
        %p840 = pneg %p95
        %p841 = pneg %p92
        %p842 = scmp.lt.s32.totalorder %s74, 1
        %s843 = scalar_select %p842, %s74, 1
        %s844 = scalar_lea.vmem %s3, %s843
        %p845 = pneg %p121
        %p846 = pneg %p118
        %p847 = pneg %p142
        %p848 = pneg %p139
        %p849 = pneg %p163
        %p850 = pneg %p160
        %p851 = pneg %p184
        %p852 = pneg %p181
        %p853 = pneg %p205
        %p854 = pneg %p202
        %p855 = pneg %p226
        %p856 = pneg %p223
        %p857 = pneg %p247
        %p858 = pneg %p244
        %p859 = pneg %p268
        %p860 = pneg %p265
        %p861 = pneg %p289
        %p862 = pneg %p286
        %p863 = pneg %p310
        %p864 = pneg %p307
        %p865 = pneg %p331
        %p866 = pneg %p328
        %p867 = pneg %p352
        %p868 = pneg %p349
        %p869 = pneg %p373
        %p870 = pneg %p370
        %p871 = pneg %p394
        %p872 = pneg %p391
        %p873 = pneg %p415
        %p874 = pneg %p412
        %p875 = pneg %p436
        %p876 = pneg %p433
        %p877 = pneg %p457
        %p878 = pneg %p454
        %p879 = pneg %p478
        %p880 = pneg %p475
        %p881 = pneg %p499
        %p882 = pneg %p496
        %p883 = pneg %p520
        %p884 = pneg %p517
        %p885 = pneg %p541
        %p886 = pneg %p538
        %p887 = pneg %p562
        %p888 = pneg %p559
        %p889 = pneg %p583
        %p890 = pneg %p580
        %p891 = pneg %p604
        %p892 = pneg %p601
        %p893 = pneg %p625
        %p894 = pneg %p622
        %p895 = pneg %p646
        %p896 = pneg %p643
        %p897 = pneg %p667
        %p898 = pneg %p664
        %p899 = pneg %p693
        %p900 = pneg %p690
        %s901 = sand.u32 %s680, 1
        %s902 = scalar_lea.sflag [#allocation3], %s901
        %s903 = sand.u32 %s680, 1
        %s904 = smul.addr %s903, 4
        %s905 = scalar_lea.vmem [#allocation2], %s904
        %p906 = pneg %p719
        %p907 = pneg %p716
        %p908 = scmp.lt.s32.totalorder %s74, 1
        %s909 = scalar_select %p908, %s74, 1
        %s910 = scalar_lea.vmem %s59, %s909
        %p911 = scmp.lt.s32.totalorder %s74, 1
        %s912 = scalar_select %p911, %s74, 1
        %s913 = smul.addr %s912, 4
        %s914 = scalar_lea.vmem %s1, %s913
        %p915 = scmp.lt.s32.totalorder %s74, 1
        %s916 = scalar_select %p915, %s74, 1
        %s917 = scalar_lea.vmem %s3, %s916
        %p918 = scmp.lt.s32.totalorder %s74, 1
        %s919 = scalar_select %p918, %s74, 1
        %s920 = scalar_lea.vmem %s59, %s919
        %v921 = vld [vmem:[%s914] sm:$0xf]
        %v922 = vld [vmem:[%s917] sm:$0x1]
        %v923 = vld [vmem:[%s5] sm:$0xff]
        %v924 = vld [vmem:[%s5 + $0x8] sm:$0xff]
        %v925 = vld [vmem:[%s5 + $0x10] sm:$0xff]
        %v926 = vld [vmem:[%s5 + $0x18] sm:$0xff]
        %928 = vset.pattern.permute.xlu0 0
        %929 = vperm.xlu0 %928, %v923
        %v930 = vpop.permute.xlu0 %929
        %933 = vset.pattern.permute.xlu0 0
        %934 = vperm.xlu0 %933, %v924
        %v935 = vpop.permute.xlu0 %934
        %938 = vset.pattern.permute.xlu0 0
        %939 = vperm.xlu0 %938, %v925
        %v940 = vpop.permute.xlu0 %939
        %943 = vset.pattern.permute.xlu0 0
        %944 = vperm.xlu0 %943, %v926
        %v945 = vpop.permute.xlu0 %944
        %v947 = vperm.slane %v921, 0
        %v948 = vmul.f32 %v930, %v947
        %v949 = vmul.f32 %v935, %v947
        %v950 = vmul.f32 %v940, %v947
        %v951 = vmul.f32 %v945, %v947
        %v952 = vadd.f32 %v948, 0.0
        %v953 = vadd.f32 %v949, 0.0
        %v954 = vadd.f32 %v950, 0.0
        %v955 = vadd.f32 %v951, 0.0
        %956 = vset.pattern.permute.xlu0 1
        %957 = vperm.xlu0 %956, %v923
        %v958 = vpop.permute.xlu0 %957
        %960 = vset.pattern.permute.xlu0 1
        %961 = vperm.xlu0 %960, %v924
        %v962 = vpop.permute.xlu0 %961
        %964 = vset.pattern.permute.xlu0 1
        %965 = vperm.xlu0 %964, %v925
        %v966 = vpop.permute.xlu0 %965
        %968 = vset.pattern.permute.xlu0 1
        %969 = vperm.xlu0 %968, %v926
        %v970 = vpop.permute.xlu0 %969
        %v972 = vperm.slane %v921, 1
        %v973 = vmul.f32 %v958, %v972
        %v974 = vmul.f32 %v962, %v972
        %v975 = vmul.f32 %v966, %v972
        %v976 = vmul.f32 %v970, %v972
        %v977 = vadd.f32 %v952, %v973
        %v978 = vadd.f32 %v953, %v974
        %v979 = vadd.f32 %v954, %v975
        %v980 = vadd.f32 %v955, %v976
        %v981 = vld [vmem:[%s7] sm:$0xff]
        %v982 = vld [vmem:[%s7 + $0x8] sm:$0xff]
        %v983 = vld [vmem:[%s7 + $0x10] sm:$0xff]
        %v984 = vld [vmem:[%s7 + $0x18] sm:$0xff]
        %986 = vset.pattern.permute.xlu0 0
        %987 = vperm.xlu0 %986, %v981
        %v988 = vpop.permute.xlu0 %987
        %991 = vset.pattern.permute.xlu0 0
        %992 = vperm.xlu0 %991, %v982
        %v993 = vpop.permute.xlu0 %992
        %996 = vset.pattern.permute.xlu0 0
        %997 = vperm.xlu0 %996, %v983
        %v998 = vpop.permute.xlu0 %997
        %1001 = vset.pattern.permute.xlu0 0
        %1002 = vperm.xlu0 %1001, %v984
        %v1003 = vpop.permute.xlu0 %1002
        %v1005 = vadd.f32 %v977, %v988
        %v1006 = vadd.f32 %v978, %v993
        %v1007 = vadd.f32 %v979, %v998
        %v1008 = vadd.f32 %v980, %v1003
        %v1009 = vlaneseq
        %v1010 = vand.u32 %v1009, 127
        %v1012 = vperm.slane %v922, 0
        %v1014 = vmul.f32 %v1005, %v1012
        %v1015 = vmul.f32 %v1006, %v1012
        %v1016 = vmul.f32 %v1007, %v1012
        %v1017 = vmul.f32 %v1008, %v1012
        %v1018 = vld [vmem:[%s9] sm:$0xff]
        %v1019 = vld [vmem:[%s9 + $0x8] sm:$0xff]
        %v1020 = vld [vmem:[%s9 + $0x10] sm:$0xff]
        %v1021 = vld [vmem:[%s9 + $0x18] sm:$0xff]
        %1022 = vrot.lane.b32.xlu0 %v1014, 1
        %v1023 = vpop.permute.xlu0 %1022
        %1024 = vrot.lane.b32.xlu0 %v1015, 1
        %v1025 = vpop.permute.xlu0 %1024
        %1026 = vrot.lane.b32.xlu0 %v1016, 1
        %v1027 = vpop.permute.xlu0 %1026
        %1028 = vrot.lane.b32.xlu0 %v1017, 1
        %v1029 = vpop.permute.xlu0 %1028
        %vm1030 = vcmp.ge.s32.totalorder %v1010, 1
        %v1031 = vsel %vm1030, 1, 0
        %vm1032 = vcmp.eq.s32.totalorder %v1031, 1
        %v1033 = vsel %vm1032, %v1023, 0.0
        %v1034 = vsel %vm1032, %v1025, 0.0
        %v1035 = vsel %vm1032, %v1027, 0.0
        %v1036 = vsel %vm1032, %v1029, 0.0
        %1038 = vset.pattern.permute.xlu0 0
        %1039 = vperm.xlu0 %1038, %v1018
        %v1040 = vpop.permute.xlu0 %1039
        %1043 = vset.pattern.permute.xlu0 0
        %1044 = vperm.xlu0 %1043, %v1019
        %v1045 = vpop.permute.xlu0 %1044
        %1048 = vset.pattern.permute.xlu0 0
        %1049 = vperm.xlu0 %1048, %v1020
        %v1050 = vpop.permute.xlu0 %1049
        %1053 = vset.pattern.permute.xlu0 0
        %1054 = vperm.xlu0 %1053, %v1021
        %v1055 = vpop.permute.xlu0 %1054
        %v1057 = vmul.f32 %v1040, %v1033
        %v1058 = vmul.f32 %v1045, %v1034
        %v1059 = vmul.f32 %v1050, %v1035
        %v1060 = vmul.f32 %v1055, %v1036
        %v1061 = vadd.f32 %v1057, 0.0
        %v1062 = vadd.f32 %v1058, 0.0
        %v1063 = vadd.f32 %v1059, 0.0
        %v1064 = vadd.f32 %v1060, 0.0
        %1065 = vset.pattern.permute.xlu0 1
        %1066 = vperm.xlu0 %1065, %v1018
        %v1067 = vpop.permute.xlu0 %1066
        %1069 = vset.pattern.permute.xlu0 1
        %1070 = vperm.xlu0 %1069, %v1019
        %v1071 = vpop.permute.xlu0 %1070
        %1073 = vset.pattern.permute.xlu0 1
        %1074 = vperm.xlu0 %1073, %v1020
        %v1075 = vpop.permute.xlu0 %1074
        %1077 = vset.pattern.permute.xlu0 1
        %1078 = vperm.xlu0 %1077, %v1021
        %v1079 = vpop.permute.xlu0 %1078
        %v1081 = vmul.f32 %v1067, %v1014
        %v1082 = vmul.f32 %v1071, %v1015
        %v1083 = vmul.f32 %v1075, %v1016
        %v1084 = vmul.f32 %v1079, %v1017
        %v1085 = vadd.f32 %v1061, %v1081
        %v1086 = vadd.f32 %v1062, %v1082
        %v1087 = vadd.f32 %v1063, %v1083
        %v1088 = vadd.f32 %v1064, %v1084
        %1089 = vrot.lane.b32.xlu0 %v1014, 127
        %v1090 = vpop.permute.xlu0 %1089
        %1091 = vrot.lane.b32.xlu0 %v1015, 127
        %v1092 = vpop.permute.xlu0 %1091
        %1093 = vrot.lane.b32.xlu0 %v1016, 127
        %v1094 = vpop.permute.xlu0 %1093
        %1095 = vrot.lane.b32.xlu0 %v1017, 127
        %v1096 = vpop.permute.xlu0 %1095
        %vm1097 = vcmp.lt.s32.totalorder %v1010, 127
        %v1098 = vsel %vm1097, 1, 0
        %vm1099 = vcmp.eq.s32.totalorder %v1098, 1
        %v1100 = vsel %vm1099, %v1090, 0.0
        %v1101 = vsel %vm1099, %v1092, 0.0
        %v1102 = vsel %vm1099, %v1094, 0.0
        %v1103 = vsel %vm1099, %v1096, 0.0
        %1104 = vset.pattern.permute.xlu0 2
        %1105 = vperm.xlu0 %1104, %v1018
        %v1106 = vpop.permute.xlu0 %1105
        %1108 = vset.pattern.permute.xlu0 2
        %1109 = vperm.xlu0 %1108, %v1019
        %v1110 = vpop.permute.xlu0 %1109
        %1112 = vset.pattern.permute.xlu0 2
        %1113 = vperm.xlu0 %1112, %v1020
        %v1114 = vpop.permute.xlu0 %1113
        %1116 = vset.pattern.permute.xlu0 2
        %1117 = vperm.xlu0 %1116, %v1021
        %v1118 = vpop.permute.xlu0 %1117
        %v1120 = vmul.f32 %v1106, %v1100
        %v1121 = vmul.f32 %v1110, %v1101
        %v1122 = vmul.f32 %v1114, %v1102
        %v1123 = vmul.f32 %v1118, %v1103
        %v1124 = vadd.f32 %v1085, %v1120
        %v1125 = vadd.f32 %v1086, %v1121
        %v1126 = vadd.f32 %v1087, %v1122
        %v1127 = vadd.f32 %v1088, %v1123
        %v1128 = vld [vmem:[%s11] sm:$0xff]
        %v1129 = vld [vmem:[%s11 + $0x8] sm:$0xff]
        %v1130 = vld [vmem:[%s11 + $0x10] sm:$0xff]
        %v1131 = vld [vmem:[%s11 + $0x18] sm:$0xff]
        %1133 = vset.pattern.permute.xlu0 0
        %1134 = vperm.xlu0 %1133, %v1128
        %v1135 = vpop.permute.xlu0 %1134
        %1138 = vset.pattern.permute.xlu0 0
        %1139 = vperm.xlu0 %1138, %v1129
        %v1140 = vpop.permute.xlu0 %1139
        %1143 = vset.pattern.permute.xlu0 0
        %1144 = vperm.xlu0 %1143, %v1130
        %v1145 = vpop.permute.xlu0 %1144
        %1148 = vset.pattern.permute.xlu0 0
        %1149 = vperm.xlu0 %1148, %v1131
        %v1150 = vpop.permute.xlu0 %1149
        %v1152 = vadd.f32 %v1124, %v1135
        %v1153 = vadd.f32 %v1125, %v1140
        %v1154 = vadd.f32 %v1126, %v1145
        %v1155 = vadd.f32 %v1127, %v1150
        %v1156 = vld [vmem:[%s13] sm:$0xff]
        %v1157 = vld [vmem:[%s13 + $0x8] sm:$0xff]
        %v1158 = vld [vmem:[%s13 + $0x10] sm:$0xff]
        %v1159 = vld [vmem:[%s13 + $0x18] sm:$0xff]
        %v1160 = vld [vmem:[%s15] sm:$0xff]
        %v1161 = vld [vmem:[%s15 + $0x8] sm:$0xff]
        %v1162 = vld [vmem:[%s15 + $0x10] sm:$0xff]
        %v1163 = vld [vmem:[%s15 + $0x18] sm:$0xff]
        %v1164 = vadd.f32 %v1152, %v1153
        %v1165 = vadd.f32 %v1164, %v1154
        %v1166 = vadd.f32 %v1165, %v1155
        %v1167 = vrot.slane %v1166, 4
        %v1168 = vadd.f32 %v1166, %v1167
        %v1169 = vrot.slane %v1168, 2
        %v1170 = vadd.f32 %v1168, %v1169
        %v1171 = vrot.slane %v1170, 1
        %v1172 = vadd.f32 %v1170, %v1171
        %v1173 = vrcp.pop 32.0
        %v1174 = vmul.f32 32.0, %v1173
        %v1175 = vsub.f32 1.0, %v1174
        %v1176 = vmul.f32 %v1173, %v1175
        %v1177 = vadd.f32 %v1173, %v1176
        %vm1178 = vweird.f32 %v1173
        %v1179 = vsel %vm1178, %v1173, %v1177
        %v1180 = vmul.f32 %v1172, %v1179
        %v1181 = vsub.f32 %v1152, %v1180
        %v1182 = vsub.f32 %v1153, %v1180
        %v1183 = vsub.f32 %v1154, %v1180
        %v1184 = vsub.f32 %v1155, %v1180
        %v1185 = vmul.f32 %v1181, %v1181
        %v1186 = vmul.f32 %v1182, %v1182
        %v1187 = vmul.f32 %v1183, %v1183
        %v1188 = vmul.f32 %v1184, %v1184
        %v1189 = vadd.f32 %v1185, %v1186
        %v1190 = vadd.f32 %v1189, %v1187
        %v1191 = vadd.f32 %v1190, %v1188
        %v1192 = vrot.slane %v1191, 4
        %v1193 = vadd.f32 %v1191, %v1192
        %v1194 = vrot.slane %v1193, 2
        %v1195 = vadd.f32 %v1193, %v1194
        %v1196 = vrot.slane %v1195, 1
        %v1197 = vadd.f32 %v1195, %v1196
        %v1198 = vmul.f32 %v1197, %v1179
        %v1199 = vadd.f32 %v1198, 1e-05
        %v1200 = vrsqrt.pop %v1199
        %v1201 = vmul.f32 %v1200, %v1199
        %v1202 = vmul.f32 %v1201, %v1200
        %v1203 = vmul.f32 0.5, %v1202
        %v1204 = vsub.f32 1.5, %v1203
        %v1205 = vmul.f32 %v1200, %v1204
        %vm1206 = vweird.f32 %v1199
        %vm1207 = vweird.f32 %v1200
        %vm1208 = vmor %vm1206, %vm1207
        %v1209 = vsel %vm1208, %v1200, %v1205
        %v1210 = vmul.f32 %v1181, %v1209
        %v1211 = vmul.f32 %v1182, %v1209
        %v1212 = vmul.f32 %v1183, %v1209
        %v1213 = vmul.f32 %v1184, %v1209
        %1215 = vset.pattern.permute.xlu0 0
        %1216 = vperm.xlu0 %1215, %v1156
        %v1217 = vpop.permute.xlu0 %1216
        %1220 = vset.pattern.permute.xlu0 0
        %1221 = vperm.xlu0 %1220, %v1157
        %v1222 = vpop.permute.xlu0 %1221
        %1225 = vset.pattern.permute.xlu0 0
        %1226 = vperm.xlu0 %1225, %v1158
        %v1227 = vpop.permute.xlu0 %1226
        %1230 = vset.pattern.permute.xlu0 0
        %1231 = vperm.xlu0 %1230, %v1159
        %v1232 = vpop.permute.xlu0 %1231
        %v1234 = vmul.f32 %v1210, %v1217
        %v1235 = vmul.f32 %v1211, %v1222
        %v1236 = vmul.f32 %v1212, %v1227
        %v1237 = vmul.f32 %v1213, %v1232
        %1239 = vset.pattern.permute.xlu0 0
        %1240 = vperm.xlu0 %1239, %v1160
        %v1241 = vpop.permute.xlu0 %1240
        %1244 = vset.pattern.permute.xlu0 0
        %1245 = vperm.xlu0 %1244, %v1161
        %v1246 = vpop.permute.xlu0 %1245
        %1249 = vset.pattern.permute.xlu0 0
        %1250 = vperm.xlu0 %1249, %v1162
        %v1251 = vpop.permute.xlu0 %1250
        %1254 = vset.pattern.permute.xlu0 0
        %1255 = vperm.xlu0 %1254, %v1163
        %v1256 = vpop.permute.xlu0 %1255
        %v1258 = vadd.f32 %v1234, %v1241
        %v1259 = vadd.f32 %v1235, %v1246
        %v1260 = vadd.f32 %v1236, %v1251
        %v1261 = vadd.f32 %v1237, %v1256
        %v1262 = vmul.f32 %v1258, 0.5
        %v1263 = vmul.f32 %v1259, 0.5
        %v1264 = vmul.f32 %v1260, 0.5
        %v1265 = vmul.f32 %v1261, 0.5
        %v1266 = vmul.f32 %v1258, 0.70710677
        %v1267 = vmul.f32 %v1259, 0.70710677
        %v1268 = vmul.f32 %v1260, 0.70710677
        %v1269 = vmul.f32 %v1261, 0.70710677
        %vm1270 = vcmp.ge.f32.partialorder %v1266, 0.0
        %vm1271 = vcmp.ge.f32.partialorder %v1267, 0.0
        %vm1272 = vcmp.ge.f32.partialorder %v1268, 0.0
        %vm1273 = vcmp.ge.f32.partialorder %v1269, 0.0
        %v1274 = vsel %vm1270, 1.0, -1.0
        %v1275 = vsel %vm1271, 1.0, -1.0
        %v1276 = vsel %vm1272, 1.0, -1.0
        %v1277 = vsel %vm1273, 1.0, -1.0
        %v1278 = vand.u32 2147483647, %v1266
        %v1279 = vand.u32 2147483647, %v1267
        %v1280 = vand.u32 2147483647, %v1268
        %v1281 = vand.u32 2147483647, %v1269
        %v1282 = vmul.f32 %v1278, 0.3275911
        %v1283 = vmul.f32 %v1279, 0.3275911
        %v1284 = vmul.f32 %v1280, 0.3275911
        %v1285 = vmul.f32 %v1281, 0.3275911
        %v1286 = vadd.f32 %v1282, 1.0
        %v1287 = vadd.f32 %v1283, 1.0
        %v1288 = vadd.f32 %v1284, 1.0
        %v1289 = vadd.f32 %v1285, 1.0
        %v1290 = vrcp.pop %v1286
        %v1291 = vmul.f32 %v1286, %v1290
        %v1292 = vsub.f32 1.0, %v1291
        %v1293 = vmul.f32 %v1290, %v1292
        %v1294 = vadd.f32 %v1290, %v1293
        %vm1295 = vweird.f32 %v1286
        %vm1296 = vweird.f32 %v1290
        %vm1297 = vmor %vm1295, %vm1296
        %v1298 = vsel %vm1297, %v1290, %v1294
        %v1299 = vand.u32 2147483647, %v1286
        %vm1300 = vcmp.eq.f32.partialorder %v1299, 8.507059e+37
        %v1301 = vand.u32 %v1286, 2147483648
        %v1302 = vor.u32 1.1754944e-38, %v1301
        %v1303 = vsel %vm1300, %v1302, %v1298
        %v1304 = vmul.f32 1.0, %v1303
        %v1305 = vrcp.pop %v1287
        %v1306 = vmul.f32 %v1287, %v1305
        %v1307 = vsub.f32 1.0, %v1306
        %v1308 = vmul.f32 %v1305, %v1307
        %v1309 = vadd.f32 %v1305, %v1308
        %vm1310 = vweird.f32 %v1287
        %vm1311 = vweird.f32 %v1305
        %vm1312 = vmor %vm1310, %vm1311
        %v1313 = vsel %vm1312, %v1305, %v1309
        %v1314 = vand.u32 2147483647, %v1287
        %vm1315 = vcmp.eq.f32.partialorder %v1314, 8.507059e+37
        %v1316 = vand.u32 %v1287, 2147483648
        %v1317 = vor.u32 1.1754944e-38, %v1316
        %v1318 = vsel %vm1315, %v1317, %v1313
        %v1319 = vmul.f32 1.0, %v1318
        %v1320 = vrcp.pop %v1288
        %v1321 = vmul.f32 %v1288, %v1320
        %v1322 = vsub.f32 1.0, %v1321
        %v1323 = vmul.f32 %v1320, %v1322
        %v1324 = vadd.f32 %v1320, %v1323
        %vm1325 = vweird.f32 %v1288
        %vm1326 = vweird.f32 %v1320
        %vm1327 = vmor %vm1325, %vm1326
        %v1328 = vsel %vm1327, %v1320, %v1324
        %v1329 = vand.u32 2147483647, %v1288
        %vm1330 = vcmp.eq.f32.partialorder %v1329, 8.507059e+37
        %v1331 = vand.u32 %v1288, 2147483648
        %v1332 = vor.u32 1.1754944e-38, %v1331
        %v1333 = vsel %vm1330, %v1332, %v1328
        %v1334 = vmul.f32 1.0, %v1333
        %v1335 = vrcp.pop %v1289
        %v1336 = vmul.f32 %v1289, %v1335
        %v1337 = vsub.f32 1.0, %v1336
        %v1338 = vmul.f32 %v1335, %v1337
        %v1339 = vadd.f32 %v1335, %v1338
        %vm1340 = vweird.f32 %v1289
        %vm1341 = vweird.f32 %v1335
        %vm1342 = vmor %vm1340, %vm1341
        %v1343 = vsel %vm1342, %v1335, %v1339
        %v1344 = vand.u32 2147483647, %v1289
        %vm1345 = vcmp.eq.f32.partialorder %v1344, 8.507059e+37
        %v1346 = vand.u32 %v1289, 2147483648
        %v1347 = vor.u32 1.1754944e-38, %v1346
        %v1348 = vsel %vm1345, %v1347, %v1343
        %v1349 = vmul.f32 1.0, %v1348
        %v1350 = vmul.f32 %v1304, 1.0614054
        %v1351 = vmul.f32 %v1319, 1.0614054
        %v1352 = vmul.f32 %v1334, 1.0614054
        %v1353 = vmul.f32 %v1349, 1.0614054
        %v1354 = vadd.f32 %v1350, -1.4531521
        %v1355 = vadd.f32 %v1351, -1.4531521
        %v1356 = vadd.f32 %v1352, -1.4531521
        %v1357 = vadd.f32 %v1353, -1.4531521
        %v1358 = vmul.f32 %v1354, %v1304
        %v1359 = vmul.f32 %v1355, %v1319
        %v1360 = vmul.f32 %v1356, %v1334
        %v1361 = vmul.f32 %v1357, %v1349
        %v1362 = vadd.f32 %v1358, 1.4214138
        %v1363 = vadd.f32 %v1359, 1.4214138
        %v1364 = vadd.f32 %v1360, 1.4214138
        %v1365 = vadd.f32 %v1361, 1.4214138
        %v1366 = vmul.f32 %v1362, %v1304
        %v1367 = vmul.f32 %v1363, %v1319
        %v1368 = vmul.f32 %v1364, %v1334
        %v1369 = vmul.f32 %v1365, %v1349
        %v1370 = vadd.f32 %v1366, -0.28449672
        %v1371 = vadd.f32 %v1367, -0.28449672
        %v1372 = vadd.f32 %v1368, -0.28449672
        %v1373 = vadd.f32 %v1369, -0.28449672
        %v1374 = vmul.f32 %v1370, %v1304
        %v1375 = vmul.f32 %v1371, %v1319
        %v1376 = vmul.f32 %v1372, %v1334
        %v1377 = vmul.f32 %v1373, %v1349
        %v1378 = vadd.f32 %v1374, 0.2548296
        %v1379 = vadd.f32 %v1375, 0.2548296
        %v1380 = vadd.f32 %v1376, 0.2548296
        %v1381 = vadd.f32 %v1377, 0.2548296
        %v1382 = vmul.f32 %v1378, %v1304
        %v1383 = vmul.f32 %v1379, %v1319
        %v1384 = vmul.f32 %v1380, %v1334
        %v1385 = vmul.f32 %v1381, %v1349
        %v1386 = vsub.f32 0.0, %v1278
        %v1387 = vsub.f32 0.0, %v1279
        %v1388 = vsub.f32 0.0, %v1280
        %v1389 = vsub.f32 0.0, %v1281
        %v1390 = vmul.f32 %v1386, %v1278
        %v1391 = vmul.f32 %v1387, %v1279
        %v1392 = vmul.f32 %v1388, %v1280
        %v1393 = vmul.f32 %v1389, %v1281
        %v1394 = vmul.f32 %v1390, 1.442695
        %v1395 = vpow.pop %v1394
        %v1396 = vmul.f32 %v1391, 1.442695
        %v1397 = vpow.pop %v1396
        %v1398 = vmul.f32 %v1392, 1.442695
        %v1399 = vpow.pop %v1398
        %v1400 = vmul.f32 %v1393, 1.442695
        %v1401 = vpow.pop %v1400
        %v1402 = vmul.f32 %v1382, %v1395
        %v1403 = vmul.f32 %v1383, %v1397
        %v1404 = vmul.f32 %v1384, %v1399
        %v1405 = vmul.f32 %v1385, %v1401
        %v1406 = vsub.f32 1.0, %v1402
        %v1407 = vsub.f32 1.0, %v1403
        %v1408 = vsub.f32 1.0, %v1404
        %v1409 = vsub.f32 1.0, %v1405
        %v1410 = vmul.f32 %v1274, %v1406
        %v1411 = vmul.f32 %v1275, %v1407
        %v1412 = vmul.f32 %v1276, %v1408
        %v1413 = vmul.f32 %v1277, %v1409
        %v1414 = vadd.f32 %v1410, 1.0
        %v1415 = vadd.f32 %v1411, 1.0
        %v1416 = vadd.f32 %v1412, 1.0
        %v1417 = vadd.f32 %v1413, 1.0
        %v1418 = vmul.f32 %v1262, %v1414
        %v1419 = vmul.f32 %v1263, %v1415
        %v1420 = vmul.f32 %v1264, %v1416
        %v1421 = vmul.f32 %v1265, %v1417
        %v1422 = vld [vmem:[%s17] sm:$0xff]
        %v1423 = vld [vmem:[%s17 + $0x8] sm:$0xff]
        %v1424 = vld [vmem:[%s17 + $0x10] sm:$0xff]
        %v1425 = vld [vmem:[%s17 + $0x18] sm:$0xff]
        %v1426 = vld [vmem:[%s19] sm:$0xff]
        %v1427 = vld [vmem:[%s19 + $0x8] sm:$0xff]
        %v1428 = vld [vmem:[%s19 + $0x10] sm:$0xff]
        %v1429 = vld [vmem:[%s19 + $0x18] sm:$0xff]
        %1431 = vset.pattern.permute.xlu0 0
        %1432 = vperm.xlu0 %1431, %v1426
        %v1433 = vpop.permute.xlu0 %1432
        %1436 = vset.pattern.permute.xlu0 0
        %1437 = vperm.xlu0 %1436, %v1427
        %v1438 = vpop.permute.xlu0 %1437
        %1441 = vset.pattern.permute.xlu0 0
        %1442 = vperm.xlu0 %1441, %v1428
        %v1443 = vpop.permute.xlu0 %1442
        %1446 = vset.pattern.permute.xlu0 0
        %1447 = vperm.xlu0 %1446, %v1429
        %v1448 = vpop.permute.xlu0 %1447
        %vm1450 = vcmask 261120
        %v1452 = vsel %vm1450, %v1422, 0
        %v1455 = vsel %vm1450, %v1423, 0
        %v1458 = vsel %vm1450, %v1424, 0
        %v1461 = vsel %vm1450, %v1425, 0
        %1463 = vmatpush.msra.mxu0 0.0
        %1464 = vmatpush.msra.mxu0 0.0
        %1465 = vmatpush.msra.mxu0 0.0
        %1466 = vmatpush.msra.mxu0 0.0
        %1467 = vmatpush.msra.mxu0 0.0
        %1468 = vmatpush.msra.mxu0 0.0
        %1469 = vmatpush.msra.mxu0 0.0
        %1470 = vmatpush.msra.mxu0 0.0
        %1471 = vmatpush.msra.mxu0 0.0
        %1472 = vmatpush.msra.mxu0 0.0
        %1473 = vmatpush.msra.mxu0 0.0
        %1474 = vmatpush.msra.mxu0 0.0
        %1475 = vmatpush.msra.mxu0 %v1421
        %1476 = vmatpush.msra.mxu0 %v1420
        %1477 = vmatpush.msra.mxu0 %v1419
        %1478 = vmatpush.msra.mxu0 %v1418
        %1479 = vmatmul.f32.gmra.mxu0 %v1452
        %v1480 = vpop.f32.mrf.mxu0
        %v1481 = vadd.f32 %v1433, %v1480
        %1482 = vmatmul.f32.gmra.mxu0 %v1455
        %v1483 = vpop.f32.mrf.mxu0
        %v1484 = vadd.f32 %v1438, %v1483
        %1485 = vmatmul.f32.gmra.mxu0 %v1458
        %v1486 = vpop.f32.mrf.mxu0
        %v1487 = vadd.f32 %v1443, %v1486
        %1488 = vmatmul.f32.gmra.mxu0 %v1461
        %v1489 = vpop.f32.mrf.mxu0
        %v1490 = vadd.f32 %v1448, %v1489
        %1491 = vdwg.mxu0
        %v1492 = vld [vmem:[%s21] sm:$0xff]
        %v1493 = vld [vmem:[%s21 + $0x8] sm:$0xff]
        %v1494 = vld [vmem:[%s21 + $0x10] sm:$0xff]
        %v1495 = vld [vmem:[%s21 + $0x18] sm:$0xff]
        %v1496 = vld [vmem:[%s23] sm:$0xff]
        %v1497 = vld [vmem:[%s23 + $0x8] sm:$0xff]
        %v1498 = vld [vmem:[%s23 + $0x10] sm:$0xff]
        %v1499 = vld [vmem:[%s23 + $0x18] sm:$0xff]
        %v1500 = vadd.f32 %v1481, %v1484
        %v1501 = vadd.f32 %v1500, %v1487
        %v1502 = vadd.f32 %v1501, %v1490
        %v1503 = vrot.slane %v1502, 4
        %v1504 = vadd.f32 %v1502, %v1503
        %v1505 = vrot.slane %v1504, 2
        %v1506 = vadd.f32 %v1504, %v1505
        %v1507 = vrot.slane %v1506, 1
        %v1508 = vadd.f32 %v1506, %v1507
        %v1509 = vmul.f32 %v1508, %v1179
        %v1510 = vsub.f32 %v1481, %v1509
        %v1511 = vsub.f32 %v1484, %v1509
        %v1512 = vsub.f32 %v1487, %v1509
        %v1513 = vsub.f32 %v1490, %v1509
        %v1514 = vmul.f32 %v1510, %v1510
        %v1515 = vmul.f32 %v1511, %v1511
        %v1516 = vmul.f32 %v1512, %v1512
        %v1517 = vmul.f32 %v1513, %v1513
        %v1518 = vadd.f32 %v1514, %v1515
        %v1519 = vadd.f32 %v1518, %v1516
        %v1520 = vadd.f32 %v1519, %v1517
        %v1521 = vrot.slane %v1520, 4
        %v1522 = vadd.f32 %v1520, %v1521
        %v1523 = vrot.slane %v1522, 2
        %v1524 = vadd.f32 %v1522, %v1523
        %v1525 = vrot.slane %v1524, 1
        %v1526 = vadd.f32 %v1524, %v1525
        %v1527 = vmul.f32 %v1526, %v1179
        %v1528 = vadd.f32 %v1527, 1e-05
        %v1529 = vrsqrt.pop %v1528
        %v1530 = vmul.f32 %v1529, %v1528
        %v1531 = vmul.f32 %v1530, %v1529
        %v1532 = vmul.f32 0.5, %v1531
        %v1533 = vsub.f32 1.5, %v1532
        %v1534 = vmul.f32 %v1529, %v1533
        %vm1535 = vweird.f32 %v1528
        %vm1536 = vweird.f32 %v1529
        %vm1537 = vmor %vm1535, %vm1536
        %v1538 = vsel %vm1537, %v1529, %v1534
        %v1539 = vmul.f32 %v1510, %v1538
        %v1540 = vmul.f32 %v1511, %v1538
        %v1541 = vmul.f32 %v1512, %v1538
        %v1542 = vmul.f32 %v1513, %v1538
        %1544 = vset.pattern.permute.xlu0 0
        %1545 = vperm.xlu0 %1544, %v1492
        %v1546 = vpop.permute.xlu0 %1545
        %1549 = vset.pattern.permute.xlu0 0
        %1550 = vperm.xlu0 %1549, %v1493
        %v1551 = vpop.permute.xlu0 %1550
        %1554 = vset.pattern.permute.xlu0 0
        %1555 = vperm.xlu0 %1554, %v1494
        %v1556 = vpop.permute.xlu0 %1555
        %1559 = vset.pattern.permute.xlu0 0
        %1560 = vperm.xlu0 %1559, %v1495
        %v1561 = vpop.permute.xlu0 %1560
        %v1563 = vmul.f32 %v1539, %v1546
        %v1564 = vmul.f32 %v1540, %v1551
        %v1565 = vmul.f32 %v1541, %v1556
        %v1566 = vmul.f32 %v1542, %v1561
        %1568 = vset.pattern.permute.xlu0 0
        %1569 = vperm.xlu0 %1568, %v1496
        %v1570 = vpop.permute.xlu0 %1569
        %1573 = vset.pattern.permute.xlu0 0
        %1574 = vperm.xlu0 %1573, %v1497
        %v1575 = vpop.permute.xlu0 %1574
        %1578 = vset.pattern.permute.xlu0 0
        %1579 = vperm.xlu0 %1578, %v1498
        %v1580 = vpop.permute.xlu0 %1579
        %1583 = vset.pattern.permute.xlu0 0
        %1584 = vperm.xlu0 %1583, %v1499
        %v1585 = vpop.permute.xlu0 %1584
        %v1587 = vadd.f32 %v1563, %v1570
        %v1588 = vadd.f32 %v1564, %v1575
        %v1589 = vadd.f32 %v1565, %v1580
        %v1590 = vadd.f32 %v1566, %v1585
        %v1591 = vmul.f32 %v1587, 0.5
        %v1592 = vmul.f32 %v1588, 0.5
        %v1593 = vmul.f32 %v1589, 0.5
        %v1594 = vmul.f32 %v1590, 0.5
        %v1595 = vmul.f32 %v1587, 0.70710677
        %v1596 = vmul.f32 %v1588, 0.70710677
        %v1597 = vmul.f32 %v1589, 0.70710677
        %v1598 = vmul.f32 %v1590, 0.70710677
        %vm1599 = vcmp.ge.f32.partialorder %v1595, 0.0
        %vm1600 = vcmp.ge.f32.partialorder %v1596, 0.0
        %vm1601 = vcmp.ge.f32.partialorder %v1597, 0.0
        %vm1602 = vcmp.ge.f32.partialorder %v1598, 0.0
        %v1603 = vsel %vm1599, 1.0, -1.0
        %v1604 = vsel %vm1600, 1.0, -1.0
        %v1605 = vsel %vm1601, 1.0, -1.0
        %v1606 = vsel %vm1602, 1.0, -1.0
        %v1607 = vand.u32 2147483647, %v1595
        %v1608 = vand.u32 2147483647, %v1596
        %v1609 = vand.u32 2147483647, %v1597
        %v1610 = vand.u32 2147483647, %v1598
        %v1611 = vmul.f32 %v1607, 0.3275911
        %v1612 = vmul.f32 %v1608, 0.3275911
        %v1613 = vmul.f32 %v1609, 0.3275911
        %v1614 = vmul.f32 %v1610, 0.3275911
        %v1615 = vadd.f32 %v1611, 1.0
        %v1616 = vadd.f32 %v1612, 1.0
        %v1617 = vadd.f32 %v1613, 1.0
        %v1618 = vadd.f32 %v1614, 1.0
        %v1619 = vrcp.pop %v1615
        %v1620 = vmul.f32 %v1615, %v1619
        %v1621 = vsub.f32 1.0, %v1620
        %v1622 = vmul.f32 %v1619, %v1621
        %v1623 = vadd.f32 %v1619, %v1622
        %vm1624 = vweird.f32 %v1615
        %vm1625 = vweird.f32 %v1619
        %vm1626 = vmor %vm1624, %vm1625
        %v1627 = vsel %vm1626, %v1619, %v1623
        %v1628 = vand.u32 2147483647, %v1615
        %vm1629 = vcmp.eq.f32.partialorder %v1628, 8.507059e+37
        %v1630 = vand.u32 %v1615, 2147483648
        %v1631 = vor.u32 1.1754944e-38, %v1630
        %v1632 = vsel %vm1629, %v1631, %v1627
        %v1633 = vmul.f32 1.0, %v1632
        %v1634 = vrcp.pop %v1616
        %v1635 = vmul.f32 %v1616, %v1634
        %v1636 = vsub.f32 1.0, %v1635
        %v1637 = vmul.f32 %v1634, %v1636
        %v1638 = vadd.f32 %v1634, %v1637
        %vm1639 = vweird.f32 %v1616
        %vm1640 = vweird.f32 %v1634
        %vm1641 = vmor %vm1639, %vm1640
        %v1642 = vsel %vm1641, %v1634, %v1638
        %v1643 = vand.u32 2147483647, %v1616
        %vm1644 = vcmp.eq.f32.partialorder %v1643, 8.507059e+37
        %v1645 = vand.u32 %v1616, 2147483648
        %v1646 = vor.u32 1.1754944e-38, %v1645
        %v1647 = vsel %vm1644, %v1646, %v1642
        %v1648 = vmul.f32 1.0, %v1647
        %v1649 = vrcp.pop %v1617
        %v1650 = vmul.f32 %v1617, %v1649
        %v1651 = vsub.f32 1.0, %v1650
        %v1652 = vmul.f32 %v1649, %v1651
        %v1653 = vadd.f32 %v1649, %v1652
        %vm1654 = vweird.f32 %v1617
        %vm1655 = vweird.f32 %v1649
        %vm1656 = vmor %vm1654, %vm1655
        %v1657 = vsel %vm1656, %v1649, %v1653
        %v1658 = vand.u32 2147483647, %v1617
        %vm1659 = vcmp.eq.f32.partialorder %v1658, 8.507059e+37
        %v1660 = vand.u32 %v1617, 2147483648
        %v1661 = vor.u32 1.1754944e-38, %v1660
        %v1662 = vsel %vm1659, %v1661, %v1657
        %v1663 = vmul.f32 1.0, %v1662
        %v1664 = vrcp.pop %v1618
        %v1665 = vmul.f32 %v1618, %v1664
        %v1666 = vsub.f32 1.0, %v1665
        %v1667 = vmul.f32 %v1664, %v1666
        %v1668 = vadd.f32 %v1664, %v1667
        %vm1669 = vweird.f32 %v1618
        %vm1670 = vweird.f32 %v1664
        %vm1671 = vmor %vm1669, %vm1670
        %v1672 = vsel %vm1671, %v1664, %v1668
        %v1673 = vand.u32 2147483647, %v1618
        %vm1674 = vcmp.eq.f32.partialorder %v1673, 8.507059e+37
        %v1675 = vand.u32 %v1618, 2147483648
        %v1676 = vor.u32 1.1754944e-38, %v1675
        %v1677 = vsel %vm1674, %v1676, %v1672
        %v1678 = vmul.f32 1.0, %v1677
        %v1679 = vmul.f32 %v1633, 1.0614054
        %v1680 = vmul.f32 %v1648, 1.0614054
        %v1681 = vmul.f32 %v1663, 1.0614054
        %v1682 = vmul.f32 %v1678, 1.0614054
        %v1683 = vadd.f32 %v1679, -1.4531521
        %v1684 = vadd.f32 %v1680, -1.4531521
        %v1685 = vadd.f32 %v1681, -1.4531521
        %v1686 = vadd.f32 %v1682, -1.4531521
        %v1687 = vmul.f32 %v1683, %v1633
        %v1688 = vmul.f32 %v1684, %v1648
        %v1689 = vmul.f32 %v1685, %v1663
        %v1690 = vmul.f32 %v1686, %v1678
        %v1691 = vadd.f32 %v1687, 1.4214138
        %v1692 = vadd.f32 %v1688, 1.4214138
        %v1693 = vadd.f32 %v1689, 1.4214138
        %v1694 = vadd.f32 %v1690, 1.4214138
        %v1695 = vmul.f32 %v1691, %v1633
        %v1696 = vmul.f32 %v1692, %v1648
        %v1697 = vmul.f32 %v1693, %v1663
        %v1698 = vmul.f32 %v1694, %v1678
        %v1699 = vadd.f32 %v1695, -0.28449672
        %v1700 = vadd.f32 %v1696, -0.28449672
        %v1701 = vadd.f32 %v1697, -0.28449672
        %v1702 = vadd.f32 %v1698, -0.28449672
        %v1703 = vmul.f32 %v1699, %v1633
        %v1704 = vmul.f32 %v1700, %v1648
        %v1705 = vmul.f32 %v1701, %v1663
        %v1706 = vmul.f32 %v1702, %v1678
        %v1707 = vadd.f32 %v1703, 0.2548296
        %v1708 = vadd.f32 %v1704, 0.2548296
        %v1709 = vadd.f32 %v1705, 0.2548296
        %v1710 = vadd.f32 %v1706, 0.2548296
        %v1711 = vmul.f32 %v1707, %v1633
        %v1712 = vmul.f32 %v1708, %v1648
        %v1713 = vmul.f32 %v1709, %v1663
        %v1714 = vmul.f32 %v1710, %v1678
        %v1715 = vsub.f32 0.0, %v1607
        %v1716 = vsub.f32 0.0, %v1608
        %v1717 = vsub.f32 0.0, %v1609
        %v1718 = vsub.f32 0.0, %v1610
        %v1719 = vmul.f32 %v1715, %v1607
        %v1720 = vmul.f32 %v1716, %v1608
        %v1721 = vmul.f32 %v1717, %v1609
        %v1722 = vmul.f32 %v1718, %v1610
        %v1723 = vmul.f32 %v1719, 1.442695
        %v1724 = vpow.pop %v1723
        %v1725 = vmul.f32 %v1720, 1.442695
        %v1726 = vpow.pop %v1725
        %v1727 = vmul.f32 %v1721, 1.442695
        %v1728 = vpow.pop %v1727
        %v1729 = vmul.f32 %v1722, 1.442695
        %v1730 = vpow.pop %v1729
        %v1731 = vmul.f32 %v1711, %v1724
        %v1732 = vmul.f32 %v1712, %v1726
        %v1733 = vmul.f32 %v1713, %v1728
        %v1734 = vmul.f32 %v1714, %v1730
        %v1735 = vsub.f32 1.0, %v1731
        %v1736 = vsub.f32 1.0, %v1732
        %v1737 = vsub.f32 1.0, %v1733
        %v1738 = vsub.f32 1.0, %v1734
        %v1739 = vmul.f32 %v1603, %v1735
        %v1740 = vmul.f32 %v1604, %v1736
        %v1741 = vmul.f32 %v1605, %v1737
        %v1742 = vmul.f32 %v1606, %v1738
        %v1743 = vadd.f32 %v1739, 1.0
        %v1744 = vadd.f32 %v1740, 1.0
        %v1745 = vadd.f32 %v1741, 1.0
        %v1746 = vadd.f32 %v1742, 1.0
        %v1747 = vmul.f32 %v1591, %v1743
        %v1748 = vmul.f32 %v1592, %v1744
        %v1749 = vmul.f32 %v1593, %v1745
        %v1750 = vmul.f32 %v1594, %v1746
        %v1751 = vadd.f32 %v1005, %v1747
        %v1752 = vadd.f32 %v1006, %v1748
        %v1753 = vadd.f32 %v1007, %v1749
        %v1754 = vadd.f32 %v1008, %v1750
        %v1755 = vmul.f32 %v1751, %v1012
        %v1756 = vmul.f32 %v1752, %v1012
        %v1757 = vmul.f32 %v1753, %v1012
        %v1758 = vmul.f32 %v1754, %v1012
        %s1759 = scalar_lea.vmem %s9, 32
        %v1760 = vld [vmem:[%s1759] sm:$0xff]
        %v1761 = vld [vmem:[%s1759 + $0x8] sm:$0xff]
        %v1762 = vld [vmem:[%s1759 + $0x10] sm:$0xff]
        %v1763 = vld [vmem:[%s1759 + $0x18] sm:$0xff]
        %1764 = vrot.lane.b32.xlu0 %v1755, 3
        %v1765 = vpop.permute.xlu0 %1764
        %1766 = vrot.lane.b32.xlu0 %v1756, 3
        %v1767 = vpop.permute.xlu0 %1766
        %1768 = vrot.lane.b32.xlu0 %v1757, 3
        %v1769 = vpop.permute.xlu0 %1768
        %1770 = vrot.lane.b32.xlu0 %v1758, 3
        %v1771 = vpop.permute.xlu0 %1770
        %vm1772 = vcmp.ge.s32.totalorder %v1010, 3
        %v1773 = vsel %vm1772, 1, 0
        %vm1774 = vcmp.eq.s32.totalorder %v1773, 1
        %v1775 = vsel %vm1774, %v1765, 0.0
        %v1776 = vsel %vm1774, %v1767, 0.0
        %v1777 = vsel %vm1774, %v1769, 0.0
        %v1778 = vsel %vm1774, %v1771, 0.0
        %1780 = vset.pattern.permute.xlu0 0
        %1781 = vperm.xlu0 %1780, %v1760
        %v1782 = vpop.permute.xlu0 %1781
        %1785 = vset.pattern.permute.xlu0 0
        %1786 = vperm.xlu0 %1785, %v1761
        %v1787 = vpop.permute.xlu0 %1786
        %1790 = vset.pattern.permute.xlu0 0
        %1791 = vperm.xlu0 %1790, %v1762
        %v1792 = vpop.permute.xlu0 %1791
        %1795 = vset.pattern.permute.xlu0 0
        %1796 = vperm.xlu0 %1795, %v1763
        %v1797 = vpop.permute.xlu0 %1796
        %v1799 = vmul.f32 %v1782, %v1775
        %v1800 = vmul.f32 %v1787, %v1776
        %v1801 = vmul.f32 %v1792, %v1777
        %v1802 = vmul.f32 %v1797, %v1778
        %v1803 = vadd.f32 %v1799, 0.0
        %v1804 = vadd.f32 %v1800, 0.0
        %v1805 = vadd.f32 %v1801, 0.0
        %v1806 = vadd.f32 %v1802, 0.0
        %1807 = vset.pattern.permute.xlu0 1
        %1808 = vperm.xlu0 %1807, %v1760
        %v1809 = vpop.permute.xlu0 %1808
        %1811 = vset.pattern.permute.xlu0 1
        %1812 = vperm.xlu0 %1811, %v1761
        %v1813 = vpop.permute.xlu0 %1812
        %1815 = vset.pattern.permute.xlu0 1
        %1816 = vperm.xlu0 %1815, %v1762
        %v1817 = vpop.permute.xlu0 %1816
        %1819 = vset.pattern.permute.xlu0 1
        %1820 = vperm.xlu0 %1819, %v1763
        %v1821 = vpop.permute.xlu0 %1820
        %v1823 = vmul.f32 %v1809, %v1755
        %v1824 = vmul.f32 %v1813, %v1756
        %v1825 = vmul.f32 %v1817, %v1757
        %v1826 = vmul.f32 %v1821, %v1758
        %v1827 = vadd.f32 %v1803, %v1823
        %v1828 = vadd.f32 %v1804, %v1824
        %v1829 = vadd.f32 %v1805, %v1825
        %v1830 = vadd.f32 %v1806, %v1826
        %1831 = vrot.lane.b32.xlu0 %v1755, 125
        %v1832 = vpop.permute.xlu0 %1831
        %1833 = vrot.lane.b32.xlu0 %v1756, 125
        %v1834 = vpop.permute.xlu0 %1833
        %1835 = vrot.lane.b32.xlu0 %v1757, 125
        %v1836 = vpop.permute.xlu0 %1835
        %1837 = vrot.lane.b32.xlu0 %v1758, 125
        %v1838 = vpop.permute.xlu0 %1837
        %vm1839 = vcmp.lt.s32.totalorder %v1010, 125
        %v1840 = vsel %vm1839, 1, 0
        %vm1841 = vcmp.eq.s32.totalorder %v1840, 1
        %v1842 = vsel %vm1841, %v1832, 0.0
        %v1843 = vsel %vm1841, %v1834, 0.0
        %v1844 = vsel %vm1841, %v1836, 0.0
        %v1845 = vsel %vm1841, %v1838, 0.0
        %1846 = vset.pattern.permute.xlu0 2
        %1847 = vperm.xlu0 %1846, %v1760
        %v1848 = vpop.permute.xlu0 %1847
        %1850 = vset.pattern.permute.xlu0 2
        %1851 = vperm.xlu0 %1850, %v1761
        %v1852 = vpop.permute.xlu0 %1851
        %1854 = vset.pattern.permute.xlu0 2
        %1855 = vperm.xlu0 %1854, %v1762
        %v1856 = vpop.permute.xlu0 %1855
        %1858 = vset.pattern.permute.xlu0 2
        %1859 = vperm.xlu0 %1858, %v1763
        %v1860 = vpop.permute.xlu0 %1859
        %v1862 = vmul.f32 %v1848, %v1842
        %v1863 = vmul.f32 %v1852, %v1843
        %v1864 = vmul.f32 %v1856, %v1844
        %v1865 = vmul.f32 %v1860, %v1845
        %v1866 = vadd.f32 %v1827, %v1862
        %v1867 = vadd.f32 %v1828, %v1863
        %v1868 = vadd.f32 %v1829, %v1864
        %v1869 = vadd.f32 %v1830, %v1865
        %s1870 = scalar_lea.vmem %s11, 32
        %v1871 = vld [vmem:[%s1870] sm:$0xff]
        %v1872 = vld [vmem:[%s1870 + $0x8] sm:$0xff]
        %v1873 = vld [vmem:[%s1870 + $0x10] sm:$0xff]
        %v1874 = vld [vmem:[%s1870 + $0x18] sm:$0xff]
        %1876 = vset.pattern.permute.xlu0 0
        %1877 = vperm.xlu0 %1876, %v1871
        %v1878 = vpop.permute.xlu0 %1877
        %1881 = vset.pattern.permute.xlu0 0
        %1882 = vperm.xlu0 %1881, %v1872
        %v1883 = vpop.permute.xlu0 %1882
        %1886 = vset.pattern.permute.xlu0 0
        %1887 = vperm.xlu0 %1886, %v1873
        %v1888 = vpop.permute.xlu0 %1887
        %1891 = vset.pattern.permute.xlu0 0
        %1892 = vperm.xlu0 %1891, %v1874
        %v1893 = vpop.permute.xlu0 %1892
        %v1895 = vadd.f32 %v1866, %v1878
        %v1896 = vadd.f32 %v1867, %v1883
        %v1897 = vadd.f32 %v1868, %v1888
        %v1898 = vadd.f32 %v1869, %v1893
        %s1899 = scalar_lea.vmem %s13, 32
        %v1900 = vld [vmem:[%s1899] sm:$0xff]
        %v1901 = vld [vmem:[%s1899 + $0x8] sm:$0xff]
        %v1902 = vld [vmem:[%s1899 + $0x10] sm:$0xff]
        %v1903 = vld [vmem:[%s1899 + $0x18] sm:$0xff]
        %s1904 = scalar_lea.vmem %s15, 32
        %v1905 = vld [vmem:[%s1904] sm:$0xff]
        %v1906 = vld [vmem:[%s1904 + $0x8] sm:$0xff]
        %v1907 = vld [vmem:[%s1904 + $0x10] sm:$0xff]
        %v1908 = vld [vmem:[%s1904 + $0x18] sm:$0xff]
        %v1909 = vadd.f32 %v1895, %v1896
        %v1910 = vadd.f32 %v1909, %v1897
        %v1911 = vadd.f32 %v1910, %v1898
        %v1912 = vrot.slane %v1911, 4
        %v1913 = vadd.f32 %v1911, %v1912
        %v1914 = vrot.slane %v1913, 2
        %v1915 = vadd.f32 %v1913, %v1914
        %v1916 = vrot.slane %v1915, 1
        %v1917 = vadd.f32 %v1915, %v1916
        %v1918 = vmul.f32 %v1917, %v1179
        %v1919 = vsub.f32 %v1895, %v1918
        %v1920 = vsub.f32 %v1896, %v1918
        %v1921 = vsub.f32 %v1897, %v1918
        %v1922 = vsub.f32 %v1898, %v1918
        %v1923 = vmul.f32 %v1919, %v1919
        %v1924 = vmul.f32 %v1920, %v1920
        %v1925 = vmul.f32 %v1921, %v1921
        %v1926 = vmul.f32 %v1922, %v1922
        %v1927 = vadd.f32 %v1923, %v1924
        %v1928 = vadd.f32 %v1927, %v1925
        %v1929 = vadd.f32 %v1928, %v1926
        %v1930 = vrot.slane %v1929, 4
        %v1931 = vadd.f32 %v1929, %v1930
        %v1932 = vrot.slane %v1931, 2
        %v1933 = vadd.f32 %v1931, %v1932
        %v1934 = vrot.slane %v1933, 1
        %v1935 = vadd.f32 %v1933, %v1934
        %v1936 = vmul.f32 %v1935, %v1179
        %v1937 = vadd.f32 %v1936, 1e-05
        %v1938 = vrsqrt.pop %v1937
        %v1939 = vmul.f32 %v1938, %v1937
        %v1940 = vmul.f32 %v1939, %v1938
        %v1941 = vmul.f32 0.5, %v1940
        %v1942 = vsub.f32 1.5, %v1941
        %v1943 = vmul.f32 %v1938, %v1942
        %vm1944 = vweird.f32 %v1937
        %vm1945 = vweird.f32 %v1938
        %vm1946 = vmor %vm1944, %vm1945
        %v1947 = vsel %vm1946, %v1938, %v1943
        %v1948 = vmul.f32 %v1919, %v1947
        %v1949 = vmul.f32 %v1920, %v1947
        %v1950 = vmul.f32 %v1921, %v1947
        %v1951 = vmul.f32 %v1922, %v1947
        %1953 = vset.pattern.permute.xlu0 0
        %1954 = vperm.xlu0 %1953, %v1900
        %v1955 = vpop.permute.xlu0 %1954
        %1958 = vset.pattern.permute.xlu0 0
        %1959 = vperm.xlu0 %1958, %v1901
        %v1960 = vpop.permute.xlu0 %1959
        %1963 = vset.pattern.permute.xlu0 0
        %1964 = vperm.xlu0 %1963, %v1902
        %v1965 = vpop.permute.xlu0 %1964
        %1968 = vset.pattern.permute.xlu0 0
        %1969 = vperm.xlu0 %1968, %v1903
        %v1970 = vpop.permute.xlu0 %1969
        %v1972 = vmul.f32 %v1948, %v1955
        %v1973 = vmul.f32 %v1949, %v1960
        %v1974 = vmul.f32 %v1950, %v1965
        %v1975 = vmul.f32 %v1951, %v1970
        %1977 = vset.pattern.permute.xlu0 0
        %1978 = vperm.xlu0 %1977, %v1905
        %v1979 = vpop.permute.xlu0 %1978
        %1982 = vset.pattern.permute.xlu0 0
        %1983 = vperm.xlu0 %1982, %v1906
        %v1984 = vpop.permute.xlu0 %1983
        %1987 = vset.pattern.permute.xlu0 0
        %1988 = vperm.xlu0 %1987, %v1907
        %v1989 = vpop.permute.xlu0 %1988
        %1992 = vset.pattern.permute.xlu0 0
        %1993 = vperm.xlu0 %1992, %v1908
        %v1994 = vpop.permute.xlu0 %1993
        %v1996 = vadd.f32 %v1972, %v1979
        %v1997 = vadd.f32 %v1973, %v1984
        %v1998 = vadd.f32 %v1974, %v1989
        %v1999 = vadd.f32 %v1975, %v1994
        %v2000 = vmul.f32 %v1996, 0.5
        %v2001 = vmul.f32 %v1997, 0.5
        %v2002 = vmul.f32 %v1998, 0.5
        %v2003 = vmul.f32 %v1999, 0.5
        %v2004 = vmul.f32 %v1996, 0.70710677
        %v2005 = vmul.f32 %v1997, 0.70710677
        %v2006 = vmul.f32 %v1998, 0.70710677
        %v2007 = vmul.f32 %v1999, 0.70710677
        %vm2008 = vcmp.ge.f32.partialorder %v2004, 0.0
        %vm2009 = vcmp.ge.f32.partialorder %v2005, 0.0
        %vm2010 = vcmp.ge.f32.partialorder %v2006, 0.0
        %vm2011 = vcmp.ge.f32.partialorder %v2007, 0.0
        %v2012 = vsel %vm2008, 1.0, -1.0
        %v2013 = vsel %vm2009, 1.0, -1.0
        %v2014 = vsel %vm2010, 1.0, -1.0
        %v2015 = vsel %vm2011, 1.0, -1.0
        %v2016 = vand.u32 2147483647, %v2004
        %v2017 = vand.u32 2147483647, %v2005
        %v2018 = vand.u32 2147483647, %v2006
        %v2019 = vand.u32 2147483647, %v2007
        %v2020 = vmul.f32 %v2016, 0.3275911
        %v2021 = vmul.f32 %v2017, 0.3275911
        %v2022 = vmul.f32 %v2018, 0.3275911
        %v2023 = vmul.f32 %v2019, 0.3275911
        %v2024 = vadd.f32 %v2020, 1.0
        %v2025 = vadd.f32 %v2021, 1.0
        %v2026 = vadd.f32 %v2022, 1.0
        %v2027 = vadd.f32 %v2023, 1.0
        %v2028 = vrcp.pop %v2024
        %v2029 = vmul.f32 %v2024, %v2028
        %v2030 = vsub.f32 1.0, %v2029
        %v2031 = vmul.f32 %v2028, %v2030
        %v2032 = vadd.f32 %v2028, %v2031
        %vm2033 = vweird.f32 %v2024
        %vm2034 = vweird.f32 %v2028
        %vm2035 = vmor %vm2033, %vm2034
        %v2036 = vsel %vm2035, %v2028, %v2032
        %v2037 = vand.u32 2147483647, %v2024
        %vm2038 = vcmp.eq.f32.partialorder %v2037, 8.507059e+37
        %v2039 = vand.u32 %v2024, 2147483648
        %v2040 = vor.u32 1.1754944e-38, %v2039
        %v2041 = vsel %vm2038, %v2040, %v2036
        %v2042 = vmul.f32 1.0, %v2041
        %v2043 = vrcp.pop %v2025
        %v2044 = vmul.f32 %v2025, %v2043
        %v2045 = vsub.f32 1.0, %v2044
        %v2046 = vmul.f32 %v2043, %v2045
        %v2047 = vadd.f32 %v2043, %v2046
        %vm2048 = vweird.f32 %v2025
        %vm2049 = vweird.f32 %v2043
        %vm2050 = vmor %vm2048, %vm2049
        %v2051 = vsel %vm2050, %v2043, %v2047
        %v2052 = vand.u32 2147483647, %v2025
        %vm2053 = vcmp.eq.f32.partialorder %v2052, 8.507059e+37
        %v2054 = vand.u32 %v2025, 2147483648
        %v2055 = vor.u32 1.1754944e-38, %v2054
        %v2056 = vsel %vm2053, %v2055, %v2051
        %v2057 = vmul.f32 1.0, %v2056
        %v2058 = vrcp.pop %v2026
        %v2059 = vmul.f32 %v2026, %v2058
        %v2060 = vsub.f32 1.0, %v2059
        %v2061 = vmul.f32 %v2058, %v2060
        %v2062 = vadd.f32 %v2058, %v2061
        %vm2063 = vweird.f32 %v2026
        %vm2064 = vweird.f32 %v2058
        %vm2065 = vmor %vm2063, %vm2064
        %v2066 = vsel %vm2065, %v2058, %v2062
        %v2067 = vand.u32 2147483647, %v2026
        %vm2068 = vcmp.eq.f32.partialorder %v2067, 8.507059e+37
        %v2069 = vand.u32 %v2026, 2147483648
        %v2070 = vor.u32 1.1754944e-38, %v2069
        %v2071 = vsel %vm2068, %v2070, %v2066
        %v2072 = vmul.f32 1.0, %v2071
        %v2073 = vrcp.pop %v2027
        %v2074 = vmul.f32 %v2027, %v2073
        %v2075 = vsub.f32 1.0, %v2074
        %v2076 = vmul.f32 %v2073, %v2075
        %v2077 = vadd.f32 %v2073, %v2076
        %vm2078 = vweird.f32 %v2027
        %vm2079 = vweird.f32 %v2073
        %vm2080 = vmor %vm2078, %vm2079
        %v2081 = vsel %vm2080, %v2073, %v2077
        %v2082 = vand.u32 2147483647, %v2027
        %vm2083 = vcmp.eq.f32.partialorder %v2082, 8.507059e+37
        %v2084 = vand.u32 %v2027, 2147483648
        %v2085 = vor.u32 1.1754944e-38, %v2084
        %v2086 = vsel %vm2083, %v2085, %v2081
        %v2087 = vmul.f32 1.0, %v2086
        %v2088 = vmul.f32 %v2042, 1.0614054
        %v2089 = vmul.f32 %v2057, 1.0614054
        %v2090 = vmul.f32 %v2072, 1.0614054
        %v2091 = vmul.f32 %v2087, 1.0614054
        %v2092 = vadd.f32 %v2088, -1.4531521
        %v2093 = vadd.f32 %v2089, -1.4531521
        %v2094 = vadd.f32 %v2090, -1.4531521
        %v2095 = vadd.f32 %v2091, -1.4531521
        %v2096 = vmul.f32 %v2092, %v2042
        %v2097 = vmul.f32 %v2093, %v2057
        %v2098 = vmul.f32 %v2094, %v2072
        %v2099 = vmul.f32 %v2095, %v2087
        %v2100 = vadd.f32 %v2096, 1.4214138
        %v2101 = vadd.f32 %v2097, 1.4214138
        %v2102 = vadd.f32 %v2098, 1.4214138
        %v2103 = vadd.f32 %v2099, 1.4214138
        %v2104 = vmul.f32 %v2100, %v2042
        %v2105 = vmul.f32 %v2101, %v2057
        %v2106 = vmul.f32 %v2102, %v2072
        %v2107 = vmul.f32 %v2103, %v2087
        %v2108 = vadd.f32 %v2104, -0.28449672
        %v2109 = vadd.f32 %v2105, -0.28449672
        %v2110 = vadd.f32 %v2106, -0.28449672
        %v2111 = vadd.f32 %v2107, -0.28449672
        %v2112 = vmul.f32 %v2108, %v2042
        %v2113 = vmul.f32 %v2109, %v2057
        %v2114 = vmul.f32 %v2110, %v2072
        %v2115 = vmul.f32 %v2111, %v2087
        %v2116 = vadd.f32 %v2112, 0.2548296
        %v2117 = vadd.f32 %v2113, 0.2548296
        %v2118 = vadd.f32 %v2114, 0.2548296
        %v2119 = vadd.f32 %v2115, 0.2548296
        %v2120 = vmul.f32 %v2116, %v2042
        %v2121 = vmul.f32 %v2117, %v2057
        %v2122 = vmul.f32 %v2118, %v2072
        %v2123 = vmul.f32 %v2119, %v2087
        %v2124 = vsub.f32 0.0, %v2016
        %v2125 = vsub.f32 0.0, %v2017
        %v2126 = vsub.f32 0.0, %v2018
        %v2127 = vsub.f32 0.0, %v2019
        %v2128 = vmul.f32 %v2124, %v2016
        %v2129 = vmul.f32 %v2125, %v2017
        %v2130 = vmul.f32 %v2126, %v2018
        %v2131 = vmul.f32 %v2127, %v2019
        %v2132 = vmul.f32 %v2128, 1.442695
        %v2133 = vpow.pop %v2132
        %v2134 = vmul.f32 %v2129, 1.442695
        %v2135 = vpow.pop %v2134
        %v2136 = vmul.f32 %v2130, 1.442695
        %v2137 = vpow.pop %v2136
        %v2138 = vmul.f32 %v2131, 1.442695
        %v2139 = vpow.pop %v2138
        %v2140 = vmul.f32 %v2120, %v2133
        %v2141 = vmul.f32 %v2121, %v2135
        %v2142 = vmul.f32 %v2122, %v2137
        %v2143 = vmul.f32 %v2123, %v2139
        %v2144 = vsub.f32 1.0, %v2140
        %v2145 = vsub.f32 1.0, %v2141
        %v2146 = vsub.f32 1.0, %v2142
        %v2147 = vsub.f32 1.0, %v2143
        %v2148 = vmul.f32 %v2012, %v2144
        %v2149 = vmul.f32 %v2013, %v2145
        %v2150 = vmul.f32 %v2014, %v2146
        %v2151 = vmul.f32 %v2015, %v2147
        %v2152 = vadd.f32 %v2148, 1.0
        %v2153 = vadd.f32 %v2149, 1.0
        %v2154 = vadd.f32 %v2150, 1.0
        %v2155 = vadd.f32 %v2151, 1.0
        %v2156 = vmul.f32 %v2000, %v2152
        %v2157 = vmul.f32 %v2001, %v2153
        %v2158 = vmul.f32 %v2002, %v2154
        %v2159 = vmul.f32 %v2003, %v2155
        %s2160 = scalar_lea.vmem %s17, 32
        %v2161 = vld [vmem:[%s2160] sm:$0xff]
        %v2162 = vld [vmem:[%s2160 + $0x8] sm:$0xff]
        %v2163 = vld [vmem:[%s2160 + $0x10] sm:$0xff]
        %v2164 = vld [vmem:[%s2160 + $0x18] sm:$0xff]
        %s2165 = scalar_lea.vmem %s19, 32
        %v2166 = vld [vmem:[%s2165] sm:$0xff]
        %v2167 = vld [vmem:[%s2165 + $0x8] sm:$0xff]
        %v2168 = vld [vmem:[%s2165 + $0x10] sm:$0xff]
        %v2169 = vld [vmem:[%s2165 + $0x18] sm:$0xff]
        %2171 = vset.pattern.permute.xlu0 0
        %2172 = vperm.xlu0 %2171, %v2166
        %v2173 = vpop.permute.xlu0 %2172
        %2176 = vset.pattern.permute.xlu0 0
        %2177 = vperm.xlu0 %2176, %v2167
        %v2178 = vpop.permute.xlu0 %2177
        %2181 = vset.pattern.permute.xlu0 0
        %2182 = vperm.xlu0 %2181, %v2168
        %v2183 = vpop.permute.xlu0 %2182
        %2186 = vset.pattern.permute.xlu0 0
        %2187 = vperm.xlu0 %2186, %v2169
        %v2188 = vpop.permute.xlu0 %2187
        %v2191 = vsel %vm1450, %v2161, 0
        %v2194 = vsel %vm1450, %v2162, 0
        %v2197 = vsel %vm1450, %v2163, 0
        %v2200 = vsel %vm1450, %v2164, 0
        %2202 = vmatpush.msra.mxu0 0.0
        %2203 = vmatpush.msra.mxu0 0.0
        %2204 = vmatpush.msra.mxu0 0.0
        %2205 = vmatpush.msra.mxu0 0.0
        %2206 = vmatpush.msra.mxu0 0.0
        %2207 = vmatpush.msra.mxu0 0.0
        %2208 = vmatpush.msra.mxu0 0.0
        %2209 = vmatpush.msra.mxu0 0.0
        %2210 = vmatpush.msra.mxu0 0.0
        %2211 = vmatpush.msra.mxu0 0.0
        %2212 = vmatpush.msra.mxu0 0.0
        %2213 = vmatpush.msra.mxu0 0.0
        %2214 = vmatpush.msra.mxu0 %v2159
        %2215 = vmatpush.msra.mxu0 %v2158
        %2216 = vmatpush.msra.mxu0 %v2157
        %2217 = vmatpush.msra.mxu0 %v2156
        %2218 = vmatmul.f32.gmra.mxu0 %v2191
        %v2219 = vpop.f32.mrf.mxu0
        %v2220 = vadd.f32 %v2173, %v2219
        %2221 = vmatmul.f32.gmra.mxu0 %v2194
        %v2222 = vpop.f32.mrf.mxu0
        %v2223 = vadd.f32 %v2178, %v2222
        %2224 = vmatmul.f32.gmra.mxu0 %v2197
        %v2225 = vpop.f32.mrf.mxu0
        %v2226 = vadd.f32 %v2183, %v2225
        %2227 = vmatmul.f32.gmra.mxu0 %v2200
        %v2228 = vpop.f32.mrf.mxu0
        %v2229 = vadd.f32 %v2188, %v2228
        %2230 = vdwg.mxu0
        %s2231 = scalar_lea.vmem %s21, 32
        %v2232 = vld [vmem:[%s2231] sm:$0xff]
        %v2233 = vld [vmem:[%s2231 + $0x8] sm:$0xff]
        %v2234 = vld [vmem:[%s2231 + $0x10] sm:$0xff]
        %v2235 = vld [vmem:[%s2231 + $0x18] sm:$0xff]
        %s2236 = scalar_lea.vmem %s23, 32
        %v2237 = vld [vmem:[%s2236] sm:$0xff]
        %v2238 = vld [vmem:[%s2236 + $0x8] sm:$0xff]
        %v2239 = vld [vmem:[%s2236 + $0x10] sm:$0xff]
        %v2240 = vld [vmem:[%s2236 + $0x18] sm:$0xff]
        %v2241 = vadd.f32 %v2220, %v2223
        %v2242 = vadd.f32 %v2241, %v2226
        %v2243 = vadd.f32 %v2242, %v2229
        %v2244 = vrot.slane %v2243, 4
        %v2245 = vadd.f32 %v2243, %v2244
        %v2246 = vrot.slane %v2245, 2
        %v2247 = vadd.f32 %v2245, %v2246
        %v2248 = vrot.slane %v2247, 1
        %v2249 = vadd.f32 %v2247, %v2248
        %v2250 = vmul.f32 %v2249, %v1179
        %v2251 = vsub.f32 %v2220, %v2250
        %v2252 = vsub.f32 %v2223, %v2250
        %v2253 = vsub.f32 %v2226, %v2250
        %v2254 = vsub.f32 %v2229, %v2250
        %v2255 = vmul.f32 %v2251, %v2251
        %v2256 = vmul.f32 %v2252, %v2252
        %v2257 = vmul.f32 %v2253, %v2253
        %v2258 = vmul.f32 %v2254, %v2254
        %v2259 = vadd.f32 %v2255, %v2256
        %v2260 = vadd.f32 %v2259, %v2257
        %v2261 = vadd.f32 %v2260, %v2258
        %v2262 = vrot.slane %v2261, 4
        %v2263 = vadd.f32 %v2261, %v2262
        %v2264 = vrot.slane %v2263, 2
        %v2265 = vadd.f32 %v2263, %v2264
        %v2266 = vrot.slane %v2265, 1
        %v2267 = vadd.f32 %v2265, %v2266
        %v2268 = vmul.f32 %v2267, %v1179
        %v2269 = vadd.f32 %v2268, 1e-05
        %v2270 = vrsqrt.pop %v2269
        %v2271 = vmul.f32 %v2270, %v2269
        %v2272 = vmul.f32 %v2271, %v2270
        %v2273 = vmul.f32 0.5, %v2272
        %v2274 = vsub.f32 1.5, %v2273
        %v2275 = vmul.f32 %v2270, %v2274
        %vm2276 = vweird.f32 %v2269
        %vm2277 = vweird.f32 %v2270
        %vm2278 = vmor %vm2276, %vm2277
        %v2279 = vsel %vm2278, %v2270, %v2275
        %v2280 = vmul.f32 %v2251, %v2279
        %v2281 = vmul.f32 %v2252, %v2279
        %v2282 = vmul.f32 %v2253, %v2279
        %v2283 = vmul.f32 %v2254, %v2279
        %2285 = vset.pattern.permute.xlu0 0
        %2286 = vperm.xlu0 %2285, %v2232
        %v2287 = vpop.permute.xlu0 %2286
        %2290 = vset.pattern.permute.xlu0 0
        %2291 = vperm.xlu0 %2290, %v2233
        %v2292 = vpop.permute.xlu0 %2291
        %2295 = vset.pattern.permute.xlu0 0
        %2296 = vperm.xlu0 %2295, %v2234
        %v2297 = vpop.permute.xlu0 %2296
        %2300 = vset.pattern.permute.xlu0 0
        %2301 = vperm.xlu0 %2300, %v2235
        %v2302 = vpop.permute.xlu0 %2301
        %v2304 = vmul.f32 %v2280, %v2287
        %v2305 = vmul.f32 %v2281, %v2292
        %v2306 = vmul.f32 %v2282, %v2297
        %v2307 = vmul.f32 %v2283, %v2302
        %2309 = vset.pattern.permute.xlu0 0
        %2310 = vperm.xlu0 %2309, %v2237
        %v2311 = vpop.permute.xlu0 %2310
        %2314 = vset.pattern.permute.xlu0 0
        %2315 = vperm.xlu0 %2314, %v2238
        %v2316 = vpop.permute.xlu0 %2315
        %2319 = vset.pattern.permute.xlu0 0
        %2320 = vperm.xlu0 %2319, %v2239
        %v2321 = vpop.permute.xlu0 %2320
        %2324 = vset.pattern.permute.xlu0 0
        %2325 = vperm.xlu0 %2324, %v2240
        %v2326 = vpop.permute.xlu0 %2325
        %v2328 = vadd.f32 %v2304, %v2311
        %v2329 = vadd.f32 %v2305, %v2316
        %v2330 = vadd.f32 %v2306, %v2321
        %v2331 = vadd.f32 %v2307, %v2326
        %v2332 = vmul.f32 %v2328, 0.5
        %v2333 = vmul.f32 %v2329, 0.5
        %v2334 = vmul.f32 %v2330, 0.5
        %v2335 = vmul.f32 %v2331, 0.5
        %v2336 = vmul.f32 %v2328, 0.70710677
        %v2337 = vmul.f32 %v2329, 0.70710677
        %v2338 = vmul.f32 %v2330, 0.70710677
        %v2339 = vmul.f32 %v2331, 0.70710677
        %vm2340 = vcmp.ge.f32.partialorder %v2336, 0.0
        %vm2341 = vcmp.ge.f32.partialorder %v2337, 0.0
        %vm2342 = vcmp.ge.f32.partialorder %v2338, 0.0
        %vm2343 = vcmp.ge.f32.partialorder %v2339, 0.0
        %v2344 = vsel %vm2340, 1.0, -1.0
        %v2345 = vsel %vm2341, 1.0, -1.0
        %v2346 = vsel %vm2342, 1.0, -1.0
        %v2347 = vsel %vm2343, 1.0, -1.0
        %v2348 = vand.u32 2147483647, %v2336
        %v2349 = vand.u32 2147483647, %v2337
        %v2350 = vand.u32 2147483647, %v2338
        %v2351 = vand.u32 2147483647, %v2339
        %v2352 = vmul.f32 %v2348, 0.3275911
        %v2353 = vmul.f32 %v2349, 0.3275911
        %v2354 = vmul.f32 %v2350, 0.3275911
        %v2355 = vmul.f32 %v2351, 0.3275911
        %v2356 = vadd.f32 %v2352, 1.0
        %v2357 = vadd.f32 %v2353, 1.0
        %v2358 = vadd.f32 %v2354, 1.0
        %v2359 = vadd.f32 %v2355, 1.0
        %v2360 = vrcp.pop %v2356
        %v2361 = vmul.f32 %v2356, %v2360
        %v2362 = vsub.f32 1.0, %v2361
        %v2363 = vmul.f32 %v2360, %v2362
        %v2364 = vadd.f32 %v2360, %v2363
        %vm2365 = vweird.f32 %v2356
        %vm2366 = vweird.f32 %v2360
        %vm2367 = vmor %vm2365, %vm2366
        %v2368 = vsel %vm2367, %v2360, %v2364
        %v2369 = vand.u32 2147483647, %v2356
        %vm2370 = vcmp.eq.f32.partialorder %v2369, 8.507059e+37
        %v2371 = vand.u32 %v2356, 2147483648
        %v2372 = vor.u32 1.1754944e-38, %v2371
        %v2373 = vsel %vm2370, %v2372, %v2368
        %v2374 = vmul.f32 1.0, %v2373
        %v2375 = vrcp.pop %v2357
        %v2376 = vmul.f32 %v2357, %v2375
        %v2377 = vsub.f32 1.0, %v2376
        %v2378 = vmul.f32 %v2375, %v2377
        %v2379 = vadd.f32 %v2375, %v2378
        %vm2380 = vweird.f32 %v2357
        %vm2381 = vweird.f32 %v2375
        %vm2382 = vmor %vm2380, %vm2381
        %v2383 = vsel %vm2382, %v2375, %v2379
        %v2384 = vand.u32 2147483647, %v2357
        %vm2385 = vcmp.eq.f32.partialorder %v2384, 8.507059e+37
        %v2386 = vand.u32 %v2357, 2147483648
        %v2387 = vor.u32 1.1754944e-38, %v2386
        %v2388 = vsel %vm2385, %v2387, %v2383
        %v2389 = vmul.f32 1.0, %v2388
        %v2390 = vrcp.pop %v2358
        %v2391 = vmul.f32 %v2358, %v2390
        %v2392 = vsub.f32 1.0, %v2391
        %v2393 = vmul.f32 %v2390, %v2392
        %v2394 = vadd.f32 %v2390, %v2393
        %vm2395 = vweird.f32 %v2358
        %vm2396 = vweird.f32 %v2390
        %vm2397 = vmor %vm2395, %vm2396
        %v2398 = vsel %vm2397, %v2390, %v2394
        %v2399 = vand.u32 2147483647, %v2358
        %vm2400 = vcmp.eq.f32.partialorder %v2399, 8.507059e+37
        %v2401 = vand.u32 %v2358, 2147483648
        %v2402 = vor.u32 1.1754944e-38, %v2401
        %v2403 = vsel %vm2400, %v2402, %v2398
        %v2404 = vmul.f32 1.0, %v2403
        %v2405 = vrcp.pop %v2359
        %v2406 = vmul.f32 %v2359, %v2405
        %v2407 = vsub.f32 1.0, %v2406
        %v2408 = vmul.f32 %v2405, %v2407
        %v2409 = vadd.f32 %v2405, %v2408
        %vm2410 = vweird.f32 %v2359
        %vm2411 = vweird.f32 %v2405
        %vm2412 = vmor %vm2410, %vm2411
        %v2413 = vsel %vm2412, %v2405, %v2409
        %v2414 = vand.u32 2147483647, %v2359
        %vm2415 = vcmp.eq.f32.partialorder %v2414, 8.507059e+37
        %v2416 = vand.u32 %v2359, 2147483648
        %v2417 = vor.u32 1.1754944e-38, %v2416
        %v2418 = vsel %vm2415, %v2417, %v2413
        %v2419 = vmul.f32 1.0, %v2418
        %v2420 = vmul.f32 %v2374, 1.0614054
        %v2421 = vmul.f32 %v2389, 1.0614054
        %v2422 = vmul.f32 %v2404, 1.0614054
        %v2423 = vmul.f32 %v2419, 1.0614054
        %v2424 = vadd.f32 %v2420, -1.4531521
        %v2425 = vadd.f32 %v2421, -1.4531521
        %v2426 = vadd.f32 %v2422, -1.4531521
        %v2427 = vadd.f32 %v2423, -1.4531521
        %v2428 = vmul.f32 %v2424, %v2374
        %v2429 = vmul.f32 %v2425, %v2389
        %v2430 = vmul.f32 %v2426, %v2404
        %v2431 = vmul.f32 %v2427, %v2419
        %v2432 = vadd.f32 %v2428, 1.4214138
        %v2433 = vadd.f32 %v2429, 1.4214138
        %v2434 = vadd.f32 %v2430, 1.4214138
        %v2435 = vadd.f32 %v2431, 1.4214138
        %v2436 = vmul.f32 %v2432, %v2374
        %v2437 = vmul.f32 %v2433, %v2389
        %v2438 = vmul.f32 %v2434, %v2404
        %v2439 = vmul.f32 %v2435, %v2419
        %v2440 = vadd.f32 %v2436, -0.28449672
        %v2441 = vadd.f32 %v2437, -0.28449672
        %v2442 = vadd.f32 %v2438, -0.28449672
        %v2443 = vadd.f32 %v2439, -0.28449672
        %v2444 = vmul.f32 %v2440, %v2374
        %v2445 = vmul.f32 %v2441, %v2389
        %v2446 = vmul.f32 %v2442, %v2404
        %v2447 = vmul.f32 %v2443, %v2419
        %v2448 = vadd.f32 %v2444, 0.2548296
        %v2449 = vadd.f32 %v2445, 0.2548296
        %v2450 = vadd.f32 %v2446, 0.2548296
        %v2451 = vadd.f32 %v2447, 0.2548296
        %v2452 = vmul.f32 %v2448, %v2374
        %v2453 = vmul.f32 %v2449, %v2389
        %v2454 = vmul.f32 %v2450, %v2404
        %v2455 = vmul.f32 %v2451, %v2419
        %v2456 = vsub.f32 0.0, %v2348
        %v2457 = vsub.f32 0.0, %v2349
        %v2458 = vsub.f32 0.0, %v2350
        %v2459 = vsub.f32 0.0, %v2351
        %v2460 = vmul.f32 %v2456, %v2348
        %v2461 = vmul.f32 %v2457, %v2349
        %v2462 = vmul.f32 %v2458, %v2350
        %v2463 = vmul.f32 %v2459, %v2351
        %v2464 = vmul.f32 %v2460, 1.442695
        %v2465 = vpow.pop %v2464
        %v2466 = vmul.f32 %v2461, 1.442695
        %v2467 = vpow.pop %v2466
        %v2468 = vmul.f32 %v2462, 1.442695
        %v2469 = vpow.pop %v2468
        %v2470 = vmul.f32 %v2463, 1.442695
        %v2471 = vpow.pop %v2470
        %v2472 = vmul.f32 %v2452, %v2465
        %v2473 = vmul.f32 %v2453, %v2467
        %v2474 = vmul.f32 %v2454, %v2469
        %v2475 = vmul.f32 %v2455, %v2471
        %v2476 = vsub.f32 1.0, %v2472
        %v2477 = vsub.f32 1.0, %v2473
        %v2478 = vsub.f32 1.0, %v2474
        %v2479 = vsub.f32 1.0, %v2475
        %v2480 = vmul.f32 %v2344, %v2476
        %v2481 = vmul.f32 %v2345, %v2477
        %v2482 = vmul.f32 %v2346, %v2478
        %v2483 = vmul.f32 %v2347, %v2479
        %v2484 = vadd.f32 %v2480, 1.0
        %v2485 = vadd.f32 %v2481, 1.0
        %v2486 = vadd.f32 %v2482, 1.0
        %v2487 = vadd.f32 %v2483, 1.0
        %v2488 = vmul.f32 %v2332, %v2484
        %v2489 = vmul.f32 %v2333, %v2485
        %v2490 = vmul.f32 %v2334, %v2486
        %v2491 = vmul.f32 %v2335, %v2487
        %v2492 = vadd.f32 %v1751, %v2488
        %v2493 = vadd.f32 %v1752, %v2489
        %v2494 = vadd.f32 %v1753, %v2490
        %v2495 = vadd.f32 %v1754, %v2491
        %v2496 = vmul.f32 %v2492, %v1012
        %v2497 = vmul.f32 %v2493, %v1012
        %v2498 = vmul.f32 %v2494, %v1012
        %v2499 = vmul.f32 %v2495, %v1012
        %s2500 = scalar_lea.vmem %s9, 64
        %v2501 = vld [vmem:[%s2500] sm:$0xff]
        %v2502 = vld [vmem:[%s2500 + $0x8] sm:$0xff]
        %v2503 = vld [vmem:[%s2500 + $0x10] sm:$0xff]
        %v2504 = vld [vmem:[%s2500 + $0x18] sm:$0xff]
        %2505 = vrot.lane.b32.xlu0 %v2496, 9
        %v2506 = vpop.permute.xlu0 %2505
        %2507 = vrot.lane.b32.xlu0 %v2497, 9
        %v2508 = vpop.permute.xlu0 %2507
        %2509 = vrot.lane.b32.xlu0 %v2498, 9
        %v2510 = vpop.permute.xlu0 %2509
        %2511 = vrot.lane.b32.xlu0 %v2499, 9
        %v2512 = vpop.permute.xlu0 %2511
        %vm2513 = vcmp.ge.s32.totalorder %v1010, 9
        %v2514 = vsel %vm2513, 1, 0
        %vm2515 = vcmp.eq.s32.totalorder %v2514, 1
        %v2516 = vsel %vm2515, %v2506, 0.0
        %v2517 = vsel %vm2515, %v2508, 0.0
        %v2518 = vsel %vm2515, %v2510, 0.0
        %v2519 = vsel %vm2515, %v2512, 0.0
        %2521 = vset.pattern.permute.xlu0 0
        %2522 = vperm.xlu0 %2521, %v2501
        %v2523 = vpop.permute.xlu0 %2522
        %2526 = vset.pattern.permute.xlu0 0
        %2527 = vperm.xlu0 %2526, %v2502
        %v2528 = vpop.permute.xlu0 %2527
        %2531 = vset.pattern.permute.xlu0 0
        %2532 = vperm.xlu0 %2531, %v2503
        %v2533 = vpop.permute.xlu0 %2532
        %2536 = vset.pattern.permute.xlu0 0
        %2537 = vperm.xlu0 %2536, %v2504
        %v2538 = vpop.permute.xlu0 %2537
        %v2540 = vmul.f32 %v2523, %v2516
        %v2541 = vmul.f32 %v2528, %v2517
        %v2542 = vmul.f32 %v2533, %v2518
        %v2543 = vmul.f32 %v2538, %v2519
        %v2544 = vadd.f32 %v2540, 0.0
        %v2545 = vadd.f32 %v2541, 0.0
        %v2546 = vadd.f32 %v2542, 0.0
        %v2547 = vadd.f32 %v2543, 0.0
        %2548 = vset.pattern.permute.xlu0 1
        %2549 = vperm.xlu0 %2548, %v2501
        %v2550 = vpop.permute.xlu0 %2549
        %2552 = vset.pattern.permute.xlu0 1
        %2553 = vperm.xlu0 %2552, %v2502
        %v2554 = vpop.permute.xlu0 %2553
        %2556 = vset.pattern.permute.xlu0 1
        %2557 = vperm.xlu0 %2556, %v2503
        %v2558 = vpop.permute.xlu0 %2557
        %2560 = vset.pattern.permute.xlu0 1
        %2561 = vperm.xlu0 %2560, %v2504
        %v2562 = vpop.permute.xlu0 %2561
        %v2564 = vmul.f32 %v2550, %v2496
        %v2565 = vmul.f32 %v2554, %v2497
        %v2566 = vmul.f32 %v2558, %v2498
        %v2567 = vmul.f32 %v2562, %v2499
        %v2568 = vadd.f32 %v2544, %v2564
        %v2569 = vadd.f32 %v2545, %v2565
        %v2570 = vadd.f32 %v2546, %v2566
        %v2571 = vadd.f32 %v2547, %v2567
        %2572 = vrot.lane.b32.xlu0 %v2496, 119
        %v2573 = vpop.permute.xlu0 %2572
        %2574 = vrot.lane.b32.xlu0 %v2497, 119
        %v2575 = vpop.permute.xlu0 %2574
        %2576 = vrot.lane.b32.xlu0 %v2498, 119
        %v2577 = vpop.permute.xlu0 %2576
        %2578 = vrot.lane.b32.xlu0 %v2499, 119
        %v2579 = vpop.permute.xlu0 %2578
        %vm2580 = vcmp.lt.s32.totalorder %v1010, 119
        %v2581 = vsel %vm2580, 1, 0
        %vm2582 = vcmp.eq.s32.totalorder %v2581, 1
        %v2583 = vsel %vm2582, %v2573, 0.0
        %v2584 = vsel %vm2582, %v2575, 0.0
        %v2585 = vsel %vm2582, %v2577, 0.0
        %v2586 = vsel %vm2582, %v2579, 0.0
        %2587 = vset.pattern.permute.xlu0 2
        %2588 = vperm.xlu0 %2587, %v2501
        %v2589 = vpop.permute.xlu0 %2588
        %2591 = vset.pattern.permute.xlu0 2
        %2592 = vperm.xlu0 %2591, %v2502
        %v2593 = vpop.permute.xlu0 %2592
        %2595 = vset.pattern.permute.xlu0 2
        %2596 = vperm.xlu0 %2595, %v2503
        %v2597 = vpop.permute.xlu0 %2596
        %2599 = vset.pattern.permute.xlu0 2
        %2600 = vperm.xlu0 %2599, %v2504
        %v2601 = vpop.permute.xlu0 %2600
        %v2603 = vmul.f32 %v2589, %v2583
        %v2604 = vmul.f32 %v2593, %v2584
        %v2605 = vmul.f32 %v2597, %v2585
        %v2606 = vmul.f32 %v2601, %v2586
        %v2607 = vadd.f32 %v2568, %v2603
        %v2608 = vadd.f32 %v2569, %v2604
        %v2609 = vadd.f32 %v2570, %v2605
        %v2610 = vadd.f32 %v2571, %v2606
        %s2611 = scalar_lea.vmem %s11, 64
        %v2612 = vld [vmem:[%s2611] sm:$0xff]
        %v2613 = vld [vmem:[%s2611 + $0x8] sm:$0xff]
        %v2614 = vld [vmem:[%s2611 + $0x10] sm:$0xff]
        %v2615 = vld [vmem:[%s2611 + $0x18] sm:$0xff]
        %2617 = vset.pattern.permute.xlu0 0
        %2618 = vperm.xlu0 %2617, %v2612
        %v2619 = vpop.permute.xlu0 %2618
        %2622 = vset.pattern.permute.xlu0 0
        %2623 = vperm.xlu0 %2622, %v2613
        %v2624 = vpop.permute.xlu0 %2623
        %2627 = vset.pattern.permute.xlu0 0
        %2628 = vperm.xlu0 %2627, %v2614
        %v2629 = vpop.permute.xlu0 %2628
        %2632 = vset.pattern.permute.xlu0 0
        %2633 = vperm.xlu0 %2632, %v2615
        %v2634 = vpop.permute.xlu0 %2633
        %v2636 = vadd.f32 %v2607, %v2619
        %v2637 = vadd.f32 %v2608, %v2624
        %v2638 = vadd.f32 %v2609, %v2629
        %v2639 = vadd.f32 %v2610, %v2634
        %s2640 = scalar_lea.vmem %s13, 64
        %v2641 = vld [vmem:[%s2640] sm:$0xff]
        %v2642 = vld [vmem:[%s2640 + $0x8] sm:$0xff]
        %v2643 = vld [vmem:[%s2640 + $0x10] sm:$0xff]
        %v2644 = vld [vmem:[%s2640 + $0x18] sm:$0xff]
        %s2645 = scalar_lea.vmem %s15, 64
        %v2646 = vld [vmem:[%s2645] sm:$0xff]
        %v2647 = vld [vmem:[%s2645 + $0x8] sm:$0xff]
        %v2648 = vld [vmem:[%s2645 + $0x10] sm:$0xff]
        %v2649 = vld [vmem:[%s2645 + $0x18] sm:$0xff]
        %v2650 = vadd.f32 %v2636, %v2637
        %v2651 = vadd.f32 %v2650, %v2638
        %v2652 = vadd.f32 %v2651, %v2639
        %v2653 = vrot.slane %v2652, 4
        %v2654 = vadd.f32 %v2652, %v2653
        %v2655 = vrot.slane %v2654, 2
        %v2656 = vadd.f32 %v2654, %v2655
        %v2657 = vrot.slane %v2656, 1
        %v2658 = vadd.f32 %v2656, %v2657
        %v2659 = vmul.f32 %v2658, %v1179
        %v2660 = vsub.f32 %v2636, %v2659
        %v2661 = vsub.f32 %v2637, %v2659
        %v2662 = vsub.f32 %v2638, %v2659
        %v2663 = vsub.f32 %v2639, %v2659
        %v2664 = vmul.f32 %v2660, %v2660
        %v2665 = vmul.f32 %v2661, %v2661
        %v2666 = vmul.f32 %v2662, %v2662
        %v2667 = vmul.f32 %v2663, %v2663
        %v2668 = vadd.f32 %v2664, %v2665
        %v2669 = vadd.f32 %v2668, %v2666
        %v2670 = vadd.f32 %v2669, %v2667
        %v2671 = vrot.slane %v2670, 4
        %v2672 = vadd.f32 %v2670, %v2671
        %v2673 = vrot.slane %v2672, 2
        %v2674 = vadd.f32 %v2672, %v2673
        %v2675 = vrot.slane %v2674, 1
        %v2676 = vadd.f32 %v2674, %v2675
        %v2677 = vmul.f32 %v2676, %v1179
        %v2678 = vadd.f32 %v2677, 1e-05
        %v2679 = vrsqrt.pop %v2678
        %v2680 = vmul.f32 %v2679, %v2678
        %v2681 = vmul.f32 %v2680, %v2679
        %v2682 = vmul.f32 0.5, %v2681
        %v2683 = vsub.f32 1.5, %v2682
        %v2684 = vmul.f32 %v2679, %v2683
        %vm2685 = vweird.f32 %v2678
        %vm2686 = vweird.f32 %v2679
        %vm2687 = vmor %vm2685, %vm2686
        %v2688 = vsel %vm2687, %v2679, %v2684
        %v2689 = vmul.f32 %v2660, %v2688
        %v2690 = vmul.f32 %v2661, %v2688
        %v2691 = vmul.f32 %v2662, %v2688
        %v2692 = vmul.f32 %v2663, %v2688
        %2694 = vset.pattern.permute.xlu0 0
        %2695 = vperm.xlu0 %2694, %v2641
        %v2696 = vpop.permute.xlu0 %2695
        %2699 = vset.pattern.permute.xlu0 0
        %2700 = vperm.xlu0 %2699, %v2642
        %v2701 = vpop.permute.xlu0 %2700
        %2704 = vset.pattern.permute.xlu0 0
        %2705 = vperm.xlu0 %2704, %v2643
        %v2706 = vpop.permute.xlu0 %2705
        %2709 = vset.pattern.permute.xlu0 0
        %2710 = vperm.xlu0 %2709, %v2644
        %v2711 = vpop.permute.xlu0 %2710
        %v2713 = vmul.f32 %v2689, %v2696
        %v2714 = vmul.f32 %v2690, %v2701
        %v2715 = vmul.f32 %v2691, %v2706
        %v2716 = vmul.f32 %v2692, %v2711
        %2718 = vset.pattern.permute.xlu0 0
        %2719 = vperm.xlu0 %2718, %v2646
        %v2720 = vpop.permute.xlu0 %2719
        %2723 = vset.pattern.permute.xlu0 0
        %2724 = vperm.xlu0 %2723, %v2647
        %v2725 = vpop.permute.xlu0 %2724
        %2728 = vset.pattern.permute.xlu0 0
        %2729 = vperm.xlu0 %2728, %v2648
        %v2730 = vpop.permute.xlu0 %2729
        %2733 = vset.pattern.permute.xlu0 0
        %2734 = vperm.xlu0 %2733, %v2649
        %v2735 = vpop.permute.xlu0 %2734
        %v2737 = vadd.f32 %v2713, %v2720
        %v2738 = vadd.f32 %v2714, %v2725
        %v2739 = vadd.f32 %v2715, %v2730
        %v2740 = vadd.f32 %v2716, %v2735
        %v2741 = vmul.f32 %v2737, 0.5
        %v2742 = vmul.f32 %v2738, 0.5
        %v2743 = vmul.f32 %v2739, 0.5
        %v2744 = vmul.f32 %v2740, 0.5
        %v2745 = vmul.f32 %v2737, 0.70710677
        %v2746 = vmul.f32 %v2738, 0.70710677
        %v2747 = vmul.f32 %v2739, 0.70710677
        %v2748 = vmul.f32 %v2740, 0.70710677
        %vm2749 = vcmp.ge.f32.partialorder %v2745, 0.0
        %vm2750 = vcmp.ge.f32.partialorder %v2746, 0.0
        %vm2751 = vcmp.ge.f32.partialorder %v2747, 0.0
        %vm2752 = vcmp.ge.f32.partialorder %v2748, 0.0
        %v2753 = vsel %vm2749, 1.0, -1.0
        %v2754 = vsel %vm2750, 1.0, -1.0
        %v2755 = vsel %vm2751, 1.0, -1.0
        %v2756 = vsel %vm2752, 1.0, -1.0
        %v2757 = vand.u32 2147483647, %v2745
        %v2758 = vand.u32 2147483647, %v2746
        %v2759 = vand.u32 2147483647, %v2747
        %v2760 = vand.u32 2147483647, %v2748
        %v2761 = vmul.f32 %v2757, 0.3275911
        %v2762 = vmul.f32 %v2758, 0.3275911
        %v2763 = vmul.f32 %v2759, 0.3275911
        %v2764 = vmul.f32 %v2760, 0.3275911
        %v2765 = vadd.f32 %v2761, 1.0
        %v2766 = vadd.f32 %v2762, 1.0
        %v2767 = vadd.f32 %v2763, 1.0
        %v2768 = vadd.f32 %v2764, 1.0
        %v2769 = vrcp.pop %v2765
        %v2770 = vmul.f32 %v2765, %v2769
        %v2771 = vsub.f32 1.0, %v2770
        %v2772 = vmul.f32 %v2769, %v2771
        %v2773 = vadd.f32 %v2769, %v2772
        %vm2774 = vweird.f32 %v2765
        %vm2775 = vweird.f32 %v2769
        %vm2776 = vmor %vm2774, %vm2775
        %v2777 = vsel %vm2776, %v2769, %v2773
        %v2778 = vand.u32 2147483647, %v2765
        %vm2779 = vcmp.eq.f32.partialorder %v2778, 8.507059e+37
        %v2780 = vand.u32 %v2765, 2147483648
        %v2781 = vor.u32 1.1754944e-38, %v2780
        %v2782 = vsel %vm2779, %v2781, %v2777
        %v2783 = vmul.f32 1.0, %v2782
        %v2784 = vrcp.pop %v2766
        %v2785 = vmul.f32 %v2766, %v2784
        %v2786 = vsub.f32 1.0, %v2785
        %v2787 = vmul.f32 %v2784, %v2786
        %v2788 = vadd.f32 %v2784, %v2787
        %vm2789 = vweird.f32 %v2766
        %vm2790 = vweird.f32 %v2784
        %vm2791 = vmor %vm2789, %vm2790
        %v2792 = vsel %vm2791, %v2784, %v2788
        %v2793 = vand.u32 2147483647, %v2766
        %vm2794 = vcmp.eq.f32.partialorder %v2793, 8.507059e+37
        %v2795 = vand.u32 %v2766, 2147483648
        %v2796 = vor.u32 1.1754944e-38, %v2795
        %v2797 = vsel %vm2794, %v2796, %v2792
        %v2798 = vmul.f32 1.0, %v2797
        %v2799 = vrcp.pop %v2767
        %v2800 = vmul.f32 %v2767, %v2799
        %v2801 = vsub.f32 1.0, %v2800
        %v2802 = vmul.f32 %v2799, %v2801
        %v2803 = vadd.f32 %v2799, %v2802
        %vm2804 = vweird.f32 %v2767
        %vm2805 = vweird.f32 %v2799
        %vm2806 = vmor %vm2804, %vm2805
        %v2807 = vsel %vm2806, %v2799, %v2803
        %v2808 = vand.u32 2147483647, %v2767
        %vm2809 = vcmp.eq.f32.partialorder %v2808, 8.507059e+37
        %v2810 = vand.u32 %v2767, 2147483648
        %v2811 = vor.u32 1.1754944e-38, %v2810
        %v2812 = vsel %vm2809, %v2811, %v2807
        %v2813 = vmul.f32 1.0, %v2812
        %v2814 = vrcp.pop %v2768
        %v2815 = vmul.f32 %v2768, %v2814
        %v2816 = vsub.f32 1.0, %v2815
        %v2817 = vmul.f32 %v2814, %v2816
        %v2818 = vadd.f32 %v2814, %v2817
        %vm2819 = vweird.f32 %v2768
        %vm2820 = vweird.f32 %v2814
        %vm2821 = vmor %vm2819, %vm2820
        %v2822 = vsel %vm2821, %v2814, %v2818
        %v2823 = vand.u32 2147483647, %v2768
        %vm2824 = vcmp.eq.f32.partialorder %v2823, 8.507059e+37
        %v2825 = vand.u32 %v2768, 2147483648
        %v2826 = vor.u32 1.1754944e-38, %v2825
        %v2827 = vsel %vm2824, %v2826, %v2822
        %v2828 = vmul.f32 1.0, %v2827
        %v2829 = vmul.f32 %v2783, 1.0614054
        %v2830 = vmul.f32 %v2798, 1.0614054
        %v2831 = vmul.f32 %v2813, 1.0614054
        %v2832 = vmul.f32 %v2828, 1.0614054
        %v2833 = vadd.f32 %v2829, -1.4531521
        %v2834 = vadd.f32 %v2830, -1.4531521
        %v2835 = vadd.f32 %v2831, -1.4531521
        %v2836 = vadd.f32 %v2832, -1.4531521
        %v2837 = vmul.f32 %v2833, %v2783
        %v2838 = vmul.f32 %v2834, %v2798
        %v2839 = vmul.f32 %v2835, %v2813
        %v2840 = vmul.f32 %v2836, %v2828
        %v2841 = vadd.f32 %v2837, 1.4214138
        %v2842 = vadd.f32 %v2838, 1.4214138
        %v2843 = vadd.f32 %v2839, 1.4214138
        %v2844 = vadd.f32 %v2840, 1.4214138
        %v2845 = vmul.f32 %v2841, %v2783
        %v2846 = vmul.f32 %v2842, %v2798
        %v2847 = vmul.f32 %v2843, %v2813
        %v2848 = vmul.f32 %v2844, %v2828
        %v2849 = vadd.f32 %v2845, -0.28449672
        %v2850 = vadd.f32 %v2846, -0.28449672
        %v2851 = vadd.f32 %v2847, -0.28449672
        %v2852 = vadd.f32 %v2848, -0.28449672
        %v2853 = vmul.f32 %v2849, %v2783
        %v2854 = vmul.f32 %v2850, %v2798
        %v2855 = vmul.f32 %v2851, %v2813
        %v2856 = vmul.f32 %v2852, %v2828
        %v2857 = vadd.f32 %v2853, 0.2548296
        %v2858 = vadd.f32 %v2854, 0.2548296
        %v2859 = vadd.f32 %v2855, 0.2548296
        %v2860 = vadd.f32 %v2856, 0.2548296
        %v2861 = vmul.f32 %v2857, %v2783
        %v2862 = vmul.f32 %v2858, %v2798
        %v2863 = vmul.f32 %v2859, %v2813
        %v2864 = vmul.f32 %v2860, %v2828
        %v2865 = vsub.f32 0.0, %v2757
        %v2866 = vsub.f32 0.0, %v2758
        %v2867 = vsub.f32 0.0, %v2759
        %v2868 = vsub.f32 0.0, %v2760
        %v2869 = vmul.f32 %v2865, %v2757
        %v2870 = vmul.f32 %v2866, %v2758
        %v2871 = vmul.f32 %v2867, %v2759
        %v2872 = vmul.f32 %v2868, %v2760
        %v2873 = vmul.f32 %v2869, 1.442695
        %v2874 = vpow.pop %v2873
        %v2875 = vmul.f32 %v2870, 1.442695
        %v2876 = vpow.pop %v2875
        %v2877 = vmul.f32 %v2871, 1.442695
        %v2878 = vpow.pop %v2877
        %v2879 = vmul.f32 %v2872, 1.442695
        %v2880 = vpow.pop %v2879
        %v2881 = vmul.f32 %v2861, %v2874
        %v2882 = vmul.f32 %v2862, %v2876
        %v2883 = vmul.f32 %v2863, %v2878
        %v2884 = vmul.f32 %v2864, %v2880
        %v2885 = vsub.f32 1.0, %v2881
        %v2886 = vsub.f32 1.0, %v2882
        %v2887 = vsub.f32 1.0, %v2883
        %v2888 = vsub.f32 1.0, %v2884
        %v2889 = vmul.f32 %v2753, %v2885
        %v2890 = vmul.f32 %v2754, %v2886
        %v2891 = vmul.f32 %v2755, %v2887
        %v2892 = vmul.f32 %v2756, %v2888
        %v2893 = vadd.f32 %v2889, 1.0
        %v2894 = vadd.f32 %v2890, 1.0
        %v2895 = vadd.f32 %v2891, 1.0
        %v2896 = vadd.f32 %v2892, 1.0
        %v2897 = vmul.f32 %v2741, %v2893
        %v2898 = vmul.f32 %v2742, %v2894
        %v2899 = vmul.f32 %v2743, %v2895
        %v2900 = vmul.f32 %v2744, %v2896
        %s2901 = scalar_lea.vmem %s17, 64
        %v2902 = vld [vmem:[%s2901] sm:$0xff]
        %v2903 = vld [vmem:[%s2901 + $0x8] sm:$0xff]
        %v2904 = vld [vmem:[%s2901 + $0x10] sm:$0xff]
        %v2905 = vld [vmem:[%s2901 + $0x18] sm:$0xff]
        %s2906 = scalar_lea.vmem %s19, 64
        %v2907 = vld [vmem:[%s2906] sm:$0xff]
        %v2908 = vld [vmem:[%s2906 + $0x8] sm:$0xff]
        %v2909 = vld [vmem:[%s2906 + $0x10] sm:$0xff]
        %v2910 = vld [vmem:[%s2906 + $0x18] sm:$0xff]
        %2912 = vset.pattern.permute.xlu0 0
        %2913 = vperm.xlu0 %2912, %v2907
        %v2914 = vpop.permute.xlu0 %2913
        %2917 = vset.pattern.permute.xlu0 0
        %2918 = vperm.xlu0 %2917, %v2908
        %v2919 = vpop.permute.xlu0 %2918
        %2922 = vset.pattern.permute.xlu0 0
        %2923 = vperm.xlu0 %2922, %v2909
        %v2924 = vpop.permute.xlu0 %2923
        %2927 = vset.pattern.permute.xlu0 0
        %2928 = vperm.xlu0 %2927, %v2910
        %v2929 = vpop.permute.xlu0 %2928
        %v2932 = vsel %vm1450, %v2902, 0
        %v2935 = vsel %vm1450, %v2903, 0
        %v2938 = vsel %vm1450, %v2904, 0
        %v2941 = vsel %vm1450, %v2905, 0
        %2943 = vmatpush.msra.mxu0 0.0
        %2944 = vmatpush.msra.mxu0 0.0
        %2945 = vmatpush.msra.mxu0 0.0
        %2946 = vmatpush.msra.mxu0 0.0
        %2947 = vmatpush.msra.mxu0 0.0
        %2948 = vmatpush.msra.mxu0 0.0
        %2949 = vmatpush.msra.mxu0 0.0
        %2950 = vmatpush.msra.mxu0 0.0
        %2951 = vmatpush.msra.mxu0 0.0
        %2952 = vmatpush.msra.mxu0 0.0
        %2953 = vmatpush.msra.mxu0 0.0
        %2954 = vmatpush.msra.mxu0 0.0
        %2955 = vmatpush.msra.mxu0 %v2900
        %2956 = vmatpush.msra.mxu0 %v2899
        %2957 = vmatpush.msra.mxu0 %v2898
        %2958 = vmatpush.msra.mxu0 %v2897
        %2959 = vmatmul.f32.gmra.mxu0 %v2932
        %v2960 = vpop.f32.mrf.mxu0
        %v2961 = vadd.f32 %v2914, %v2960
        %2962 = vmatmul.f32.gmra.mxu0 %v2935
        %v2963 = vpop.f32.mrf.mxu0
        %v2964 = vadd.f32 %v2919, %v2963
        %2965 = vmatmul.f32.gmra.mxu0 %v2938
        %v2966 = vpop.f32.mrf.mxu0
        %v2967 = vadd.f32 %v2924, %v2966
        %2968 = vmatmul.f32.gmra.mxu0 %v2941
        %v2969 = vpop.f32.mrf.mxu0
        %v2970 = vadd.f32 %v2929, %v2969
        %2971 = vdwg.mxu0
        %s2972 = scalar_lea.vmem %s21, 64
        %v2973 = vld [vmem:[%s2972] sm:$0xff]
        %v2974 = vld [vmem:[%s2972 + $0x8] sm:$0xff]
        %v2975 = vld [vmem:[%s2972 + $0x10] sm:$0xff]
        %v2976 = vld [vmem:[%s2972 + $0x18] sm:$0xff]
        %s2977 = scalar_lea.vmem %s23, 64
        %v2978 = vld [vmem:[%s2977] sm:$0xff]
        %v2979 = vld [vmem:[%s2977 + $0x8] sm:$0xff]
        %v2980 = vld [vmem:[%s2977 + $0x10] sm:$0xff]
        %v2981 = vld [vmem:[%s2977 + $0x18] sm:$0xff]
        %v2982 = vadd.f32 %v2961, %v2964
        %v2983 = vadd.f32 %v2982, %v2967
        %v2984 = vadd.f32 %v2983, %v2970
        %v2985 = vrot.slane %v2984, 4
        %v2986 = vadd.f32 %v2984, %v2985
        %v2987 = vrot.slane %v2986, 2
        %v2988 = vadd.f32 %v2986, %v2987
        %v2989 = vrot.slane %v2988, 1
        %v2990 = vadd.f32 %v2988, %v2989
        %v2991 = vmul.f32 %v2990, %v1179
        %v2992 = vsub.f32 %v2961, %v2991
        %v2993 = vsub.f32 %v2964, %v2991
        %v2994 = vsub.f32 %v2967, %v2991
        %v2995 = vsub.f32 %v2970, %v2991
        %v2996 = vmul.f32 %v2992, %v2992
        %v2997 = vmul.f32 %v2993, %v2993
        %v2998 = vmul.f32 %v2994, %v2994
        %v2999 = vmul.f32 %v2995, %v2995
        %v3000 = vadd.f32 %v2996, %v2997
        %v3001 = vadd.f32 %v3000, %v2998
        %v3002 = vadd.f32 %v3001, %v2999
        %v3003 = vrot.slane %v3002, 4
        %v3004 = vadd.f32 %v3002, %v3003
        %v3005 = vrot.slane %v3004, 2
        %v3006 = vadd.f32 %v3004, %v3005
        %v3007 = vrot.slane %v3006, 1
        %v3008 = vadd.f32 %v3006, %v3007
        %v3009 = vmul.f32 %v3008, %v1179
        %v3010 = vadd.f32 %v3009, 1e-05
        %v3011 = vrsqrt.pop %v3010
        %v3012 = vmul.f32 %v3011, %v3010
        %v3013 = vmul.f32 %v3012, %v3011
        %v3014 = vmul.f32 0.5, %v3013
        %v3015 = vsub.f32 1.5, %v3014
        %v3016 = vmul.f32 %v3011, %v3015
        %vm3017 = vweird.f32 %v3010
        %vm3018 = vweird.f32 %v3011
        %vm3019 = vmor %vm3017, %vm3018
        %v3020 = vsel %vm3019, %v3011, %v3016
        %v3021 = vmul.f32 %v2992, %v3020
        %v3022 = vmul.f32 %v2993, %v3020
        %v3023 = vmul.f32 %v2994, %v3020
        %v3024 = vmul.f32 %v2995, %v3020
        %3026 = vset.pattern.permute.xlu0 0
        %3027 = vperm.xlu0 %3026, %v2973
        %v3028 = vpop.permute.xlu0 %3027
        %3031 = vset.pattern.permute.xlu0 0
        %3032 = vperm.xlu0 %3031, %v2974
        %v3033 = vpop.permute.xlu0 %3032
        %3036 = vset.pattern.permute.xlu0 0
        %3037 = vperm.xlu0 %3036, %v2975
        %v3038 = vpop.permute.xlu0 %3037
        %3041 = vset.pattern.permute.xlu0 0
        %3042 = vperm.xlu0 %3041, %v2976
        %v3043 = vpop.permute.xlu0 %3042
        %v3045 = vmul.f32 %v3021, %v3028
        %v3046 = vmul.f32 %v3022, %v3033
        %v3047 = vmul.f32 %v3023, %v3038
        %v3048 = vmul.f32 %v3024, %v3043
        %3050 = vset.pattern.permute.xlu0 0
        %3051 = vperm.xlu0 %3050, %v2978
        %v3052 = vpop.permute.xlu0 %3051
        %3055 = vset.pattern.permute.xlu0 0
        %3056 = vperm.xlu0 %3055, %v2979
        %v3057 = vpop.permute.xlu0 %3056
        %3060 = vset.pattern.permute.xlu0 0
        %3061 = vperm.xlu0 %3060, %v2980
        %v3062 = vpop.permute.xlu0 %3061
        %3065 = vset.pattern.permute.xlu0 0
        %3066 = vperm.xlu0 %3065, %v2981
        %v3067 = vpop.permute.xlu0 %3066
        %v3069 = vadd.f32 %v3045, %v3052
        %v3070 = vadd.f32 %v3046, %v3057
        %v3071 = vadd.f32 %v3047, %v3062
        %v3072 = vadd.f32 %v3048, %v3067
        %v3073 = vmul.f32 %v3069, 0.5
        %v3074 = vmul.f32 %v3070, 0.5
        %v3075 = vmul.f32 %v3071, 0.5
        %v3076 = vmul.f32 %v3072, 0.5
        %v3077 = vmul.f32 %v3069, 0.70710677
        %v3078 = vmul.f32 %v3070, 0.70710677
        %v3079 = vmul.f32 %v3071, 0.70710677
        %v3080 = vmul.f32 %v3072, 0.70710677
        %vm3081 = vcmp.ge.f32.partialorder %v3077, 0.0
        %vm3082 = vcmp.ge.f32.partialorder %v3078, 0.0
        %vm3083 = vcmp.ge.f32.partialorder %v3079, 0.0
        %vm3084 = vcmp.ge.f32.partialorder %v3080, 0.0
        %v3085 = vsel %vm3081, 1.0, -1.0
        %v3086 = vsel %vm3082, 1.0, -1.0
        %v3087 = vsel %vm3083, 1.0, -1.0
        %v3088 = vsel %vm3084, 1.0, -1.0
        %v3089 = vand.u32 2147483647, %v3077
        %v3090 = vand.u32 2147483647, %v3078
        %v3091 = vand.u32 2147483647, %v3079
        %v3092 = vand.u32 2147483647, %v3080
        %v3093 = vmul.f32 %v3089, 0.3275911
        %v3094 = vmul.f32 %v3090, 0.3275911
        %v3095 = vmul.f32 %v3091, 0.3275911
        %v3096 = vmul.f32 %v3092, 0.3275911
        %v3097 = vadd.f32 %v3093, 1.0
        %v3098 = vadd.f32 %v3094, 1.0
        %v3099 = vadd.f32 %v3095, 1.0
        %v3100 = vadd.f32 %v3096, 1.0
        %v3101 = vrcp.pop %v3097
        %v3102 = vmul.f32 %v3097, %v3101
        %v3103 = vsub.f32 1.0, %v3102
        %v3104 = vmul.f32 %v3101, %v3103
        %v3105 = vadd.f32 %v3101, %v3104
        %vm3106 = vweird.f32 %v3097
        %vm3107 = vweird.f32 %v3101
        %vm3108 = vmor %vm3106, %vm3107
        %v3109 = vsel %vm3108, %v3101, %v3105
        %v3110 = vand.u32 2147483647, %v3097
        %vm3111 = vcmp.eq.f32.partialorder %v3110, 8.507059e+37
        %v3112 = vand.u32 %v3097, 2147483648
        %v3113 = vor.u32 1.1754944e-38, %v3112
        %v3114 = vsel %vm3111, %v3113, %v3109
        %v3115 = vmul.f32 1.0, %v3114
        %v3116 = vrcp.pop %v3098
        %v3117 = vmul.f32 %v3098, %v3116
        %v3118 = vsub.f32 1.0, %v3117
        %v3119 = vmul.f32 %v3116, %v3118
        %v3120 = vadd.f32 %v3116, %v3119
        %vm3121 = vweird.f32 %v3098
        %vm3122 = vweird.f32 %v3116
        %vm3123 = vmor %vm3121, %vm3122
        %v3124 = vsel %vm3123, %v3116, %v3120
        %v3125 = vand.u32 2147483647, %v3098
        %vm3126 = vcmp.eq.f32.partialorder %v3125, 8.507059e+37
        %v3127 = vand.u32 %v3098, 2147483648
        %v3128 = vor.u32 1.1754944e-38, %v3127
        %v3129 = vsel %vm3126, %v3128, %v3124
        %v3130 = vmul.f32 1.0, %v3129
        %v3131 = vrcp.pop %v3099
        %v3132 = vmul.f32 %v3099, %v3131
        %v3133 = vsub.f32 1.0, %v3132
        %v3134 = vmul.f32 %v3131, %v3133
        %v3135 = vadd.f32 %v3131, %v3134
        %vm3136 = vweird.f32 %v3099
        %vm3137 = vweird.f32 %v3131
        %vm3138 = vmor %vm3136, %vm3137
        %v3139 = vsel %vm3138, %v3131, %v3135
        %v3140 = vand.u32 2147483647, %v3099
        %vm3141 = vcmp.eq.f32.partialorder %v3140, 8.507059e+37
        %v3142 = vand.u32 %v3099, 2147483648
        %v3143 = vor.u32 1.1754944e-38, %v3142
        %v3144 = vsel %vm3141, %v3143, %v3139
        %v3145 = vmul.f32 1.0, %v3144
        %v3146 = vrcp.pop %v3100
        %v3147 = vmul.f32 %v3100, %v3146
        %v3148 = vsub.f32 1.0, %v3147
        %v3149 = vmul.f32 %v3146, %v3148
        %v3150 = vadd.f32 %v3146, %v3149
        %vm3151 = vweird.f32 %v3100
        %vm3152 = vweird.f32 %v3146
        %vm3153 = vmor %vm3151, %vm3152
        %v3154 = vsel %vm3153, %v3146, %v3150
        %v3155 = vand.u32 2147483647, %v3100
        %vm3156 = vcmp.eq.f32.partialorder %v3155, 8.507059e+37
        %v3157 = vand.u32 %v3100, 2147483648
        %v3158 = vor.u32 1.1754944e-38, %v3157
        %v3159 = vsel %vm3156, %v3158, %v3154
        %v3160 = vmul.f32 1.0, %v3159
        %v3161 = vmul.f32 %v3115, 1.0614054
        %v3162 = vmul.f32 %v3130, 1.0614054
        %v3163 = vmul.f32 %v3145, 1.0614054
        %v3164 = vmul.f32 %v3160, 1.0614054
        %v3165 = vadd.f32 %v3161, -1.4531521
        %v3166 = vadd.f32 %v3162, -1.4531521
        %v3167 = vadd.f32 %v3163, -1.4531521
        %v3168 = vadd.f32 %v3164, -1.4531521
        %v3169 = vmul.f32 %v3165, %v3115
        %v3170 = vmul.f32 %v3166, %v3130
        %v3171 = vmul.f32 %v3167, %v3145
        %v3172 = vmul.f32 %v3168, %v3160
        %v3173 = vadd.f32 %v3169, 1.4214138
        %v3174 = vadd.f32 %v3170, 1.4214138
        %v3175 = vadd.f32 %v3171, 1.4214138
        %v3176 = vadd.f32 %v3172, 1.4214138
        %v3177 = vmul.f32 %v3173, %v3115
        %v3178 = vmul.f32 %v3174, %v3130
        %v3179 = vmul.f32 %v3175, %v3145
        %v3180 = vmul.f32 %v3176, %v3160
        %v3181 = vadd.f32 %v3177, -0.28449672
        %v3182 = vadd.f32 %v3178, -0.28449672
        %v3183 = vadd.f32 %v3179, -0.28449672
        %v3184 = vadd.f32 %v3180, -0.28449672
        %v3185 = vmul.f32 %v3181, %v3115
        %v3186 = vmul.f32 %v3182, %v3130
        %v3187 = vmul.f32 %v3183, %v3145
        %v3188 = vmul.f32 %v3184, %v3160
        %v3189 = vadd.f32 %v3185, 0.2548296
        %v3190 = vadd.f32 %v3186, 0.2548296
        %v3191 = vadd.f32 %v3187, 0.2548296
        %v3192 = vadd.f32 %v3188, 0.2548296
        %v3193 = vmul.f32 %v3189, %v3115
        %v3194 = vmul.f32 %v3190, %v3130
        %v3195 = vmul.f32 %v3191, %v3145
        %v3196 = vmul.f32 %v3192, %v3160
        %v3197 = vsub.f32 0.0, %v3089
        %v3198 = vsub.f32 0.0, %v3090
        %v3199 = vsub.f32 0.0, %v3091
        %v3200 = vsub.f32 0.0, %v3092
        %v3201 = vmul.f32 %v3197, %v3089
        %v3202 = vmul.f32 %v3198, %v3090
        %v3203 = vmul.f32 %v3199, %v3091
        %v3204 = vmul.f32 %v3200, %v3092
        %v3205 = vmul.f32 %v3201, 1.442695
        %v3206 = vpow.pop %v3205
        %v3207 = vmul.f32 %v3202, 1.442695
        %v3208 = vpow.pop %v3207
        %v3209 = vmul.f32 %v3203, 1.442695
        %v3210 = vpow.pop %v3209
        %v3211 = vmul.f32 %v3204, 1.442695
        %v3212 = vpow.pop %v3211
        %v3213 = vmul.f32 %v3193, %v3206
        %v3214 = vmul.f32 %v3194, %v3208
        %v3215 = vmul.f32 %v3195, %v3210
        %v3216 = vmul.f32 %v3196, %v3212
        %v3217 = vsub.f32 1.0, %v3213
        %v3218 = vsub.f32 1.0, %v3214
        %v3219 = vsub.f32 1.0, %v3215
        %v3220 = vsub.f32 1.0, %v3216
        %v3221 = vmul.f32 %v3085, %v3217
        %v3222 = vmul.f32 %v3086, %v3218
        %v3223 = vmul.f32 %v3087, %v3219
        %v3224 = vmul.f32 %v3088, %v3220
        %v3225 = vadd.f32 %v3221, 1.0
        %v3226 = vadd.f32 %v3222, 1.0
        %v3227 = vadd.f32 %v3223, 1.0
        %v3228 = vadd.f32 %v3224, 1.0
        %v3229 = vmul.f32 %v3073, %v3225
        %v3230 = vmul.f32 %v3074, %v3226
        %v3231 = vmul.f32 %v3075, %v3227
        %v3232 = vmul.f32 %v3076, %v3228
        %v3233 = vadd.f32 %v2492, %v3229
        %v3234 = vadd.f32 %v2493, %v3230
        %v3235 = vadd.f32 %v2494, %v3231
        %v3236 = vadd.f32 %v2495, %v3232
        %v3237 = vmul.f32 %v3233, %v1012
        %v3238 = vmul.f32 %v3234, %v1012
        %v3239 = vmul.f32 %v3235, %v1012
        %v3240 = vmul.f32 %v3236, %v1012
        %v3241 = vld [vmem:[%s25] sm:$0xff]
        %v3242 = vld [vmem:[%s25 + $0x8] sm:$0xff]
        %v3243 = vld [vmem:[%s25 + $0x10] sm:$0xff]
        %v3244 = vld [vmem:[%s25 + $0x18] sm:$0xff]
        %v3245 = vld [vmem:[%s25 + $0x20] sm:$0xff]
        %v3246 = vld [vmem:[%s25 + $0x28] sm:$0xff]
        %v3247 = vld [vmem:[%s25 + $0x30] sm:$0xff]
        %v3248 = vld [vmem:[%s25 + $0x38] sm:$0x3]
        %v3249 = vld [vmem:[%s27] sm:$0xff]
        %v3250 = vld [vmem:[%s27 + $0x8] sm:$0xff]
        %v3251 = vld [vmem:[%s27 + $0x10] sm:$0xff]
        %v3252 = vld [vmem:[%s27 + $0x18] sm:$0xff]
        %v3253 = vld [vmem:[%s27 + $0x20] sm:$0xff]
        %v3254 = vld [vmem:[%s27 + $0x28] sm:$0xff]
        %v3255 = vld [vmem:[%s27 + $0x30] sm:$0xff]
        %v3256 = vld [vmem:[%s27 + $0x38] sm:$0x3]
        %3258 = vset.pattern.permute.xlu0 0
        %3259 = vperm.xlu0 %3258, %v3249
        %v3260 = vpop.permute.xlu0 %3259
        %3263 = vset.pattern.permute.xlu0 0
        %3264 = vperm.xlu0 %3263, %v3250
        %v3265 = vpop.permute.xlu0 %3264
        %3268 = vset.pattern.permute.xlu0 0
        %3269 = vperm.xlu0 %3268, %v3251
        %v3270 = vpop.permute.xlu0 %3269
        %3273 = vset.pattern.permute.xlu0 0
        %3274 = vperm.xlu0 %3273, %v3252
        %v3275 = vpop.permute.xlu0 %3274
        %3278 = vset.pattern.permute.xlu0 0
        %3279 = vperm.xlu0 %3278, %v3253
        %v3280 = vpop.permute.xlu0 %3279
        %3283 = vset.pattern.permute.xlu0 0
        %3284 = vperm.xlu0 %3283, %v3254
        %v3285 = vpop.permute.xlu0 %3284
        %3288 = vset.pattern.permute.xlu0 0
        %3289 = vperm.xlu0 %3288, %v3255
        %v3290 = vpop.permute.xlu0 %3289
        %3293 = vset.pattern.permute.xlu0 0
        %3294 = vperm.xlu0 %3293, %v3256
        %v3295 = vpop.permute.xlu0 %3294
        %v3298 = vsel %vm1450, %v3241, 0
        %v3301 = vsel %vm1450, %v3242, 0
        %v3304 = vsel %vm1450, %v3243, 0
        %v3307 = vsel %vm1450, %v3244, 0
        %v3310 = vsel %vm1450, %v3245, 0
        %v3313 = vsel %vm1450, %v3246, 0
        %v3316 = vsel %vm1450, %v3247, 0
        %v3319 = vsel %vm1450, %v3248, 0
        %3321 = vmatpush.msra.mxu0 0.0
        %3322 = vmatpush.msra.mxu0 0.0
        %3323 = vmatpush.msra.mxu0 0.0
        %3324 = vmatpush.msra.mxu0 0.0
        %3325 = vmatpush.msra.mxu0 0.0
        %3326 = vmatpush.msra.mxu0 0.0
        %3327 = vmatpush.msra.mxu0 0.0
        %3328 = vmatpush.msra.mxu0 0.0
        %3329 = vmatpush.msra.mxu0 0.0
        %3330 = vmatpush.msra.mxu0 0.0
        %3331 = vmatpush.msra.mxu0 0.0
        %3332 = vmatpush.msra.mxu0 0.0
        %3333 = vmatpush.msra.mxu0 %v3240
        %3334 = vmatpush.msra.mxu0 %v3239
        %3335 = vmatpush.msra.mxu0 %v3238
        %3336 = vmatpush.msra.mxu0 %v3237
        %3337 = vmatmul.f32.gmra.mxu0 %v3298
        %v3338 = vpop.f32.mrf.mxu0
        %v3339 = vadd.f32 %v3260, %v3338
        %3340 = vmatmul.f32.gmra.mxu0 %v3301
        %v3341 = vpop.f32.mrf.mxu0
        %v3342 = vadd.f32 %v3265, %v3341
        %3343 = vmatmul.f32.gmra.mxu0 %v3304
        %v3344 = vpop.f32.mrf.mxu0
        %v3345 = vadd.f32 %v3270, %v3344
        %3346 = vmatmul.f32.gmra.mxu0 %v3307
        %v3347 = vpop.f32.mrf.mxu0
        %v3348 = vadd.f32 %v3275, %v3347
        %3349 = vmatmul.f32.gmra.mxu0 %v3310
        %v3350 = vpop.f32.mrf.mxu0
        %v3351 = vadd.f32 %v3280, %v3350
        %3352 = vmatmul.f32.gmra.mxu0 %v3313
        %v3353 = vpop.f32.mrf.mxu0
        %v3354 = vadd.f32 %v3285, %v3353
        %3355 = vmatmul.f32.gmra.mxu0 %v3316
        %v3356 = vpop.f32.mrf.mxu0
        %v3357 = vadd.f32 %v3290, %v3356
        %3358 = vmatmul.f32.gmra.mxu0 %v3319
        %v3359 = vpop.f32.mrf.mxu0
        %v3360 = vadd.f32 %v3295, %v3359
        %3361 = vdwg.mxu0
        %v3362 = vmul.f32 %v3339, %v1012
        %v3363 = vmul.f32 %v3342, %v1012
        %v3364 = vmul.f32 %v3345, %v1012
        %v3365 = vmul.f32 %v3348, %v1012
        %v3366 = vmul.f32 %v3351, %v1012
        %v3367 = vmul.f32 %v3354, %v1012
        %v3368 = vmul.f32 %v3357, %v1012
        %v3369 = vmul.f32 %v3360, %v1012
        %v3370 = vmul.f32 %v3362, 0.17677669
        %v3371 = vmul.f32 %v3363, 0.17677669
        %v3372 = vmul.f32 %v3364, 0.17677669
        %v3373 = vmul.f32 %v3365, 0.17677669
        %v3374 = vmul.f32 %v3366, 0.17677669
        %vm3375 = vcmask 1041408
        %v3376 = vsel %vm3375, %v3371, -inf
        %v3377 = vmax.f32 %v3370, %v3376
        %v3378 = vrot.slane %v3377, 4
        %v3379 = vmax.f32 %v3377, %v3378
        %v3380 = vrot.slane %v3379, 2
        %v3381 = vmax.f32 %v3379, %v3380
        %v3382 = vrot.slane %v3381, 1
        %v3383 = vmax.f32 %v3381, %v3382
        %vm3384 = vcmask 1047554
        %v3385 = vsel %vm3384, %v3371, -inf
        %vm3386 = vcmask 1043456
        %v3387 = vsel %vm3386, %v3372, -inf
        %v3388 = vmax.f32 %v3385, %v3387
        %v3389 = vrot.slane %v3388, 4
        %v3390 = vmax.f32 %v3388, %v3389
        %v3391 = vrot.slane %v3390, 2
        %v3392 = vmax.f32 %v3390, %v3391
        %v3393 = vrot.slane %v3392, 1
        %v3394 = vmax.f32 %v3392, %v3393
        %vm3395 = vcmask 1047556
        %v3396 = vsel %vm3395, %v3372, -inf
        %vm3397 = vcmask 1045504
        %v3398 = vsel %vm3397, %v3373, -inf
        %v3399 = vmax.f32 %v3396, %v3398
        %v3400 = vrot.slane %v3399, 4
        %v3401 = vmax.f32 %v3399, %v3400
        %v3402 = vrot.slane %v3401, 2
        %v3403 = vmax.f32 %v3401, %v3402
        %v3404 = vrot.slane %v3403, 1
        %v3405 = vmax.f32 %v3403, %v3404
        %vm3406 = vcmask 1047558
        %v3407 = vsel %vm3406, %v3373, -inf
        %v3408 = vmax.f32 %v3407, %v3374
        %v3409 = vrot.slane %v3408, 4
        %v3410 = vmax.f32 %v3408, %v3409
        %v3411 = vrot.slane %v3410, 2
        %v3412 = vmax.f32 %v3410, %v3411
        %v3413 = vrot.slane %v3412, 1
        %v3414 = vmax.f32 %v3412, %v3413
        %vm3415 = vcmask 1040384
        %v3416 = vsel %vm3415, %v3383, %v3394
        %v3417 = vsel %vm3375, %v3416, %v3405
        %vm3418 = vcmask 1042432
        %v3419 = vsel %vm3418, %v3417, %v3414
        %v3420 = vld [vmem:[%s31] sm:$0xff]
        %v3421 = vld [vmem:[%s31 + $0x8] sm:$0xff]
        %v3422 = vld [vmem:[%s31 + $0x10] sm:$0xff]
        %v3423 = vld [vmem:[%s31 + $0x18] sm:$0xff]
        %v3424 = vld [vmem:[%s31 + $0x20] sm:$0xff]
        %vm3425 = vcmask 31744
        %v3427 = vsel %vm3425, %v3420, 0
        %v3430 = vsel %vm3425, %v3421, 0
        %v3433 = vsel %vm3425, %v3422, 0
        %v3436 = vsel %vm3425, %v3423, 0
        %v3439 = vsel %vm3425, %v3424, 0
        %v3442 = vsel %vm3386, %v3419, 0
        %3444 = vmatpush.msra.mxu0 0.0
        %3445 = vmatpush.msra.mxu0 0.0
        %3446 = vmatpush.msra.mxu0 0.0
        %3447 = vmatpush.msra.mxu0 0.0
        %3448 = vmatpush.msra.mxu0 0.0
        %3449 = vmatpush.msra.mxu0 0.0
        %3450 = vmatpush.msra.mxu0 0.0
        %3451 = vmatpush.msra.mxu0 0.0
        %3452 = vmatpush.msra.mxu0 0.0
        %3453 = vmatpush.msra.mxu0 0.0
        %3454 = vmatpush.msra.mxu0 0.0
        %3455 = vmatpush.msra.mxu0 0.0
        %3456 = vmatpush.msra.mxu0 0.0
        %3457 = vmatpush.msra.mxu0 0.0
        %3458 = vmatpush.msra.mxu0 0.0
        %3459 = vmatpush.msra.mxu0 %v3442
        %3460 = vmatmul.f32.gmra.mxu0 %v3427
        %v3461 = vpop.f32.mrf.mxu0
        %v3462 = vadd.f32 0.0, %v3461
        %3463 = vmatmul.f32.gmra.mxu0 %v3430
        %v3464 = vpop.f32.mrf.mxu0
        %v3465 = vadd.f32 0.0, %v3464
        %3466 = vmatmul.f32.gmra.mxu0 %v3433
        %v3467 = vpop.f32.mrf.mxu0
        %v3468 = vadd.f32 0.0, %v3467
        %3469 = vmatmul.f32.gmra.mxu0 %v3436
        %v3470 = vpop.f32.mrf.mxu0
        %v3471 = vadd.f32 0.0, %v3470
        %3472 = vmatmul.f32.gmra.mxu0 %v3439
        %v3473 = vpop.f32.mrf.mxu0
        %v3474 = vadd.f32 0.0, %v3473
        %3475 = vdwg.mxu0
        %v3476 = vsub.f32 %v3370, %v3462
        %v3477 = vsub.f32 %v3371, %v3465
        %v3478 = vsub.f32 %v3372, %v3468
        %v3479 = vsub.f32 %v3373, %v3471
        %v3480 = vsub.f32 %v3374, %v3474
        %v3481 = vmul.f32 %v3476, 1.442695
        %v3482 = vpow.pop %v3481
        %v3483 = vmul.f32 %v3477, 1.442695
        %v3484 = vpow.pop %v3483
        %v3485 = vmul.f32 %v3478, 1.442695
        %v3486 = vpow.pop %v3485
        %v3487 = vmul.f32 %v3479, 1.442695
        %v3488 = vpow.pop %v3487
        %v3489 = vmul.f32 %v3480, 1.442695
        %v3490 = vpow.pop %v3489
        %v3491 = vld [vmem:[%s29] sm:$0xf]
        %vm3492 = vcmask 326656
        %v3494 = vsel %vm3492, %v3491, 0
        %3496 = vmatpush.msra.mxu0 0.0
        %3497 = vmatpush.msra.mxu0 0.0
        %3498 = vmatpush.msra.mxu0 0.0
        %3499 = vmatpush.msra.mxu0 0.0
        %3500 = vmatpush.msra.mxu0 0.0
        %3501 = vmatpush.msra.mxu0 0.0
        %3502 = vmatpush.msra.mxu0 0.0
        %3503 = vmatpush.msra.mxu0 0.0
        %3504 = vmatpush.msra.mxu0 0.0
        %3505 = vmatpush.msra.mxu0 0.0
        %3506 = vmatpush.msra.mxu0 0.0
        %3507 = vmatpush.msra.mxu0 %v3490
        %3508 = vmatpush.msra.mxu0 %v3488
        %3509 = vmatpush.msra.mxu0 %v3486
        %3510 = vmatpush.msra.mxu0 %v3484
        %3511 = vmatpush.msra.mxu0 %v3482
        %3512 = vmatmul.f32.gmra.mxu0 %v3494
        %v3513 = vpop.f32.mrf.mxu0
        %v3514 = vadd.f32 0.0, %v3513
        %3515 = vdwg.mxu0
        %v3516 = vrcp.pop %v3514
        %v3517 = vmul.f32 %v3514, %v3516
        %v3518 = vsub.f32 1.0, %v3517
        %v3519 = vmul.f32 %v3516, %v3518
        %v3520 = vadd.f32 %v3516, %v3519
        %vm3521 = vweird.f32 %v3514
        %vm3522 = vweird.f32 %v3516
        %vm3523 = vmor %vm3521, %vm3522
        %v3524 = vsel %vm3523, %v3516, %v3520
        %v3525 = vand.u32 2147483647, %v3514
        %vm3526 = vcmp.eq.f32.partialorder %v3525, 8.507059e+37
        %v3527 = vand.u32 %v3514, 2147483648
        %v3528 = vor.u32 1.1754944e-38, %v3527
        %v3529 = vsel %vm3526, %v3528, %v3524
        %v3530 = vmul.f32 1.0, %v3529
        %v3532 = vsel %vm3386, %v3530, 0
        %3534 = vmatpush.msra.mxu0 0.0
        %3535 = vmatpush.msra.mxu0 0.0
        %3536 = vmatpush.msra.mxu0 0.0
        %3537 = vmatpush.msra.mxu0 0.0
        %3538 = vmatpush.msra.mxu0 0.0
        %3539 = vmatpush.msra.mxu0 0.0
        %3540 = vmatpush.msra.mxu0 0.0
        %3541 = vmatpush.msra.mxu0 0.0
        %3542 = vmatpush.msra.mxu0 0.0
        %3543 = vmatpush.msra.mxu0 0.0
        %3544 = vmatpush.msra.mxu0 0.0
        %3545 = vmatpush.msra.mxu0 0.0
        %3546 = vmatpush.msra.mxu0 0.0
        %3547 = vmatpush.msra.mxu0 0.0
        %3548 = vmatpush.msra.mxu0 0.0
        %3549 = vmatpush.msra.mxu0 %v3532
        %3550 = vmatmul.f32.gmra.mxu0 %v3427
        %v3551 = vpop.f32.mrf.mxu0
        %v3552 = vadd.f32 0.0, %v3551
        %3553 = vmatmul.f32.gmra.mxu0 %v3430
        %v3554 = vpop.f32.mrf.mxu0
        %v3555 = vadd.f32 0.0, %v3554
        %3556 = vmatmul.f32.gmra.mxu0 %v3433
        %v3557 = vpop.f32.mrf.mxu0
        %v3558 = vadd.f32 0.0, %v3557
        %3559 = vmatmul.f32.gmra.mxu0 %v3436
        %v3560 = vpop.f32.mrf.mxu0
        %v3561 = vadd.f32 0.0, %v3560
        %3562 = vmatmul.f32.gmra.mxu0 %v3439
        %v3563 = vpop.f32.mrf.mxu0
        %v3564 = vadd.f32 0.0, %v3563
        %3565 = vdwg.mxu0
        %v3566 = vmul.f32 %v3482, %v3552
        %v3567 = vmul.f32 %v3484, %v3555
        %v3568 = vmul.f32 %v3486, %v3558
        %v3569 = vmul.f32 %v3488, %v3561
        %v3570 = vmul.f32 %v3490, %v3564
        %v3571 = vmul.f32 %v3566, 0.99
        %v3572 = vmul.f32 %v3567, 0.99
        %v3573 = vmul.f32 %v3568, 0.99
        %v3574 = vmul.f32 %v3569, 0.99
        %v3575 = vmul.f32 %v3570, 0.99
        %v3576 = vadd.f32 %v3571, 0.001
        %v3577 = vadd.f32 %v3572, 0.001
        %v3578 = vadd.f32 %v3573, 0.001
        %v3579 = vadd.f32 %v3574, 0.001
        %v3580 = vadd.f32 %v3575, 0.001
        %v3581 = vld [vmem:[%s33] sm:$0xff]
        %v3582 = vld [vmem:[%s33 + $0x8] sm:$0xff]
        %v3583 = vld [vmem:[%s33 + $0x10] sm:$0xff]
        %v3584 = vld [vmem:[%s33 + $0x18] sm:$0xff]
        %v3585 = vld [vmem:[%s33 + $0x20] sm:$0xff]
        %v3586 = vld [vmem:[%s33 + $0x28] sm:$0xf]
        %v3587 = vld [vmem:[%s35] sm:$0xff]
        %v3588 = vld [vmem:[%s35 + $0x8] sm:$0xff]
        %v3589 = vld [vmem:[%s35 + $0x10] sm:$0xff]
        %v3590 = vld [vmem:[%s35 + $0x18] sm:$0xff]
        %v3591 = vld [vmem:[%s35 + $0x20] sm:$0xff]
        %v3592 = vld [vmem:[%s35 + $0x28] sm:$0xf]
        %3594 = vset.pattern.permute.xlu0 0
        %3595 = vperm.xlu0 %3594, %v3587
        %v3596 = vpop.permute.xlu0 %3595
        %3599 = vset.pattern.permute.xlu0 0
        %3600 = vperm.xlu0 %3599, %v3588
        %v3601 = vpop.permute.xlu0 %3600
        %3604 = vset.pattern.permute.xlu0 0
        %3605 = vperm.xlu0 %3604, %v3589
        %v3606 = vpop.permute.xlu0 %3605
        %3609 = vset.pattern.permute.xlu0 0
        %3610 = vperm.xlu0 %3609, %v3590
        %v3611 = vpop.permute.xlu0 %3610
        %3614 = vset.pattern.permute.xlu0 0
        %3615 = vperm.xlu0 %3614, %v3591
        %v3616 = vpop.permute.xlu0 %3615
        %3619 = vset.pattern.permute.xlu0 0
        %3620 = vperm.xlu0 %3619, %v3592
        %v3621 = vpop.permute.xlu0 %3620
        %v3624 = vsel %vm3492, %v3581, 0
        %v3627 = vsel %vm3492, %v3582, 0
        %v3630 = vsel %vm3492, %v3583, 0
        %v3633 = vsel %vm3492, %v3584, 0
        %v3636 = vsel %vm3492, %v3585, 0
        %v3639 = vsel %vm3492, %v3586, 0
        %3641 = vmatpush.msra.mxu0 0.0
        %3642 = vmatpush.msra.mxu0 0.0
        %3643 = vmatpush.msra.mxu0 0.0
        %3644 = vmatpush.msra.mxu0 0.0
        %3645 = vmatpush.msra.mxu0 0.0
        %3646 = vmatpush.msra.mxu0 0.0
        %3647 = vmatpush.msra.mxu0 0.0
        %3648 = vmatpush.msra.mxu0 0.0
        %3649 = vmatpush.msra.mxu0 0.0
        %3650 = vmatpush.msra.mxu0 0.0
        %3651 = vmatpush.msra.mxu0 0.0
        %3652 = vmatpush.msra.mxu0 %v3580
        %3653 = vmatpush.msra.mxu0 %v3579
        %3654 = vmatpush.msra.mxu0 %v3578
        %3655 = vmatpush.msra.mxu0 %v3577
        %3656 = vmatpush.msra.mxu0 %v3576
        %3657 = vmatmul.f32.gmra.mxu0 %v3624
        %v3658 = vpop.f32.mrf.mxu0
        %v3659 = vadd.f32 %v3596, %v3658
        %3660 = vmatmul.f32.gmra.mxu0 %v3627
        %v3661 = vpop.f32.mrf.mxu0
        %v3662 = vadd.f32 %v3601, %v3661
        %3663 = vmatmul.f32.gmra.mxu0 %v3630
        %v3664 = vpop.f32.mrf.mxu0
        %v3665 = vadd.f32 %v3606, %v3664
        %3666 = vmatmul.f32.gmra.mxu0 %v3633
        %v3667 = vpop.f32.mrf.mxu0
        %v3668 = vadd.f32 %v3611, %v3667
        %3669 = vmatmul.f32.gmra.mxu0 %v3636
        %v3670 = vpop.f32.mrf.mxu0
        %v3671 = vadd.f32 %v3616, %v3670
        %3672 = vmatmul.f32.gmra.mxu0 %v3639
        %v3673 = vpop.f32.mrf.mxu0
        %v3674 = vadd.f32 %v3621, %v3673
        %3675 = vdwg.mxu0
        %v3676 = vld [vmem:[%s37] sm:$0xff]
        %v3677 = vld [vmem:[%s37 + $0x8] sm:$0xff]
        %v3678 = vld [vmem:[%s37 + $0x10] sm:$0xff]
        %v3679 = vld [vmem:[%s37 + $0x18] sm:$0xff]
        %v3680 = vld [vmem:[%s37 + $0x20] sm:$0xff]
        %vm3681 = vcmask 359424
        %v3683 = vsel %vm3681, %v3676, 0
        %v3686 = vsel %vm3681, %v3677, 0
        %v3689 = vsel %vm3681, %v3678, 0
        %v3692 = vsel %vm3681, %v3679, 0
        %v3695 = vsel %vm3681, %v3680, 0
        %v3698 = vsel %vm3386, %v3674, 0
        %3700 = vmatpush.msra.mxu0 0.0
        %3701 = vmatpush.msra.mxu0 0.0
        %3702 = vmatpush.msra.mxu0 0.0
        %3703 = vmatpush.msra.mxu0 0.0
        %3704 = vmatpush.msra.mxu0 0.0
        %3705 = vmatpush.msra.mxu0 0.0
        %3706 = vmatpush.msra.mxu0 0.0
        %3707 = vmatpush.msra.mxu0 0.0
        %3708 = vmatpush.msra.mxu0 0.0
        %3709 = vmatpush.msra.mxu0 0.0
        %3710 = vmatpush.msra.mxu0 %v3698
        %3711 = vmatpush.msra.mxu0 %v3671
        %3712 = vmatpush.msra.mxu0 %v3668
        %3713 = vmatpush.msra.mxu0 %v3665
        %3714 = vmatpush.msra.mxu0 %v3662
        %3715 = vmatpush.msra.mxu0 %v3659
        %3716 = vmatmul.f32.gmra.mxu0 %v3683
        %v3717 = vpop.f32.mrf.mxu0
        %v3718 = vadd.f32 0.0, %v3717
        %3719 = vmatmul.f32.gmra.mxu0 %v3686
        %v3720 = vpop.f32.mrf.mxu0
        %v3721 = vadd.f32 0.0, %v3720
        %3722 = vmatmul.f32.gmra.mxu0 %v3689
        %v3723 = vpop.f32.mrf.mxu0
        %v3724 = vadd.f32 0.0, %v3723
        %3725 = vmatmul.f32.gmra.mxu0 %v3692
        %v3726 = vpop.f32.mrf.mxu0
        %v3727 = vadd.f32 0.0, %v3726
        %3728 = vmatmul.f32.gmra.mxu0 %v3695
        %v3729 = vpop.f32.mrf.mxu0
        %v3730 = vadd.f32 0.0, %v3729
        %3731 = vdwg.mxu0
        %v3735 = vrot.slane %v3718, 4
        %v3736 = vrot.slane %v3721, 4
        %v3737 = vsel %vm3386, %v3735, %v3736
        %v3738 = vrot.slane %v3724, 4
        %v3739 = vsel %vm3386, %v3736, %v3738
        %v3743 = vrcp.pop %v3735
        %v3744 = vmul.f32 %v3735, %v3743
        %v3745 = vsub.f32 1.0, %v3744
        %v3746 = vmul.f32 %v3743, %v3745
        %v3747 = vadd.f32 %v3743, %v3746
        %vm3748 = vweird.f32 %v3735
        %vm3749 = vweird.f32 %v3743
        %vm3750 = vmor %vm3748, %vm3749
        %v3751 = vsel %vm3750, %v3743, %v3747
        %v3752 = vand.u32 2147483647, %v3735
        %vm3753 = vcmp.eq.f32.partialorder %v3752, 8.507059e+37
        %v3754 = vand.u32 %v3735, 2147483648
        %v3755 = vor.u32 1.1754944e-38, %v3754
        %v3756 = vsel %vm3753, %v3755, %v3751
        %v3757 = vmul.f32 %v3724, %v3756
        %v3758 = vrcp.pop %v3737
        %v3759 = vmul.f32 %v3737, %v3758
        %v3760 = vsub.f32 1.0, %v3759
        %v3761 = vmul.f32 %v3758, %v3760
        %v3762 = vadd.f32 %v3758, %v3761
        %vm3763 = vweird.f32 %v3737
        %vm3764 = vweird.f32 %v3758
        %vm3765 = vmor %vm3763, %vm3764
        %v3766 = vsel %vm3765, %v3758, %v3762
        %v3767 = vand.u32 2147483647, %v3737
        %vm3768 = vcmp.eq.f32.partialorder %v3767, 8.507059e+37
        %v3769 = vand.u32 %v3737, 2147483648
        %v3770 = vor.u32 1.1754944e-38, %v3769
        %v3771 = vsel %vm3768, %v3770, %v3766
        %v3772 = vmul.f32 %v3727, %v3771
        %v3773 = vrcp.pop %v3739
        %v3774 = vmul.f32 %v3739, %v3773
        %v3775 = vsub.f32 1.0, %v3774
        %v3776 = vmul.f32 %v3773, %v3775
        %v3777 = vadd.f32 %v3773, %v3776
        %vm3778 = vweird.f32 %v3739
        %vm3779 = vweird.f32 %v3773
        %vm3780 = vmor %vm3778, %vm3779
        %v3781 = vsel %vm3780, %v3773, %v3777
        %v3782 = vand.u32 2147483647, %v3739
        %vm3783 = vcmp.eq.f32.partialorder %v3782, 8.507059e+37
        %v3784 = vand.u32 %v3739, 2147483648
        %v3785 = vor.u32 1.1754944e-38, %v3784
        %v3786 = vsel %vm3783, %v3785, %v3781
        %v3787 = vmul.f32 %v3730, %v3786
        %v3788 = vld [vmem:[%s39] sm:$0xff]
        %v3789 = vld [vmem:[%s39 + $0x8] sm:$0xff]
        %v3790 = vld [vmem:[%s39 + $0x10] sm:$0xf]
        %v3791 = vld [vmem:[%s41] sm:$0xff]
        %v3792 = vld [vmem:[%s41 + $0x8] sm:$0xff]
        %v3793 = vld [vmem:[%s41 + $0x10] sm:$0xf]
        %3795 = vset.pattern.permute.xlu0 0
        %3796 = vperm.xlu0 %3795, %v3791
        %v3797 = vpop.permute.xlu0 %3796
        %3800 = vset.pattern.permute.xlu0 0
        %3801 = vperm.xlu0 %3800, %v3792
        %v3802 = vpop.permute.xlu0 %3801
        %3805 = vset.pattern.permute.xlu0 0
        %3806 = vperm.xlu0 %3805, %v3793
        %v3807 = vpop.permute.xlu0 %3806
        %vm3809 = vcmask 146432
        %v3811 = vsel %vm3809, %v3788, 0
        %v3814 = vsel %vm3809, %v3789, 0
        %v3817 = vsel %vm3809, %v3790, 0
        %v3820 = vsel %vm3375, %v3369, 0
        %3822 = vmatpush.msra.mxu0 0.0
        %3823 = vmatpush.msra.mxu0 0.0
        %3824 = vmatpush.msra.mxu0 0.0
        %3825 = vmatpush.msra.mxu0 0.0
        %3826 = vmatpush.msra.mxu0 0.0
        %3827 = vmatpush.msra.mxu0 0.0
        %3828 = vmatpush.msra.mxu0 0.0
        %3829 = vmatpush.msra.mxu0 0.0
        %3830 = vmatpush.msra.mxu0 0.0
        %3831 = vmatpush.msra.mxu0 0.0
        %3832 = vmatpush.msra.mxu0 0.0
        %3833 = vmatpush.msra.mxu0 0.0
        %3834 = vmatpush.msra.mxu0 0.0
        %3835 = vmatpush.msra.mxu0 %v3820
        %3836 = vmatpush.msra.mxu0 %v3368
        %3837 = vmatpush.msra.mxu0 %v3367
        %3838 = vmatmul.f32.gmra.mxu0 %v3811
        %v3839 = vpop.f32.mrf.mxu0
        %v3840 = vadd.f32 %v3797, %v3839
        %3841 = vmatmul.f32.gmra.mxu0 %v3814
        %v3842 = vpop.f32.mrf.mxu0
        %v3843 = vadd.f32 %v3802, %v3842
        %3844 = vmatmul.f32.gmra.mxu0 %v3817
        %v3845 = vpop.f32.mrf.mxu0
        %v3846 = vadd.f32 %v3807, %v3845
        %3847 = vdwg.mxu0
        %vm3848 = vcmp.gt.f32.partialorder %v3840, 20.0
        %vm3849 = vcmp.gt.f32.partialorder %v3843, 20.0
        %vm3850 = vcmp.gt.f32.partialorder %v3846, 20.0
        %v3851 = vmin.f32 %v3840, 20.0
        %v3852 = vmin.f32 %v3843, 20.0
        %v3853 = vmin.f32 %v3846, 20.0
        %v3854 = vmul.f32 %v3851, 1.442695
        %v3855 = vpow.pop %v3854
        %v3856 = vmul.f32 %v3852, 1.442695
        %v3857 = vpow.pop %v3856
        %v3858 = vmul.f32 %v3853, 1.442695
        %v3859 = vpow.pop %v3858
        %v3860 = vadd.f32 %v3855, 1.0
        %v3861 = vadd.f32 %v3857, 1.0
        %v3862 = vadd.f32 %v3859, 1.0
        %v3863 = vlog2.pop %v3860
        %v3864 = vmul.f32 %v3863, 0.6931472
        %v3865 = vlog2.pop %v3861
        %v3866 = vmul.f32 %v3865, 0.6931472
        %v3867 = vlog2.pop %v3862
        %v3868 = vmul.f32 %v3867, 0.6931472
        %v3869 = vsel %vm3848, %v3840, %v3864
        %v3870 = vsel %vm3849, %v3843, %v3866
        %v3871 = vsel %vm3850, %v3846, %v3868
        %v3872 = vadd.f32 %v3869, 0.001
        %v3873 = vadd.f32 %v3870, 0.001
        %v3874 = vadd.f32 %v3871, 0.001
        %v3875 = vld [vmem:[%s43] sm:$0xff]
        %v3876 = vld [vmem:[%s43 + $0x8] sm:$0xff]
        %v3877 = vld [vmem:[%s43 + $0x10] sm:$0xf]
        %v3878 = vld [vmem:[%s45] sm:$0xff]
        %v3879 = vld [vmem:[%s45 + $0x8] sm:$0xff]
        %v3880 = vld [vmem:[%s45 + $0x10] sm:$0xf]
        %3882 = vset.pattern.permute.xlu0 0
        %3883 = vperm.xlu0 %3882, %v3878
        %v3884 = vpop.permute.xlu0 %3883
        %3887 = vset.pattern.permute.xlu0 0
        %3888 = vperm.xlu0 %3887, %v3879
        %v3889 = vpop.permute.xlu0 %3888
        %3892 = vset.pattern.permute.xlu0 0
        %3893 = vperm.xlu0 %3892, %v3880
        %v3894 = vpop.permute.xlu0 %3893
        %v3897 = vsel %vm3809, %v3875, 0
        %v3900 = vsel %vm3809, %v3876, 0
        %v3903 = vsel %vm3809, %v3877, 0
        %3905 = vmatpush.msra.mxu0 0.0
        %3906 = vmatpush.msra.mxu0 0.0
        %3907 = vmatpush.msra.mxu0 0.0
        %3908 = vmatpush.msra.mxu0 0.0
        %3909 = vmatpush.msra.mxu0 0.0
        %3910 = vmatpush.msra.mxu0 0.0
        %3911 = vmatpush.msra.mxu0 0.0
        %3912 = vmatpush.msra.mxu0 0.0
        %3913 = vmatpush.msra.mxu0 0.0
        %3914 = vmatpush.msra.mxu0 0.0
        %3915 = vmatpush.msra.mxu0 0.0
        %3916 = vmatpush.msra.mxu0 0.0
        %3917 = vmatpush.msra.mxu0 0.0
        %3918 = vmatpush.msra.mxu0 %v3820
        %3919 = vmatpush.msra.mxu0 %v3368
        %3920 = vmatpush.msra.mxu0 %v3367
        %3921 = vmatmul.f32.gmra.mxu0 %v3897
        %v3922 = vpop.f32.mrf.mxu0
        %v3923 = vadd.f32 %v3884, %v3922
        %3924 = vmatmul.f32.gmra.mxu0 %v3900
        %v3925 = vpop.f32.mrf.mxu0
        %v3926 = vadd.f32 %v3889, %v3925
        %3927 = vmatmul.f32.gmra.mxu0 %v3903
        %v3928 = vpop.f32.mrf.mxu0
        %v3929 = vadd.f32 %v3894, %v3928
        %3930 = vdwg.mxu0
        %vm3931 = vcmp.gt.f32.partialorder %v3923, 20.0
        %vm3932 = vcmp.gt.f32.partialorder %v3926, 20.0
        %vm3933 = vcmp.gt.f32.partialorder %v3929, 20.0
        %v3934 = vmin.f32 %v3923, 20.0
        %v3935 = vmin.f32 %v3926, 20.0
        %v3936 = vmin.f32 %v3929, 20.0
        %v3937 = vmul.f32 %v3934, 1.442695
        %v3938 = vpow.pop %v3937
        %v3939 = vmul.f32 %v3935, 1.442695
        %v3940 = vpow.pop %v3939
        %v3941 = vmul.f32 %v3936, 1.442695
        %v3942 = vpow.pop %v3941
        %v3943 = vadd.f32 %v3938, 1.0
        %v3944 = vadd.f32 %v3940, 1.0
        %v3945 = vadd.f32 %v3942, 1.0
        %v3946 = vlog2.pop %v3943
        %v3947 = vmul.f32 %v3946, 0.6931472
        %v3948 = vlog2.pop %v3944
        %v3949 = vmul.f32 %v3948, 0.6931472
        %v3950 = vlog2.pop %v3945
        %v3951 = vmul.f32 %v3950, 0.6931472
        %v3952 = vsel %vm3931, %v3923, %v3947
        %v3953 = vsel %vm3932, %v3926, %v3949
        %v3954 = vsel %vm3933, %v3929, %v3951
        %v3955 = vadd.f32 %v3952, 0.001
        %v3956 = vadd.f32 %v3953, 0.001
        %v3957 = vadd.f32 %v3954, 0.001
        %vm3958 = vcmp.ge.f32.partialorder %v921, -5.0
        %vm3959 = vcmp.le.f32.partialorder %v921, 5.0
        %vm3960 = vmand %vm3958, %vm3959
        %v3961 = vmax.f32 %v921, -5.0
        %v3962 = vmin.f32 %v3961, 5.0
        %v3963 = vld [vmem:[%s47] sm:$0xff]
        %v3964 = vld [vmem:[%s47 + $0x8] sm:$0xff]
        %v3965 = vld [vmem:[%s47 + $0x10] sm:$0x3f]
        %v3967 = vrot.slane %v3962, 2
        %vm3968 = vcmask 15360
        %v3970 = vsel %vm3968, %v3963, 0
        %v3973 = vsel %vm3968, %v3964, 0
        %v3976 = vsel %vm3968, %v3965, 0
        %v3978 = vsel %vm3375, %v3967, 0
        %3980 = vmatpush.msra.mxu0 0.0
        %3981 = vmatpush.msra.mxu0 0.0
        %3982 = vmatpush.msra.mxu0 0.0
        %3983 = vmatpush.msra.mxu0 0.0
        %3984 = vmatpush.msra.mxu0 0.0
        %3985 = vmatpush.msra.mxu0 0.0
        %3986 = vmatpush.msra.mxu0 0.0
        %3987 = vmatpush.msra.mxu0 0.0
        %3988 = vmatpush.msra.mxu0 0.0
        %3989 = vmatpush.msra.mxu0 0.0
        %3990 = vmatpush.msra.mxu0 0.0
        %3991 = vmatpush.msra.mxu0 0.0
        %3992 = vmatpush.msra.mxu0 0.0
        %3993 = vmatpush.msra.mxu0 0.0
        %3994 = vmatpush.msra.mxu0 0.0
        %3995 = vmatpush.msra.mxu0 %v3978
        %3996 = vmatmul.f32.gmra.mxu0 %v3970
        %v3997 = vpop.f32.mrf.mxu0
        %v3998 = vadd.f32 0.0, %v3997
        %3999 = vmatmul.f32.gmra.mxu0 %v3973
        %v4000 = vpop.f32.mrf.mxu0
        %v4001 = vadd.f32 0.0, %v4000
        %4002 = vmatmul.f32.gmra.mxu0 %v3976
        %v4003 = vpop.f32.mrf.mxu0
        %v4004 = vadd.f32 0.0, %v4003
        %4005 = vdwg.mxu0
        %v4006 = vld [vmem:[%s49] sm:$0xff]
        %v4007 = vld [vmem:[%s49 + $0x8] sm:$0xff]
        %v4008 = vld [vmem:[%s49 + $0x10] sm:$0x3f]
        %4010 = vset.pattern.permute.xlu0 0
        %4011 = vperm.xlu0 %4010, %v4006
        %v4012 = vpop.permute.xlu0 %4011
        %4015 = vset.pattern.permute.xlu0 0
        %4016 = vperm.xlu0 %4015, %v4007
        %v4017 = vpop.permute.xlu0 %4016
        %4020 = vset.pattern.permute.xlu0 0
        %4021 = vperm.xlu0 %4020, %v4008
        %v4022 = vpop.permute.xlu0 %4021
        %v4024 = vadd.f32 %v3659, %v4012
        %v4025 = vadd.f32 %v3662, %v4017
        %v4026 = vadd.f32 %v3665, %v4022
        %vm4027 = vcmp.ge.f32.partialorder %v3998, %v4024
        %vm4028 = vcmp.ge.f32.partialorder %v4001, %v4025
        %vm4029 = vcmp.ge.f32.partialorder %v4004, %v4026
        %v4030 = vsel %vm4027, 1, 0
        %v4031 = vsel %vm4028, 1, 0
        %v4032 = vsel %vm4029, 1, 0
        %v4033 = vcvt.s32.f32 %v4030
        %v4034 = vcvt.s32.f32 %v4031
        %v4035 = vcvt.s32.f32 %v4032
        %v4036 = vld [vmem:[%s51] sm:$0xff]
        %v4037 = vld [vmem:[%s51 + $0x8] sm:$0xff]
        %v4038 = vld [vmem:[%s51 + $0x10] sm:$0xf]
        %vm4039 = vcmask 179200
        %v4041 = vsel %vm4039, %v4036, 0
        %v4044 = vsel %vm4039, %v4037, 0
        %v4047 = vsel %vm4039, %v4038, 0
        %v4050 = vsel %vm3397, %v4035, 0
        %4052 = vmatpush.msra.mxu0 0.0
        %4053 = vmatpush.msra.mxu0 0.0
        %4054 = vmatpush.msra.mxu0 0.0
        %4055 = vmatpush.msra.mxu0 0.0
        %4056 = vmatpush.msra.mxu0 0.0
        %4057 = vmatpush.msra.mxu0 0.0
        %4058 = vmatpush.msra.mxu0 0.0
        %4059 = vmatpush.msra.mxu0 0.0
        %4060 = vmatpush.msra.mxu0 0.0
        %4061 = vmatpush.msra.mxu0 0.0
        %4062 = vmatpush.msra.mxu0 0.0
        %4063 = vmatpush.msra.mxu0 0.0
        %4064 = vmatpush.msra.mxu0 0.0
        %4065 = vmatpush.msra.mxu0 %v4050
        %4066 = vmatpush.msra.mxu0 %v4034
        %4067 = vmatpush.msra.mxu0 %v4033
        %4068 = vmatmul.f32.gmra.mxu0 %v4041
        %v4069 = vpop.f32.mrf.mxu0
        %v4070 = vadd.f32 0.0, %v4069
        %4071 = vmatmul.f32.gmra.mxu0 %v4044
        %v4072 = vpop.f32.mrf.mxu0
        %v4073 = vadd.f32 0.0, %v4072
        %4074 = vmatmul.f32.gmra.mxu0 %v4047
        %v4075 = vpop.f32.mrf.mxu0
        %v4076 = vadd.f32 0.0, %v4075
        %4077 = vdwg.mxu0
        %v4078 = vld [vmem:[%s53] sm:$0xff]
        %v4079 = vld [vmem:[%s53 + $0x8] sm:$0xff]
        %v4080 = vld [vmem:[%s53 + $0x10] sm:$0xf]
        %v4082 = vsel %vm4039, %v4078, 0
        %v4085 = vsel %vm4039, %v4079, 0
        %v4088 = vsel %vm4039, %v4080, 0
        %v4091 = vsel %vm3397, %v3665, 0
        %4093 = vmatpush.msra.mxu0 0.0
        %4094 = vmatpush.msra.mxu0 0.0
        %4095 = vmatpush.msra.mxu0 0.0
        %4096 = vmatpush.msra.mxu0 0.0
        %4097 = vmatpush.msra.mxu0 0.0
        %4098 = vmatpush.msra.mxu0 0.0
        %4099 = vmatpush.msra.mxu0 0.0
        %4100 = vmatpush.msra.mxu0 0.0
        %4101 = vmatpush.msra.mxu0 0.0
        %4102 = vmatpush.msra.mxu0 0.0
        %4103 = vmatpush.msra.mxu0 0.0
        %4104 = vmatpush.msra.mxu0 0.0
        %4105 = vmatpush.msra.mxu0 0.0
        %4106 = vmatpush.msra.mxu0 %v4091
        %4107 = vmatpush.msra.mxu0 %v3662
        %4108 = vmatpush.msra.mxu0 %v3659
        %4109 = vmatmul.f32.gmra.mxu0 %v4082
        %v4110 = vpop.f32.mrf.mxu0
        %v4111 = vadd.f32 0.0, %v4110
        %4112 = vmatmul.f32.gmra.mxu0 %v4085
        %v4113 = vpop.f32.mrf.mxu0
        %v4114 = vadd.f32 0.0, %v4113
        %4115 = vmatmul.f32.gmra.mxu0 %v4088
        %v4116 = vpop.f32.mrf.mxu0
        %v4117 = vadd.f32 0.0, %v4116
        %4118 = vdwg.mxu0
        %v4121 = vrot.slane %v3665, 6
        %v4122 = vrot.slane %v3668, 6
        %v4123 = vsel %vm3375, %v4121, %v4122
        %v4124 = vrot.slane %v3671, 6
        %v4125 = vsel %vm3375, %v4122, %v4124
        %v4126 = vrot.slane %v3674, 6
        %v4127 = vsel %vm3375, %v4124, %v4126
        %v4130 = vsel %vm3397, %v4127, 0
        %4132 = vmatpush.msra.mxu0 0.0
        %4133 = vmatpush.msra.mxu0 0.0
        %4134 = vmatpush.msra.mxu0 0.0
        %4135 = vmatpush.msra.mxu0 0.0
        %4136 = vmatpush.msra.mxu0 0.0
        %4137 = vmatpush.msra.mxu0 0.0
        %4138 = vmatpush.msra.mxu0 0.0
        %4139 = vmatpush.msra.mxu0 0.0
        %4140 = vmatpush.msra.mxu0 0.0
        %4141 = vmatpush.msra.mxu0 0.0
        %4142 = vmatpush.msra.mxu0 0.0
        %4143 = vmatpush.msra.mxu0 0.0
        %4144 = vmatpush.msra.mxu0 0.0
        %4145 = vmatpush.msra.mxu0 %v4130
        %4146 = vmatpush.msra.mxu0 %v4125
        %4147 = vmatpush.msra.mxu0 %v4123
        %4148 = vmatmul.f32.gmra.mxu0 %v4082
        %v4149 = vpop.f32.mrf.mxu0
        %v4150 = vadd.f32 0.0, %v4149
        %4151 = vmatmul.f32.gmra.mxu0 %v4085
        %v4152 = vpop.f32.mrf.mxu0
        %v4153 = vadd.f32 0.0, %v4152
        %4154 = vmatmul.f32.gmra.mxu0 %v4088
        %v4155 = vpop.f32.mrf.mxu0
        %v4156 = vadd.f32 0.0, %v4155
        %4157 = vdwg.mxu0
        %v4158 = vld [vmem:[%s55] sm:$0x3]
        %v4159 = vmul.f32 %v4111, %v4070
        %v4160 = vmul.f32 %v4114, %v4073
        %v4161 = vmul.f32 %v4117, %v4076
        %vm4162 = vcmask 162816
        %v4164 = vsel %vm4162, %v4158, 0
        %v4167 = vsel %vm3386, %v4161, 0
        %4169 = vmatpush.msra.mxu0 0.0
        %4170 = vmatpush.msra.mxu0 0.0
        %4171 = vmatpush.msra.mxu0 0.0
        %4172 = vmatpush.msra.mxu0 0.0
        %4173 = vmatpush.msra.mxu0 0.0
        %4174 = vmatpush.msra.mxu0 0.0
        %4175 = vmatpush.msra.mxu0 0.0
        %4176 = vmatpush.msra.mxu0 0.0
        %4177 = vmatpush.msra.mxu0 0.0
        %4178 = vmatpush.msra.mxu0 0.0
        %4179 = vmatpush.msra.mxu0 0.0
        %4180 = vmatpush.msra.mxu0 0.0
        %4181 = vmatpush.msra.mxu0 0.0
        %4182 = vmatpush.msra.mxu0 %v4167
        %4183 = vmatpush.msra.mxu0 %v4160
        %4184 = vmatpush.msra.mxu0 %v4159
        %4185 = vmatmul.f32.gmra.mxu0 %v4164
        %v4186 = vpop.f32.mrf.mxu0
        %v4187 = vadd.f32 0.0, %v4186
        %4188 = vdwg.mxu0
        %v4189 = vmul.f32 %v3718, %v4070
        %v4190 = vmul.f32 %v3721, %v4073
        %v4191 = vmul.f32 %v3724, %v4076
        %v4193 = vsel %vm3386, %v4191, 0
        %4195 = vmatpush.msra.mxu0 0.0
        %4196 = vmatpush.msra.mxu0 0.0
        %4197 = vmatpush.msra.mxu0 0.0
        %4198 = vmatpush.msra.mxu0 0.0
        %4199 = vmatpush.msra.mxu0 0.0
        %4200 = vmatpush.msra.mxu0 0.0
        %4201 = vmatpush.msra.mxu0 0.0
        %4202 = vmatpush.msra.mxu0 0.0
        %4203 = vmatpush.msra.mxu0 0.0
        %4204 = vmatpush.msra.mxu0 0.0
        %4205 = vmatpush.msra.mxu0 0.0
        %4206 = vmatpush.msra.mxu0 0.0
        %4207 = vmatpush.msra.mxu0 0.0
        %4208 = vmatpush.msra.mxu0 %v4193
        %4209 = vmatpush.msra.mxu0 %v4190
        %4210 = vmatpush.msra.mxu0 %v4189
        %4211 = vmatmul.f32.gmra.mxu0 %v4164
        %v4212 = vpop.f32.mrf.mxu0
        %v4213 = vadd.f32 0.0, %v4212
        %4214 = vdwg.mxu0
        %v4215 = vmul.f32 %v4150, %v4070
        %v4216 = vmul.f32 %v4153, %v4073
        %v4217 = vmul.f32 %v4156, %v4076
        %v4221 = vrot.slane %v4070, 4
        %v4222 = vrot.slane %v4073, 4
        %v4223 = vsel %vm3386, %v4221, %v4222
        %v4224 = vrot.slane %v4076, 4
        %v4225 = vsel %vm3386, %v4222, %v4224
        %v4229 = vmul.f32 %v3724, %v4221
        %v4230 = vmul.f32 %v3727, %v4223
        %v4231 = vmul.f32 %v3730, %v4225
        %v4235 = vrot.slane %v4229, 4
        %v4236 = vrot.slane %v4230, 4
        %v4237 = vsel %vm3386, %v4235, %v4236
        %v4238 = vrot.slane %v4231, 4
        %v4239 = vsel %vm3386, %v4236, %v4238
        %v4242 = vsel %vm3386, %v4238, 0
        %4244 = vmatpush.msra.mxu0 0.0
        %4245 = vmatpush.msra.mxu0 0.0
        %4246 = vmatpush.msra.mxu0 0.0
        %4247 = vmatpush.msra.mxu0 0.0
        %4248 = vmatpush.msra.mxu0 0.0
        %4249 = vmatpush.msra.mxu0 0.0
        %4250 = vmatpush.msra.mxu0 0.0
        %4251 = vmatpush.msra.mxu0 0.0
        %4252 = vmatpush.msra.mxu0 0.0
        %4253 = vmatpush.msra.mxu0 0.0
        %4254 = vmatpush.msra.mxu0 0.0
        %4255 = vmatpush.msra.mxu0 0.0
        %4256 = vmatpush.msra.mxu0 0.0
        %4257 = vmatpush.msra.mxu0 %v4242
        %4258 = vmatpush.msra.mxu0 %v4239
        %4259 = vmatpush.msra.mxu0 %v4237
        %4260 = vmatmul.f32.gmra.mxu0 %v4164
        %v4261 = vpop.f32.mrf.mxu0
        %v4262 = vadd.f32 0.0, %v4261
        %4263 = vdwg.mxu0
        %v4264 = vmul.f32 %v3757, %v4221
        %v4265 = vmul.f32 %v3772, %v4223
        %v4266 = vmul.f32 %v3787, %v4225
        %v4270 = vrot.slane %v4264, 4
        %v4271 = vrot.slane %v4265, 4
        %v4272 = vsel %vm3386, %v4270, %v4271
        %v4273 = vrot.slane %v4266, 4
        %v4274 = vsel %vm3386, %v4271, %v4273
        %v4277 = vsel %vm3386, %v4273, 0
        %4279 = vmatpush.msra.mxu0 0.0
        %4280 = vmatpush.msra.mxu0 0.0
        %4281 = vmatpush.msra.mxu0 0.0
        %4282 = vmatpush.msra.mxu0 0.0
        %4283 = vmatpush.msra.mxu0 0.0
        %4284 = vmatpush.msra.mxu0 0.0
        %4285 = vmatpush.msra.mxu0 0.0
        %4286 = vmatpush.msra.mxu0 0.0
        %4287 = vmatpush.msra.mxu0 0.0
        %4288 = vmatpush.msra.mxu0 0.0
        %4289 = vmatpush.msra.mxu0 0.0
        %4290 = vmatpush.msra.mxu0 0.0
        %4291 = vmatpush.msra.mxu0 0.0
        %4292 = vmatpush.msra.mxu0 %v4277
        %4293 = vmatpush.msra.mxu0 %v4274
        %4294 = vmatpush.msra.mxu0 %v4272
        %4295 = vmatmul.f32.gmra.mxu0 %v4164
        %v4296 = vpop.f32.mrf.mxu0
        %v4297 = vadd.f32 0.0, %v4296
        %4298 = vdwg.mxu0
        %v4299 = vmul.f32 %v3872, %v4070
        %v4300 = vmul.f32 %v3873, %v4073
        %v4301 = vmul.f32 %v3874, %v4076
        %v4303 = vsel %vm3386, %v4301, 0
        %4305 = vmatpush.msra.mxu0 0.0
        %4306 = vmatpush.msra.mxu0 0.0
        %4307 = vmatpush.msra.mxu0 0.0
        %4308 = vmatpush.msra.mxu0 0.0
        %4309 = vmatpush.msra.mxu0 0.0
        %4310 = vmatpush.msra.mxu0 0.0
        %4311 = vmatpush.msra.mxu0 0.0
        %4312 = vmatpush.msra.mxu0 0.0
        %4313 = vmatpush.msra.mxu0 0.0
        %4314 = vmatpush.msra.mxu0 0.0
        %4315 = vmatpush.msra.mxu0 0.0
        %4316 = vmatpush.msra.mxu0 0.0
        %4317 = vmatpush.msra.mxu0 0.0
        %4318 = vmatpush.msra.mxu0 %v4303
        %4319 = vmatpush.msra.mxu0 %v4300
        %4320 = vmatpush.msra.mxu0 %v4299
        %4321 = vmatmul.f32.gmra.mxu0 %v4164
        %v4322 = vpop.f32.mrf.mxu0
        %v4323 = vadd.f32 0.0, %v4322
        %4324 = vdwg.mxu0
        %v4325 = vmul.f32 %v3955, %v4070
        %v4326 = vmul.f32 %v3956, %v4073
        %v4327 = vmul.f32 %v3957, %v4076
        %v4329 = vsel %vm3386, %v4327, 0
        %4331 = vmatpush.msra.mxu0 0.0
        %4332 = vmatpush.msra.mxu0 0.0
        %4333 = vmatpush.msra.mxu0 0.0
        %4334 = vmatpush.msra.mxu0 0.0
        %4335 = vmatpush.msra.mxu0 0.0
        %4336 = vmatpush.msra.mxu0 0.0
        %4337 = vmatpush.msra.mxu0 0.0
        %4338 = vmatpush.msra.mxu0 0.0
        %4339 = vmatpush.msra.mxu0 0.0
        %4340 = vmatpush.msra.mxu0 0.0
        %4341 = vmatpush.msra.mxu0 0.0
        %4342 = vmatpush.msra.mxu0 0.0
        %4343 = vmatpush.msra.mxu0 0.0
        %4344 = vmatpush.msra.mxu0 %v4329
        %4345 = vmatpush.msra.mxu0 %v4326
        %4346 = vmatpush.msra.mxu0 %v4325
        %4347 = vmatmul.f32.gmra.mxu0 %v4164
        %v4348 = vpop.f32.mrf.mxu0
        %v4349 = vadd.f32 0.0, %v4348
        %4350 = vdwg.mxu0
        %v4352 = vrot.slane %v4187, 6
        %v4354 = vsub.f32 %v3962, %v4352
        %v4356 = vrot.slane %v4213, 6
        %v4358 = vrcp.pop %v4356
        %v4359 = vmul.f32 %v4356, %v4358
        %v4360 = vsub.f32 1.0, %v4359
        %v4361 = vmul.f32 %v4358, %v4360
        %v4362 = vadd.f32 %v4358, %v4361
        %vm4363 = vweird.f32 %v4356
        %vm4364 = vweird.f32 %v4358
        %vm4365 = vmor %vm4363, %vm4364
        %v4366 = vsel %vm4365, %v4358, %v4362
        %v4367 = vand.u32 2147483647, %v4356
        %vm4368 = vcmp.eq.f32.partialorder %v4367, 8.507059e+37
        %v4369 = vand.u32 %v4356, 2147483648
        %v4370 = vor.u32 1.1754944e-38, %v4369
        %v4371 = vsel %vm4368, %v4370, %v4366
        %v4372 = vmul.f32 %v4354, %v4371
        %v4373 = vsub.f32 1.0, %v4372
        %v4374 = vmul.f32 %v4372, %v4373
        %v4375 = vadd.f32 %v4323, %v4349
        %v4376 = vmul.f32 %v4297, 2.0
        %v4377 = vsub.f32 %v4375, %v4376
        %v4379 = vrot.slane %v4372, 2
        %v4381 = vmul.f32 %v4297, %v4379
        %v4382 = vmul.f32 %v4381, %v4379
        %v4384 = vrot.slane %v4374, 2
        %v4386 = vmul.f32 %v4323, %v4384
        %v4387 = vadd.f32 %v4382, %v4386
        %v4388 = vmul.f32 %v4262, %v4387
        %v4389 = vmul.f32 %v4377, %v4384
        %v4390 = vadd.f32 %v4297, %v4389
        %v4391 = vrcp.pop %v4390
        %v4392 = vmul.f32 %v4390, %v4391
        %v4393 = vsub.f32 1.0, %v4392
        %v4394 = vmul.f32 %v4391, %v4393
        %v4395 = vadd.f32 %v4391, %v4394
        %vm4396 = vweird.f32 %v4390
        %vm4397 = vweird.f32 %v4391
        %vm4398 = vmor %vm4396, %vm4397
        %v4399 = vsel %vm4398, %v4391, %v4395
        %v4400 = vand.u32 2147483647, %v4390
        %vm4401 = vcmp.eq.f32.partialorder %v4400, 8.507059e+37
        %v4402 = vand.u32 %v4390, 2147483648
        %v4403 = vor.u32 1.1754944e-38, %v4402
        %v4404 = vsel %vm4401, %v4403, %v4399
        %v4405 = vmul.f32 %v4388, %v4404
        %v4407 = vsel %vm3386, %v4217, 0
        %4409 = vmatpush.msra.mxu0 0.0
        %4410 = vmatpush.msra.mxu0 0.0
        %4411 = vmatpush.msra.mxu0 0.0
        %4412 = vmatpush.msra.mxu0 0.0
        %4413 = vmatpush.msra.mxu0 0.0
        %4414 = vmatpush.msra.mxu0 0.0
        %4415 = vmatpush.msra.mxu0 0.0
        %4416 = vmatpush.msra.mxu0 0.0
        %4417 = vmatpush.msra.mxu0 0.0
        %4418 = vmatpush.msra.mxu0 0.0
        %4419 = vmatpush.msra.mxu0 0.0
        %4420 = vmatpush.msra.mxu0 0.0
        %4421 = vmatpush.msra.mxu0 0.0
        %4422 = vmatpush.msra.mxu0 %v4407
        %4423 = vmatpush.msra.mxu0 %v4216
        %4424 = vmatpush.msra.mxu0 %v4215
        %4425 = vmatmul.f32.gmra.mxu0 %v4164
        %v4426 = vpop.f32.mrf.mxu0
        %v4427 = vadd.f32 %v4405, %v4426
        %4428 = vdwg.mxu0
        %v4429 = vmul.f32 %v4297, %v4297
        %v4430 = vmul.f32 %v4349, %v4379
        %v4431 = vmul.f32 %v4430, %v4379
        %v4432 = vmul.f32 %v4376, %v4384
        %v4433 = vadd.f32 %v4431, %v4432
        %v4435 = vrot.slane %v4373, 2
        %v4437 = vmul.f32 %v4323, %v4435
        %v4438 = vmul.f32 %v4437, %v4435
        %v4439 = vadd.f32 %v4433, %v4438
        %v4440 = vmul.f32 %v4429, %v4439
        %v4441 = vlog2.pop %v4440
        %v4442 = vmul.f32 %v4441, 0.6931472
        %v4443 = vlog2.pop %v4390
        %v4444 = vmul.f32 %v4443, 0.6931472
        %v4445 = vmul.f32 %v4444, 2.0
        %v4446 = vsub.f32 %v4442, %v4445
        %v4448 = vrot.slane %v4427, 6
        %v4450 = vsel %vm3960, %v4448, %v921
        %v4452 = vrot.slane %v4446, 6
        %v4454 = vsel %vm3960, %v4452, 0.0
        %v4455 = vsel %vm3375, %v921, %v4450
        %v4456 = vmul.f32 %v4455, %v1012
        %4457 = vst [vmem:[%s905] sm:$0xf] %v4456
        %v4458 = vmul.f32 %v4454, %v1012
        %vm4459 = vcmask 1043458
        %v4460 = vsel %vm4459, %v4458, 0.0
        %4461 = vadd.xlane.f32.xlu0 %v4460
        %v4462 = vpop.xlane.xlu0 %4461
        %v4464 = vrot.slane %v4462, 2
        %v4466 = vsel %vm3375, %v4464, 0.0
        %v4467 = vrot.slane %v4466, 4
        %v4468 = vadd.f32 %v4466, %v4467
        %v4469 = vrot.slane %v4468, 2
        %v4470 = vadd.f32 %v4468, %v4469
        %v4471 = vrot.slane %v4470, 1
        %v4472 = vadd.f32 %v4470, %v4471
        %vm4473 = vcmask 0
        %4474 = vst.msk [vmem:[%s920] sm:$0x1] %vm4473, %v4472
        %s4475 = sand.u32 %s680, 1
        %s4476 = scalar_lea.sflag [#allocation3], %s4475
        %s4477 = sand.u32 %s680, 1
        %s4478 = smul.addr %s4477, 4
        %s4479 = scalar_lea.vmem [#allocation2], %s4478
        %p4480 = scmp.lt.s32.totalorder %s74, 1
        %s4481 = scalar_select %p4480, %s74, 1
        %s4482 = scalar_lea.vmem %s59, %s4481
        // Predicated region
        $region133: #{tpu_custom_call.1} parent=131 // pred_check
          %p4483 = pneg %p690
        $region134: #{tpu_custom_call.1} parent=131 // pred_check_branch
          %4485 = sbr.rel (%p4483) target = $region136
        $region135: #{tpu_custom_call.1} parent=131 // pred_region
          %4487 = vsyncadd %s4476, 0
          %s4488 = smul.addr %s74, 4
          %s4489 = scalar_lea.hbm %s57, %s4488
          %s4491 = sshll.u32 %s4479, 4
          %s4492 = int_to_ptr.vmem [resolvable:$true] %s4491
          %s4493 = sshll.u32 %s4489, 4
          %s4494 = int_to_ptr.hbm [resolvable:$true] %s4493
          %4496 = dma.vmem_to_hbm [thread:$0]  %s4492, 64, %s4494, %s4476
        $region136: #{tpu_custom_call.1} parent=131 // pred_fallthru
          _
        // Predicated region
        $region137: #{tpu_custom_call.1} parent=131 // pred_check
          %p4497 = pneg %p716
        $region138: #{tpu_custom_call.1} parent=131 // pred_check_branch
          %4499 = sbr.rel (%p4497) target = $region140
        $region139: #{tpu_custom_call.1} parent=131 // pred_region
          _
        $region140: #{tpu_custom_call.1} parent=131 // pred_fallthru
          _
      $region132: #{tpu_custom_call.1} parent=5 // pred_fallthru
        _
      %p4500 = scmp.le.s32.totalorder 2, %s69
      // Predicated region
      $region141: #{tpu_custom_call.1} parent=5 // pred_check
        %p4501 = pneg %p4500
      $region142: #{tpu_custom_call.1} parent=5 // pred_check_branch
        %4503 = sbr.rel (%p4501) target = $region144
      $region143: #{tpu_custom_call.1} parent=5 // pred_region
        %s4504 = ssub.s32 %s69, 2
        // Predicated region
        $region145: #{tpu_custom_call.1} parent=143 // pred_check
          %p4505 = pneg %p696
        $region146: #{tpu_custom_call.1} parent=143 // pred_check_branch
          %4507 = sbr.rel (%p4505) target = $region148
        $region147: #{tpu_custom_call.1} parent=143 // pred_region
          %s4508 = sand.u32 %s681, 1
          %s4509 = scalar_lea.sflag [#allocation3], %s4508
          %s4510 = sand.u32 %s681, 1
          %s4511 = smul.addr %s4510, 4
          %s4512 = scalar_lea.vmem [#allocation2], %s4511
          %4514 = dma.done %s4509, 64
        $region148: #{tpu_custom_call.1} parent=143 // pred_fallthru
          _
        // Predicated region
        $region149: #{tpu_custom_call.1} parent=143 // pred_check
          %p4515 = pneg %p722
        $region150: #{tpu_custom_call.1} parent=143 // pred_check_branch
          %4517 = sbr.rel (%p4515) target = $region152
        $region151: #{tpu_custom_call.1} parent=143 // pred_region
          %p4518 = scmp.lt.s32.totalorder %s75, 1
          %s4519 = scalar_select %p4518, %s75, 1
          %s4520 = scalar_lea.vmem %s59, %s4519
        $region152: #{tpu_custom_call.1} parent=143 // pred_fallthru
          _
      $region144: #{tpu_custom_call.1} parent=5 // pred_fallthru
        _
    $region6: #{tpu_custom_call.1} parent=1 // loop_footer
      %s73 = sadd.s32 1, %s69
    $region7: #{tpu_custom_call.1} parent=1 // loop_footer_branch
      %68 = sbr.rel target = $region3
    $region8: #{tpu_custom_call.1} parent=1 // loop_exit
      _
    %4521 = vsyncpa [#allocation3], 1
    %s4522 = scalar_lea.sflag [#allocation3], 1
    %4523 = vsyncpa %s4522, 1

</llo_original>
